<compile_context>
chip_gen: v6e
topology: v6e:2x2x1
jax: 0.10.0
libtpu: 0.0.40
codegen_flags: <defaults>
</compile_context>

<pallas_src>
import functools
import numpy as np
import jax
import jax.numpy as jnp
from jax import lax
from jax.experimental import pallas as pl
from jax.experimental.pallas import tpu as pltpu


def _sigmoid_via_tanh(x):
    # sigmoid(x) == 0.5 * (tanh(0.5 * x) + 1): one EUP op instead of exp + reciprocal.
    return (jnp.tanh(0.5 * x) + 1.0) * 0.5


# ---------------------------------------------------------------------------
# Fused Pallas kernel: all LSTM layers + LayerNorm in one invocation (time-major)
# ---------------------------------------------------------------------------
def _fused_lstm_ln_kernel(*refs, num_layers, seq_len, batch_blk, hidden, compute_dtype):
    T, Bc, H = seq_len, batch_blk, hidden

    x_ref, h0_ref, c0_ref = refs[0], refs[1], refs[2]
    w_refs = refs[3:3 + 3 * num_layers]                    # (wih, whh, bias) per layer
    gamma_ref = refs[3 + 3 * num_layers]
    beta_ref = refs[4 + 3 * num_layers]
    out_ref, hN_ref, cN_ref = refs[5 + 3 * num_layers:8 + 3 * num_layers]
    xproj_ref, act_ref = refs[8 + 3 * num_layers], refs[9 + 3 * num_layers]

    # Lane-wise 0.5 pre-scale for the i/f/o gate columns (g columns keep 1.0) so that the
    # per-step nonlinearity is a single tanh over all 4 gates.  Hoisted out of all loops.
    lane = lax.broadcasted_iota(jnp.int32, (1, 4 * H), 1)
    gate_scale = jnp.where((lane >= 2 * H) & (lane < 3 * H),
                           jnp.float32(1.0), jnp.float32(0.5))

    # Full unroll for short sequences; partial unroll (4) for long ones so the scheduler can
    # overlap step t's MXU push with step t-1's EUP/VPU gate math.
    unroll = True if T <= 32 else 4

    for l in range(num_layers):
        wih = w_refs[3 * l][...]          # (D_l, 4H)  compute dtype
        whh = w_refs[3 * l + 1][...]      # (H,   4H)  compute dtype
        bias = w_refs[3 * l + 2][...]     # (1,   4H)  f32 (added once, not per step)
        # Fold the 0.5 sigmoid pre-scale into the recurrent weights once per layer
        # (power-of-two scale: exact in f32 and bf16) -> nothing extra on the serial path.
        whh_s = (whh * gate_scale).astype(compute_dtype)

        # ---- hoisted input projection: one big MXU matmul over all timesteps ----
        if l == 0:
            d_in = x_ref.shape[-1]
            inp2d = x_ref[...].reshape(T * Bc, d_in).astype(compute_dtype)   # time-major
        else:
            inp2d = act_ref[...].reshape(T * Bc, H).astype(compute_dtype)    # time-major
        proj = jnp.dot(inp2d, wih, preferred_element_type=jnp.float32) + bias
        # Single dense store of the (pre-scaled) projection; no per-t strided copies.
        xproj_ref[...] = (proj * gate_scale).reshape(T, Bc, 4 * H).astype(xproj_ref.dtype)

        # ---- serial recurrence: only h @ W_hh + precomputed xproj on the critical path ----
        def step(t, carry):
            h, c = carry
            gates = xproj_ref[t].astype(jnp.float32) + jnp.dot(
                h.astype(compute_dtype), whh_s, preferred_element_type=jnp.float32)
            th = jnp.tanh(gates)                        # ONE EUP pass over all 4 gates
            # PyTorch gate order i, f, g, o (lane-aligned whenever H % 128 == 0)
            i = (th[:, 0 * H:1 * H] + 1.0) * 0.5        # == sigmoid(gate_i)
            f = (th[:, 1 * H:2 * H] + 1.0) * 0.5        # == sigmoid(gate_f)
            g = th[:, 2 * H:3 * H]                      # == tanh(gate_g)
            o = (th[:, 3 * H:4 * H] + 1.0) * 0.5        # == sigmoid(gate_o)
            c_new = f * c + i * g                       # f32 VPU math (v5e-friendly)
            h_new = o * jnp.tanh(c_new)
            act_ref[t] = h_new.astype(act_ref.dtype)    # layer output, time-major scratch
            return h_new, c_new

        h_l = h0_ref[l].astype(jnp.float32)
        c_l = c0_ref[l].astype(jnp.float32)
        hT, cT = lax.fori_loop(0, T, step, (h_l, c_l), unroll=unroll)
        hN_ref[l] = hT.astype(hN_ref.dtype)
        cN_ref[l] = cT.astype(cN_ref.dtype)

    # ---- fused LayerNorm over the hidden axis; one dense time-major store ----
    a = act_ref[...].astype(jnp.float32)                               # (T, Bc, H)
    mean = jnp.mean(a, axis=-1, keepdims=True)
    var = jnp.mean((a - mean) ** 2, axis=-1, keepdims=True)
    normed = (a - mean) * lax.rsqrt(var + 1e-5)
    out_ref[...] = (normed * gamma_ref[...] + beta_ref[...]).astype(out_ref.dtype)


# ---------------------------------------------------------------------------
# Wrapper
# ---------------------------------------------------------------------------
def lstm_network_forward(x, params, h0=None, *, compute_dtype=None, batch_block=None,
                         vmem_limit_cap_bytes=100 * 1024 * 1024):
    """Forward pass matching LSTMNetwork.forward (eval mode, dropout=0).

    x: (B, T, D_in) batch_first.  params: dict with per-layer 'wih' (D,4H), 'whh' (H,4H),
    'b' (1,4H) and 'ln_gamma'/'ln_beta' (1,H).  h0: optional (h_0, c_0), each (L, B, H).

    compute_dtype: dtype of MXU matmul inputs AND of the xproj/act VMEM scratch; defaults
    to bfloat16 (MXU-native, halves scratch/weight VMEM).  Accumulation and gate/c/h/LN math
    are always f32.  Pass jnp.float32 for exact-parity mode.

    batch_block: batch chunk per grid step (B, or a multiple of 8).  Keep batch_block=B on
    v5e/v6e (one TensorCore -> the grid is a serial loop, splitting only shrinks MXU row
    occupancy).  On v7x split to B//2 only when B//2 >= 128 so each core still fills the
    256-row MXU.  For best layout, H should be a multiple of 128 (lane-aligned gate slices).

    Returns (out (B,T,H), (h_n, c_n)) like torch.nn.LSTM(batch_first=True) + LayerNorm.
    """
    num_layers = len(params["wih"])
    B, T, D_in = x.shape
    H = params["whh"][0].shape[0]
    dt = x.dtype
    if compute_dtype is None:
        compute_dtype = jnp.bfloat16          # default: bf16 MXU inputs, f32 accumulation
    compute_dtype = jnp.dtype(compute_dtype)
    store_dtype = compute_dtype               # xproj/act scratch dtype (bf16 halves VMEM)
    if batch_block is None:
        batch_block = B
    assert B % batch_block == 0 and (batch_block == B or batch_block % 8 == 0)
    nb = B // batch_block

    if h0 is None:
        h_init = jnp.zeros((num_layers, B, H), dt)
        c_init = jnp.zeros((num_layers, B, H), dt)
    else:
        h_init, c_init = h0

    # Single wrapper-side transpose to time-major; everything inside the kernel is dense.
    x_tm = jnp.swapaxes(x, 0, 1)              # (T, B, D_in)

    weights, w_specs = [], []
    for l in range(num_layers):
        wih = params["wih"][l].astype(compute_dtype)
        whh = params["whh"][l].astype(compute_dtype)
        bias_l = params["b"][l].astype(jnp.float32)
        weights += [wih, whh, bias_l]
        d_l = wih.shape[0]
        w_specs += [pl.BlockSpec((d_l, 4 * H), lambda i: (0, 0)),
                    pl.BlockSpec((H, 4 * H), lambda i: (0, 0)),
                    pl.BlockSpec((1, 4 * H), lambda i: (0, 0))]

    gamma = params["ln_gamma"].astype(jnp.float32)
    beta = params["ln_beta"].astype(jnp.float32)

    # ---- VMEM budget: size the scoped limit from the actual buffers (+ headroom) ----
    def _nbytes(shape, dtype):
        return int(np.prod(shape)) * jnp.dtype(dtype).itemsize

    est = 0
    est += 2 * _nbytes((T, batch_block, D_in), dt)                 # x block (double buffered)
    est += 2 * 2 * _nbytes((num_layers, batch_block, H), dt)       # h0 + c0
    est += 2 * _nbytes((T, batch_block, H), dt)                    # out block
    est += 2 * 2 * _nbytes((num_layers, batch_block, H), dt)       # h_n + c_n
    for l in range(num_layers):
        d_l = D_in if l == 0 else H
        est += 2 * (_nbytes((d_l, 4 * H), compute_dtype)
                    + _nbytes((H, 4 * H), compute_dtype)
                    + _nbytes((1, 4 * H), jnp.float32))
    est += 2 * 2 * _nbytes((1, H), jnp.float32)                    # gamma + beta
    est += _nbytes((T, batch_block, 4 * H), store_dtype)           # xproj scratch
    est += _nbytes((T, batch_block, H), store_dtype)               # act scratch
    est += _nbytes((T * batch_block, 4 * H), jnp.float32)          # hoisted projection temp
    est += 4 * _nbytes((T, batch_block, H), jnp.float32)           # LayerNorm temporaries
    vmem_limit = int(min(vmem_limit_cap_bytes,
                         max(32 * 1024 * 1024, 2 * est + (2 << 20))))

    kernel = functools.partial(
        _fused_lstm_ln_kernel, num_layers=num_layers, seq_len=T,
        batch_blk=batch_block, hidden=H, compute_dtype=compute_dtype)

    grid_spec = pltpu.PrefetchScalarGridSpec(
        num_scalar_prefetch=0,
        grid=(nb,),
        in_specs=[pl.BlockSpec((T, batch_block, D_in), lambda i: (0, i, 0)),         # x (tm)
                  pl.BlockSpec((num_layers, batch_block, H), lambda i: (0, i, 0)),   # h0
                  pl.BlockSpec((num_layers, batch_block, H), lambda i: (0, i, 0))]   # c0
                 + w_specs
                 + [pl.BlockSpec((1, H), lambda i: (0, 0)),                          # gamma
                    pl.BlockSpec((1, H), lambda i: (0, 0))],                         # beta
        out_specs=[pl.BlockSpec((T, batch_block, H), lambda i: (0, i, 0)),           # out (tm)
                   pl.BlockSpec((num_layers, batch_block, H), lambda i: (0, i, 0)),  # h_n
                   pl.BlockSpec((num_layers, batch_block, H), lambda i: (0, i, 0))], # c_n
        scratch_shapes=[pltpu.VMEM((T, batch_block, 4 * H), store_dtype),  # xproj (time-major)
                        pltpu.VMEM((T, batch_block, H), store_dtype)],     # layer activations
    )

    out_tm, h_n, c_n = pl.pallas_call(
        kernel,
        out_shape=(jax.ShapeDtypeStruct((T, B, H), dt),
                   jax.ShapeDtypeStruct((num_layers, B, H), dt),
                   jax.ShapeDtypeStruct((num_layers, B, H), dt)),
        grid_spec=grid_spec,
        compiler_params=pltpu.CompilerParams(
            dimension_semantics=("parallel",),    # batch chunks are independent
            vmem_limit_bytes=vmem_limit),
    )(x_tm, h_init, c_init, *weights, gamma, beta)

    out = jnp.swapaxes(out_tm, 0, 1)              # single wrapper-side transpose back
    return out, (h_n, c_n)


# ---------------------------------------------------------------------------
# Pure-JAX reference (mirrors the kernel's cast points for apples-to-apples checks)
# ---------------------------------------------------------------------------
def lstm_network_ref(x, params, h0=None, compute_dtype=None):
    num_layers = len(params["wih"])
    B, T, _ = x.shape
    H = params["whh"][0].shape[0]
    cd = jnp.dtype(jnp.bfloat16) if compute_dtype is None else jnp.dtype(compute_dtype)
    sd = cd                                        # mirrors xproj/act scratch storage dtype
    if h0 is None:
        h_init = jnp.zeros((num_layers, B, H), x.dtype)
        c_init = jnp.zeros((num_layers, B, H), x.dtype)
    else:
        h_init, c_init = h0

    cur = x
    h_finals, c_finals = [], []
    for l in range(num_layers):
        wih = params["wih"][l].astype(cd)
        whh = params["whh"][l].astype(cd)
        bias_l = params["b"][l].astype(jnp.float32)
        d_in = cur.shape[-1]
        xproj = (jnp.dot(cur.reshape(B * T, d_in).astype(cd), wih,
                         preferred_element_type=jnp.float32) + bias_l)
        xproj = xproj.astype(sd).reshape(B, T, 4 * H)

        def step(carry, xp_t):
            h, c = carry
            gates = xp_t.astype(jnp.float32) + jnp.dot(
                h.astype(cd), whh, preferred_element_type=jnp.float32)
            i = _sigmoid_via_tanh(gates[:, 0 * H:1 * H])
            f = _sigmoid_via_tanh(gates[:, 1 * H:2 * H])
            g = jnp.tanh(gates[:, 2 * H:3 * H])
            o = _sigmoid_via_tanh(gates[:, 3 * H:4 * H])
            c = f * c + i * g
            h = o * jnp.tanh(c)
            return (h, c), h

        (hT, cT), ys = lax.scan(
            step, (h_init[l].astype(jnp.float32), c_init[l].astype(jnp.float32)),
            jnp.swapaxes(xproj, 0, 1))
        cur = jnp.swapaxes(ys, 0, 1).astype(sd)    # inter-layer activations in store dtype
        h_finals.append(hT)
        c_finals.append(cT)

    a = cur.astype(jnp.float32)
    mean = jnp.mean(a, axis=-1, keepdims=True)
    var = jnp.mean((a - mean) ** 2, axis=-1, keepdims=True)
    out = (a - mean) * lax.rsqrt(var + 1e-5) * params["ln_gamma"][0] + params["ln_beta"][0]
    return (out.astype(x.dtype),
            (jnp.stack(h_finals, 0).astype(x.dtype), jnp.stack(c_finals, 0).astype(x.dtype)))


# ---------------------------------------------------------------------------
# Parameter construction (deterministic, PyTorch-style uniform init)
# ---------------------------------------------------------------------------
def init_params(key, input_size, hidden_size, num_layers):
    k = 1.0 / np.sqrt(hidden_size)
    params = {"wih": [], "whh": [], "b": []}
    for l in range(num_layers):
        d_in = input_size if l == 0 else hidden_size
        key, k1, k2, k3, k4 = jax.random.split(key, 5)
        # PyTorch stores weight_ih as (4H, d_in); we store its transpose directly.
        wih = jax.random.uniform(k1, (d_in, 4 * hidden_size), jnp.float32, -k, k)
        whh = jax.random.uniform(k2, (hidden_size, 4 * hidden_size), jnp.float32, -k, k)
        b_ih = jax.random.uniform(k3, (4 * hidden_size,), jnp.float32, -k, k)
        b_hh = jax.random.uniform(k4, (4 * hidden_size,), jnp.float32, -k, k)
        params["wih"].append(wih)
        params["whh"].append(whh)
        params["b"].append((b_ih + b_hh).reshape(1, 4 * hidden_size))
    key, kg, kb = jax.random.split(key, 3)
    params["ln_gamma"] = 1.0 + 0.1 * jax.random.normal(kg, (1, hidden_size), jnp.float32)
    params["ln_beta"] = 0.1 * jax.random.normal(kb, (1, hidden_size), jnp.float32)
    return params


# ---------------------------------------------------------------------------
if __name__ == "__main__":
    B, T = 2, 8
    INPUT_SIZE, HIDDEN_SIZE, NUM_LAYERS = 32, 32, 2   # dropout=0.0, layer_norm=True

    root = jax.random.PRNGKey(0)
    kx, kh, kc, kp = jax.random.split(root, 4)

    x = jax.random.normal(kx, (B, T, INPUT_SIZE), jnp.float32)
    h0 = jax.random.normal(kh, (NUM_LAYERS, B, HIDDEN_SIZE), jnp.float32) * 0.1
    c0 = jax.random.normal(kc, (NUM_LAYERS, B, HIDDEN_SIZE), jnp.float32) * 0.1
    params = init_params(kp, INPUT_SIZE, HIDDEN_SIZE, NUM_LAYERS)

    # f32 parity mode (exact PyTorch semantics), strict check.
    out, (h_n, c_n) = lstm_network_forward(x, params, h0=(h0, c0),
                                           compute_dtype=jnp.float32)
    jax.block_until_ready((out, h_n, c_n))

    out_r, (h_r, c_r) = lstm_network_ref(x, params, h0=(h0, c0),
                                         compute_dtype=jnp.float32)
    assert out.shape == (B, T, HIDDEN_SIZE)
    assert h_n.shape == (NUM_LAYERS, B, HIDDEN_SIZE)
    assert c_n.shape == (NUM_LAYERS, B, HIDDEN_SIZE)
    np.testing.assert_allclose(np.asarray(out), np.asarray(out_r), rtol=1e-5, atol=1e-5)
    np.testing.assert_allclose(np.asarray(h_n), np.asarray(h_r), rtol=1e-5, atol=1e-5)
    np.testing.assert_allclose(np.asarray(c_n), np.asarray(c_r), rtol=1e-5, atol=1e-5)

    # Default path: bf16 MXU inputs + bf16 xproj/act scratch (v6e/v7x optimization),
    # checked against a cast-mirrored reference with relaxed tolerance.
    out_b, (h_b, c_b) = lstm_network_forward(x, params, h0=(h0, c0))
    jax.block_until_ready((out_b, h_b, c_b))
    out_rb, (h_rb, c_rb) = lstm_network_ref(x, params, h0=(h0, c0))
    np.testing.assert_allclose(np.asarray(out_b), np.asarray(out_rb), rtol=2e-2, atol=2e-2)
    np.testing.assert_allclose(np.asarray(h_b), np.asarray(h_rb), rtol=2e-2, atol=2e-2)
    np.testing.assert_allclose(np.asarray(c_b), np.asarray(c_rb), rtol=2e-2, atol=2e-2)

    print("KERNEL_OK")
</pallas_src>

<mosaic_0001>
module attributes {stable_mosaic.version = 11 : i64} {
  func.func @_fused_lstm_ln_kernel(%arg0: i32, %arg1: memref<8x2x32xf32, #tpu.memory_space<vmem>>, %arg2: memref<2x2x32xf32, #tpu.memory_space<vmem>>, %arg3: memref<2x2x32xf32, #tpu.memory_space<vmem>>, %arg4: memref<32x128xf32, #tpu.memory_space<vmem>>, %arg5: memref<32x128xf32, #tpu.memory_space<vmem>>, %arg6: memref<1x128xf32, #tpu.memory_space<vmem>>, %arg7: memref<32x128xf32, #tpu.memory_space<vmem>>, %arg8: memref<32x128xf32, #tpu.memory_space<vmem>>, %arg9: memref<1x128xf32, #tpu.memory_space<vmem>>, %arg10: memref<1x32xf32, #tpu.memory_space<vmem>>, %arg11: memref<1x32xf32, #tpu.memory_space<vmem>>, %arg12: memref<8x2x32xf32, #tpu.memory_space<vmem>>, %arg13: memref<2x2x32xf32, #tpu.memory_space<vmem>>, %arg14: memref<2x2x32xf32, #tpu.memory_space<vmem>>, %arg15: memref<8x2x128xf32, #tpu.memory_space<vmem>>, %arg16: memref<8x2x32xf32, #tpu.memory_space<vmem>>) attributes {dimension_semantics = [#tpu.dimension_semantics<parallel>], iteration_bounds = array<i64: 1>, scalar_prefetch = 0 : i64, scratch_operands = 2 : i64, tpu.core_type = #tpu.core_type<tc>, window_params = [{transform_indices = @transform_0, window_bounds = array<i64: 8, 2, 32>}, {transform_indices = @transform_1, window_bounds = array<i64: 2, 2, 32>}, {transform_indices = @transform_2, window_bounds = array<i64: 2, 2, 32>}, {pipeline_mode = #tpu.pipeline_mode<synchronous>, transform_indices = @transform_3, window_bounds = array<i64: 32, 128>}, {pipeline_mode = #tpu.pipeline_mode<synchronous>, transform_indices = @transform_4, window_bounds = array<i64: 32, 128>}, {pipeline_mode = #tpu.pipeline_mode<synchronous>, transform_indices = @transform_5, window_bounds = array<i64: 1, 128>}, {pipeline_mode = #tpu.pipeline_mode<synchronous>, transform_indices = @transform_6, window_bounds = array<i64: 32, 128>}, {pipeline_mode = #tpu.pipeline_mode<synchronous>, transform_indices = @transform_7, window_bounds = array<i64: 32, 128>}, {pipeline_mode = #tpu.pipeline_mode<synchronous>, transform_indices = @transform_8, window_bounds = array<i64: 1, 128>}, {pipeline_mode = #tpu.pipeline_mode<synchronous>, transform_indices = @transform_9, window_bounds = array<i64: 1, 32>}, {pipeline_mode = #tpu.pipeline_mode<synchronous>, transform_indices = @transform_10, window_bounds = array<i64: 1, 32>}, {transform_indices = @transform_11, window_bounds = array<i64: 8, 2, 32>}, {transform_indices = @transform_12, window_bounds = array<i64: 2, 2, 32>}, {transform_indices = @transform_13, window_bounds = array<i64: 2, 2, 32>}]} {
    %0 = tpu.iota {dimensions = array<i32: 1>} : vector<1x128xi32>
    %c64_i32 = arith.constant 64 : i32
    %1 = vector.broadcast %c64_i32 : i32 to vector<1x128xi32>
    %2 = arith.cmpi sge, %0, %1 : vector<1x128xi32>
    %c96_i32 = arith.constant 96 : i32
    %3 = vector.broadcast %c96_i32 : i32 to vector<1x128xi32>
    %4 = arith.cmpi slt, %0, %3 : vector<1x128xi32>
    %5 = arith.andi %2, %4 : vector<1x128xi1>
    %cst = arith.constant 1.000000e+00 : f32
    %cst_0 = arith.constant 5.000000e-01 : f32
    %6 = vector.broadcast %cst : f32 to vector<1x128xf32>
    %7 = vector.broadcast %cst_0 : f32 to vector<1x128xf32>
    %8 = arith.select %5, %6, %7 : vector<1x128xi1>, vector<1x128xf32>
    %c0 = arith.constant 0 : index
    %c0_1 = arith.constant 0 : index
    %9 = vector.load %arg4[%c0, %c0_1] : memref<32x128xf32, #tpu.memory_space<vmem>>, vector<32x128xf32>
    %c0_2 = arith.constant 0 : index
    %c0_3 = arith.constant 0 : index
    %10 = vector.load %arg5[%c0_2, %c0_3] : memref<32x128xf32, #tpu.memory_space<vmem>>, vector<32x128xf32>
    %c0_4 = arith.constant 0 : index
    %c0_5 = arith.constant 0 : index
    %11 = vector.load %arg6[%c0_4, %c0_5] : memref<1x128xf32, #tpu.memory_space<vmem>>, vector<1x128xf32>
    %12 = vector.broadcast %8 : vector<1x128xf32> to vector<32x128xf32>
    %13 = arith.mulf %10, %12 : vector<32x128xf32>
    %c0_6 = arith.constant 0 : index
    %c0_7 = arith.constant 0 : index
    %c0_8 = arith.constant 0 : index
    %14 = vector.load %arg1[%c0_6, %c0_7, %c0_8] : memref<8x2x32xf32, #tpu.memory_space<vmem>>, vector<8x2x32xf32>
    %15 = vector.shape_cast %14 : vector<8x2x32xf32> to vector<16x32xf32>
    %cst_9 = arith.constant dense<0.000000e+00> : vector<16x128xf32>
    %16 = tpu.matmul %15, %9, %cst_9 {dimension_numbers = #tpu.dot_dimension_numbers<[1], [0], [0], [1], [0, 0, 1, 1], [], []>} : vector<16x32xf32>, vector<32x128xf32>, vector<16x128xf32> -> vector<16x128xf32>
    %17 = vector.broadcast %11 : vector<1x128xf32> to vector<16x128xf32>
    %18 = arith.addf %16, %17 : vector<16x128xf32>
    %19 = vector.broadcast %8 : vector<1x128xf32> to vector<16x128xf32>
    %20 = arith.mulf %18, %19 : vector<16x128xf32>
    %21 = vector.shape_cast %20 : vector<16x128xf32> to vector<8x2x128xf32>
    %c0_10 = arith.constant 0 : index
    %c0_11 = arith.constant 0 : index
    %c0_12 = arith.constant 0 : index
    %22 = vector.load %arg15[%c0_10, %c0_11, %c0_12] : memref<8x2x128xf32, #tpu.memory_space<vmem>>, vector<8x2x128xf32>
    tpu.vector_store %arg15[%c0_10, %c0_11, %c0_12], %21 {strides = array<i32>} : memref<8x2x128xf32, #tpu.memory_space<vmem>>, vector<8x2x128xf32>,
    %c0_13 = arith.constant 0 : index
    %c0_14 = arith.constant 0 : index
    %c0_15 = arith.constant 0 : index
    %23 = vector.load %arg2[%c0_13, %c0_14, %c0_15] : memref<2x2x32xf32, #tpu.memory_space<vmem>>, vector<1x2x32xf32>
    %24 = vector.shape_cast %23 : vector<1x2x32xf32> to vector<2x32xf32>
    %c0_16 = arith.constant 0 : index
    %c0_17 = arith.constant 0 : index
    %c0_18 = arith.constant 0 : index
    %25 = vector.load %arg3[%c0_16, %c0_17, %c0_18] : memref<2x2x32xf32, #tpu.memory_space<vmem>>, vector<1x2x32xf32>
    %26 = vector.shape_cast %25 : vector<1x2x32xf32> to vector<2x32xf32>
    %c0_i32 = arith.constant 0 : i32
    %27 = arith.index_cast %c0_i32 : i32 to index
    %c0_19 = arith.constant 0 : index
    %c0_20 = arith.constant 0 : index
    %28 = vector.load %arg15[%27, %c0_19, %c0_20] : memref<8x2x128xf32, #tpu.memory_space<vmem>>, vector<1x2x128xf32>
    %29 = vector.shape_cast %28 : vector<1x2x128xf32> to vector<2x128xf32>
    %cst_21 = arith.constant dense<0.000000e+00> : vector<2x128xf32>
    %30 = tpu.matmul %24, %13, %cst_21 {dimension_numbers = #tpu.dot_dimension_numbers<[1], [0], [0], [1], [0, 0, 1, 1], [], []>} : vector<2x32xf32>, vector<32x128xf32>, vector<2x128xf32> -> vector<2x128xf32>
    %31 = arith.addf %29, %30 : vector<2x128xf32>
    %32 = math.tanh %31 : vector<2x128xf32>
    %33 = vector.extract_strided_slice %32 {offsets = [0, 0], sizes = [2, 32], strides = [1, 1]} : vector<2x128xf32> to vector<2x32xf32>
    %cst_22 = arith.constant 1.000000e+00 : f32
    %34 = vector.broadcast %cst_22 : f32 to vector<2x32xf32>
    %35 = arith.addf %33, %34 : vector<2x32xf32>
    %cst_23 = arith.constant 5.000000e-01 : f32
    %36 = vector.broadcast %cst_23 : f32 to vector<2x32xf32>
    %37 = arith.mulf %35, %36 : vector<2x32xf32>
    %38 = vector.extract_strided_slice %32 {offsets = [0, 32], sizes = [2, 32], strides = [1, 1]} : vector<2x128xf32> to vector<2x32xf32>
    %cst_24 = arith.constant 1.000000e+00 : f32
    %39 = vector.broadcast %cst_24 : f32 to vector<2x32xf32>
    %40 = arith.addf %38, %39 : vector<2x32xf32>
    %cst_25 = arith.constant 5.000000e-01 : f32
    %41 = vector.broadcast %cst_25 : f32 to vector<2x32xf32>
    %42 = arith.mulf %40, %41 : vector<2x32xf32>
    %43 = vector.extract_strided_slice %32 {offsets = [0, 64], sizes = [2, 32], strides = [1, 1]} : vector<2x128xf32> to vector<2x32xf32>
    %44 = vector.extract_strided_slice %32 {offsets = [0, 96], sizes = [2, 32], strides = [1, 1]} : vector<2x128xf32> to vector<2x32xf32>
    %cst_26 = arith.constant 1.000000e+00 : f32
    %45 = vector.broadcast %cst_26 : f32 to vector<2x32xf32>
    %46 = arith.addf %44, %45 : vector<2x32xf32>
    %cst_27 = arith.constant 5.000000e-01 : f32
    %47 = vector.broadcast %cst_27 : f32 to vector<2x32xf32>
    %48 = arith.mulf %46, %47 : vector<2x32xf32>
    %49 = arith.mulf %42, %26 : vector<2x32xf32>
    %50 = arith.mulf %37, %43 : vector<2x32xf32>
    %51 = arith.addf %49, %50 : vector<2x32xf32>
    %52 = math.tanh %51 : vector<2x32xf32>
    %53 = arith.mulf %48, %52 : vector<2x32xf32>
    %54 = arith.index_cast %c0_i32 : i32 to index
    %c0_28 = arith.constant 0 : index
    %c0_29 = arith.constant 0 : index
    %55 = vector.load %arg16[%54, %c0_28, %c0_29] : memref<8x2x32xf32, #tpu.memory_space<vmem>>, vector<1x2x32xf32>
    %56 = vector.shape_cast %55 : vector<1x2x32xf32> to vector<2x32xf32>
    %57 = vector.shape_cast %53 : vector<2x32xf32> to vector<1x2x32xf32>
    tpu.vector_store %arg16[%54, %c0_28, %c0_29], %57 {strides = array<i32>} : memref<8x2x32xf32, #tpu.memory_space<vmem>>, vector<1x2x32xf32>,
    %c1_i32 = arith.constant 1 : i32
    %58 = arith.index_cast %c1_i32 : i32 to index
    %c0_30 = arith.constant 0 : index
    %c0_31 = arith.constant 0 : index
    %59 = vector.load %arg15[%58, %c0_30, %c0_31] : memref<8x2x128xf32, #tpu.memory_space<vmem>>, vector<1x2x128xf32>
    %60 = vector.shape_cast %59 : vector<1x2x128xf32> to vector<2x128xf32>
    %cst_32 = arith.constant dense<0.000000e+00> : vector<2x128xf32>
    %61 = tpu.matmul %53, %13, %cst_32 {dimension_numbers = #tpu.dot_dimension_numbers<[1], [0], [0], [1], [0, 0, 1, 1], [], []>} : vector<2x32xf32>, vector<32x128xf32>, vector<2x128xf32> -> vector<2x128xf32>
    %62 = arith.addf %60, %61 : vector<2x128xf32>
    %63 = math.tanh %62 : vector<2x128xf32>
    %64 = vector.extract_strided_slice %63 {offsets = [0, 0], sizes = [2, 32], strides = [1, 1]} : vector<2x128xf32> to vector<2x32xf32>
    %cst_33 = arith.constant 1.000000e+00 : f32
    %65 = vector.broadcast %cst_33 : f32 to vector<2x32xf32>
    %66 = arith.addf %64, %65 : vector<2x32xf32>
    %cst_34 = arith.constant 5.000000e-01 : f32
    %67 = vector.broadcast %cst_34 : f32 to vector<2x32xf32>
    %68 = arith.mulf %66, %67 : vector<2x32xf32>
    %69 = vector.extract_strided_slice %63 {offsets = [0, 32], sizes = [2, 32], strides = [1, 1]} : vector<2x128xf32> to vector<2x32xf32>
    %cst_35 = arith.constant 1.000000e+00 : f32
    %70 = vector.broadcast %cst_35 : f32 to vector<2x32xf32>
    %71 = arith.addf %69, %70 : vector<2x32xf32>
    %cst_36 = arith.constant 5.000000e-01 : f32
    %72 = vector.broadcast %cst_36 : f32 to vector<2x32xf32>
    %73 = arith.mulf %71, %72 : vector<2x32xf32>
    %74 = vector.extract_strided_slice %63 {offsets = [0, 64], sizes = [2, 32], strides = [1, 1]} : vector<2x128xf32> to vector<2x32xf32>
    %75 = vector.extract_strided_slice %63 {offsets = [0, 96], sizes = [2, 32], strides = [1, 1]} : vector<2x128xf32> to vector<2x32xf32>
    %cst_37 = arith.constant 1.000000e+00 : f32
    %76 = vector.broadcast %cst_37 : f32 to vector<2x32xf32>
    %77 = arith.addf %75, %76 : vector<2x32xf32>
    %cst_38 = arith.constant 5.000000e-01 : f32
    %78 = vector.broadcast %cst_38 : f32 to vector<2x32xf32>
    %79 = arith.mulf %77, %78 : vector<2x32xf32>
    %80 = arith.mulf %73, %51 : vector<2x32xf32>
    %81 = arith.mulf %68, %74 : vector<2x32xf32>
    %82 = arith.addf %80, %81 : vector<2x32xf32>
    %83 = math.tanh %82 : vector<2x32xf32>
    %84 = arith.mulf %79, %83 : vector<2x32xf32>
    %85 = arith.index_cast %c1_i32 : i32 to index
    %c0_39 = arith.constant 0 : index
    %c0_40 = arith.constant 0 : index
    %86 = vector.load %arg16[%85, %c0_39, %c0_40] : memref<8x2x32xf32, #tpu.memory_space<vmem>>, vector<1x2x32xf32>
    %87 = vector.shape_cast %86 : vector<1x2x32xf32> to vector<2x32xf32>
    %88 = vector.shape_cast %84 : vector<2x32xf32> to vector<1x2x32xf32>
    tpu.vector_store %arg16[%85, %c0_39, %c0_40], %88 {strides = array<i32>} : memref<8x2x32xf32, #tpu.memory_space<vmem>>, vector<1x2x32xf32>,
    %c2_i32 = arith.constant 2 : i32
    %89 = arith.index_cast %c2_i32 : i32 to index
    %c0_41 = arith.constant 0 : index
    %c0_42 = arith.constant 0 : index
    %90 = vector.load %arg15[%89, %c0_41, %c0_42] : memref<8x2x128xf32, #tpu.memory_space<vmem>>, vector<1x2x128xf32>
    %91 = vector.shape_cast %90 : vector<1x2x128xf32> to vector<2x128xf32>
    %cst_43 = arith.constant dense<0.000000e+00> : vector<2x128xf32>
    %92 = tpu.matmul %84, %13, %cst_43 {dimension_numbers = #tpu.dot_dimension_numbers<[1], [0], [0], [1], [0, 0, 1, 1], [], []>} : vector<2x32xf32>, vector<32x128xf32>, vector<2x128xf32> -> vector<2x128xf32>
    %93 = arith.addf %91, %92 : vector<2x128xf32>
    %94 = math.tanh %93 : vector<2x128xf32>
    %95 = vector.extract_strided_slice %94 {offsets = [0, 0], sizes = [2, 32], strides = [1, 1]} : vector<2x128xf32> to vector<2x32xf32>
    %cst_44 = arith.constant 1.000000e+00 : f32
    %96 = vector.broadcast %cst_44 : f32 to vector<2x32xf32>
    %97 = arith.addf %95, %96 : vector<2x32xf32>
    %cst_45 = arith.constant 5.000000e-01 : f32
    %98 = vector.broadcast %cst_45 : f32 to vector<2x32xf32>
    %99 = arith.mulf %97, %98 : vector<2x32xf32>
    %100 = vector.extract_strided_slice %94 {offsets = [0, 32], sizes = [2, 32], strides = [1, 1]} : vector<2x128xf32> to vector<2x32xf32>
    %cst_46 = arith.constant 1.000000e+00 : f32
    %101 = vector.broadcast %cst_46 : f32 to vector<2x32xf32>
    %102 = arith.addf %100, %101 : vector<2x32xf32>
    %cst_47 = arith.constant 5.000000e-01 : f32
    %103 = vector.broadcast %cst_47 : f32 to vector<2x32xf32>
    %104 = arith.mulf %102, %103 : vector<2x32xf32>
    %105 = vector.extract_strided_slice %94 {offsets = [0, 64], sizes = [2, 32], strides = [1, 1]} : vector<2x128xf32> to vector<2x32xf32>
    %106 = vector.extract_strided_slice %94 {offsets = [0, 96], sizes = [2, 32], strides = [1, 1]} : vector<2x128xf32> to vector<2x32xf32>
    %cst_48 = arith.constant 1.000000e+00 : f32
    %107 = vector.broadcast %cst_48 : f32 to vector<2x32xf32>
    %108 = arith.addf %106, %107 : vector<2x32xf32>
    %cst_49 = arith.constant 5.000000e-01 : f32
    %109 = vector.broadcast %cst_49 : f32 to vector<2x32xf32>
    %110 = arith.mulf %108, %109 : vector<2x32xf32>
    %111 = arith.mulf %104, %82 : vector<2x32xf32>
    %112 = arith.mulf %99, %105 : vector<2x32xf32>
    %113 = arith.addf %111, %112 : vector<2x32xf32>
    %114 = math.tanh %113 : vector<2x32xf32>
    %115 = arith.mulf %110, %114 : vector<2x32xf32>
    %116 = arith.index_cast %c2_i32 : i32 to index
    %c0_50 = arith.constant 0 : index
    %c0_51 = arith.constant 0 : index
    %117 = vector.load %arg16[%116, %c0_50, %c0_51] : memref<8x2x32xf32, #tpu.memory_space<vmem>>, vector<1x2x32xf32>
    %118 = vector.shape_cast %117 : vector<1x2x32xf32> to vector<2x32xf32>
    %119 = vector.shape_cast %115 : vector<2x32xf32> to vector<1x2x32xf32>
    tpu.vector_store %arg16[%116, %c0_50, %c0_51], %119 {strides = array<i32>} : memref<8x2x32xf32, #tpu.memory_space<vmem>>, vector<1x2x32xf32>,
    %c3_i32 = arith.constant 3 : i32
    %120 = arith.index_cast %c3_i32 : i32 to index
    %c0_52 = arith.constant 0 : index
    %c0_53 = arith.constant 0 : index
    %121 = vector.load %arg15[%120, %c0_52, %c0_53] : memref<8x2x128xf32, #tpu.memory_space<vmem>>, vector<1x2x128xf32>
    %122 = vector.shape_cast %121 : vector<1x2x128xf32> to vector<2x128xf32>
    %cst_54 = arith.constant dense<0.000000e+00> : vector<2x128xf32>
    %123 = tpu.matmul %115, %13, %cst_54 {dimension_numbers = #tpu.dot_dimension_numbers<[1], [0], [0], [1], [0, 0, 1, 1], [], []>} : vector<2x32xf32>, vector<32x128xf32>, vector<2x128xf32> -> vector<2x128xf32>
    %124 = arith.addf %122, %123 : vector<2x128xf32>
    %125 = math.tanh %124 : vector<2x128xf32>
    %126 = vector.extract_strided_slice %125 {offsets = [0, 0], sizes = [2, 32], strides = [1, 1]} : vector<2x128xf32> to vector<2x32xf32>
    %cst_55 = arith.constant 1.000000e+00 : f32
    %127 = vector.broadcast %cst_55 : f32 to vector<2x32xf32>
    %128 = arith.addf %126, %127 : vector<2x32xf32>
    %cst_56 = arith.constant 5.000000e-01 : f32
    %129 = vector.broadcast %cst_56 : f32 to vector<2x32xf32>
    %130 = arith.mulf %128, %129 : vector<2x32xf32>
    %131 = vector.extract_strided_slice %125 {offsets = [0, 32], sizes = [2, 32], strides = [1, 1]} : vector<2x128xf32> to vector<2x32xf32>
    %cst_57 = arith.constant 1.000000e+00 : f32
    %132 = vector.broadcast %cst_57 : f32 to vector<2x32xf32>
    %133 = arith.addf %131, %132 : vector<2x32xf32>
    %cst_58 = arith.constant 5.000000e-01 : f32
    %134 = vector.broadcast %cst_58 : f32 to vector<2x32xf32>
    %135 = arith.mulf %133, %134 : vector<2x32xf32>
    %136 = vector.extract_strided_slice %125 {offsets = [0, 64], sizes = [2, 32], strides = [1, 1]} : vector<2x128xf32> to vector<2x32xf32>
    %137 = vector.extract_strided_slice %125 {offsets = [0, 96], sizes = [2, 32], strides = [1, 1]} : vector<2x128xf32> to vector<2x32xf32>
    %cst_59 = arith.constant 1.000000e+00 : f32
    %138 = vector.broadcast %cst_59 : f32 to vector<2x32xf32>
    %139 = arith.addf %137, %138 : vector<2x32xf32>
    %cst_60 = arith.constant 5.000000e-01 : f32
    %140 = vector.broadcast %cst_60 : f32 to vector<2x32xf32>
    %141 = arith.mulf %139, %140 : vector<2x32xf32>
    %142 = arith.mulf %135, %113 : vector<2x32xf32>
    %143 = arith.mulf %130, %136 : vector<2x32xf32>
    %144 = arith.addf %142, %143 : vector<2x32xf32>
    %145 = math.tanh %144 : vector<2x32xf32>
    %146 = arith.mulf %141, %145 : vector<2x32xf32>
    %147 = arith.index_cast %c3_i32 : i32 to index
    %c0_61 = arith.constant 0 : index
    %c0_62 = arith.constant 0 : index
    %148 = vector.load %arg16[%147, %c0_61, %c0_62] : memref<8x2x32xf32, #tpu.memory_space<vmem>>, vector<1x2x32xf32>
    %149 = vector.shape_cast %148 : vector<1x2x32xf32> to vector<2x32xf32>
    %150 = vector.shape_cast %146 : vector<2x32xf32> to vector<1x2x32xf32>
    tpu.vector_store %arg16[%147, %c0_61, %c0_62], %150 {strides = array<i32>} : memref<8x2x32xf32, #tpu.memory_space<vmem>>, vector<1x2x32xf32>,
    %c4_i32 = arith.constant 4 : i32
    %151 = arith.index_cast %c4_i32 : i32 to index
    %c0_63 = arith.constant 0 : index
    %c0_64 = arith.constant 0 : index
    %152 = vector.load %arg15[%151, %c0_63, %c0_64] : memref<8x2x128xf32, #tpu.memory_space<vmem>>, vector<1x2x128xf32>
    %153 = vector.shape_cast %152 : vector<1x2x128xf32> to vector<2x128xf32>
    %cst_65 = arith.constant dense<0.000000e+00> : vector<2x128xf32>
    %154 = tpu.matmul %146, %13, %cst_65 {dimension_numbers = #tpu.dot_dimension_numbers<[1], [0], [0], [1], [0, 0, 1, 1], [], []>} : vector<2x32xf32>, vector<32x128xf32>, vector<2x128xf32> -> vector<2x128xf32>
    %155 = arith.addf %153, %154 : vector<2x128xf32>
    %156 = math.tanh %155 : vector<2x128xf32>
    %157 = vector.extract_strided_slice %156 {offsets = [0, 0], sizes = [2, 32], strides = [1, 1]} : vector<2x128xf32> to vector<2x32xf32>
    %cst_66 = arith.constant 1.000000e+00 : f32
    %158 = vector.broadcast %cst_66 : f32 to vector<2x32xf32>
    %159 = arith.addf %157, %158 : vector<2x32xf32>
    %cst_67 = arith.constant 5.000000e-01 : f32
    %160 = vector.broadcast %cst_67 : f32 to vector<2x32xf32>
    %161 = arith.mulf %159, %160 : vector<2x32xf32>
    %162 = vector.extract_strided_slice %156 {offsets = [0, 32], sizes = [2, 32], strides = [1, 1]} : vector<2x128xf32> to vector<2x32xf32>
    %cst_68 = arith.constant 1.000000e+00 : f32
    %163 = vector.broadcast %cst_68 : f32 to vector<2x32xf32>
    %164 = arith.addf %162, %163 : vector<2x32xf32>
    %cst_69 = arith.constant 5.000000e-01 : f32
    %165 = vector.broadcast %cst_69 : f32 to vector<2x32xf32>
    %166 = arith.mulf %164, %165 : vector<2x32xf32>
    %167 = vector.extract_strided_slice %156 {offsets = [0, 64], sizes = [2, 32], strides = [1, 1]} : vector<2x128xf32> to vector<2x32xf32>
    %168 = vector.extract_strided_slice %156 {offsets = [0, 96], sizes = [2, 32], strides = [1, 1]} : vector<2x128xf32> to vector<2x32xf32>
    %cst_70 = arith.constant 1.000000e+00 : f32
    %169 = vector.broadcast %cst_70 : f32 to vector<2x32xf32>
    %170 = arith.addf %168, %169 : vector<2x32xf32>
    %cst_71 = arith.constant 5.000000e-01 : f32
    %171 = vector.broadcast %cst_71 : f32 to vector<2x32xf32>
    %172 = arith.mulf %170, %171 : vector<2x32xf32>
    %173 = arith.mulf %166, %144 : vector<2x32xf32>
    %174 = arith.mulf %161, %167 : vector<2x32xf32>
    %175 = arith.addf %173, %174 : vector<2x32xf32>
    %176 = math.tanh %175 : vector<2x32xf32>
    %177 = arith.mulf %172, %176 : vector<2x32xf32>
    %178 = arith.index_cast %c4_i32 : i32 to index
    %c0_72 = arith.constant 0 : index
    %c0_73 = arith.constant 0 : index
    %179 = vector.load %arg16[%178, %c0_72, %c0_73] : memref<8x2x32xf32, #tpu.memory_space<vmem>>, vector<1x2x32xf32>
    %180 = vector.shape_cast %179 : vector<1x2x32xf32> to vector<2x32xf32>
    %181 = vector.shape_cast %177 : vector<2x32xf32> to vector<1x2x32xf32>
    tpu.vector_store %arg16[%178, %c0_72, %c0_73], %181 {strides = array<i32>} : memref<8x2x32xf32, #tpu.memory_space<vmem>>, vector<1x2x32xf32>,
    %c5_i32 = arith.constant 5 : i32
    %182 = arith.index_cast %c5_i32 : i32 to index
    %c0_74 = arith.constant 0 : index
    %c0_75 = arith.constant 0 : index
    %183 = vector.load %arg15[%182, %c0_74, %c0_75] : memref<8x2x128xf32, #tpu.memory_space<vmem>>, vector<1x2x128xf32>
    %184 = vector.shape_cast %183 : vector<1x2x128xf32> to vector<2x128xf32>
    %cst_76 = arith.constant dense<0.000000e+00> : vector<2x128xf32>
    %185 = tpu.matmul %177, %13, %cst_76 {dimension_numbers = #tpu.dot_dimension_numbers<[1], [0], [0], [1], [0, 0, 1, 1], [], []>} : vector<2x32xf32>, vector<32x128xf32>, vector<2x128xf32> -> vector<2x128xf32>
    %186 = arith.addf %184, %185 : vector<2x128xf32>
    %187 = math.tanh %186 : vector<2x128xf32>
    %188 = vector.extract_strided_slice %187 {offsets = [0, 0], sizes = [2, 32], strides = [1, 1]} : vector<2x128xf32> to vector<2x32xf32>
    %cst_77 = arith.constant 1.000000e+00 : f32
    %189 = vector.broadcast %cst_77 : f32 to vector<2x32xf32>
    %190 = arith.addf %188, %189 : vector<2x32xf32>
    %cst_78 = arith.constant 5.000000e-01 : f32
    %191 = vector.broadcast %cst_78 : f32 to vector<2x32xf32>
    %192 = arith.mulf %190, %191 : vector<2x32xf32>
    %193 = vector.extract_strided_slice %187 {offsets = [0, 32], sizes = [2, 32], strides = [1, 1]} : vector<2x128xf32> to vector<2x32xf32>
    %cst_79 = arith.constant 1.000000e+00 : f32
    %194 = vector.broadcast %cst_79 : f32 to vector<2x32xf32>
    %195 = arith.addf %193, %194 : vector<2x32xf32>
    %cst_80 = arith.constant 5.000000e-01 : f32
    %196 = vector.broadcast %cst_80 : f32 to vector<2x32xf32>
    %197 = arith.mulf %195, %196 : vector<2x32xf32>
    %198 = vector.extract_strided_slice %187 {offsets = [0, 64], sizes = [2, 32], strides = [1, 1]} : vector<2x128xf32> to vector<2x32xf32>
    %199 = vector.extract_strided_slice %187 {offsets = [0, 96], sizes = [2, 32], strides = [1, 1]} : vector<2x128xf32> to vector<2x32xf32>
    %cst_81 = arith.constant 1.000000e+00 : f32
    %200 = vector.broadcast %cst_81 : f32 to vector<2x32xf32>
    %201 = arith.addf %199, %200 : vector<2x32xf32>
    %cst_82 = arith.constant 5.000000e-01 : f32
    %202 = vector.broadcast %cst_82 : f32 to vector<2x32xf32>
    %203 = arith.mulf %201, %202 : vector<2x32xf32>
    %204 = arith.mulf %197, %175 : vector<2x32xf32>
    %205 = arith.mulf %192, %198 : vector<2x32xf32>
    %206 = arith.addf %204, %205 : vector<2x32xf32>
    %207 = math.tanh %206 : vector<2x32xf32>
    %208 = arith.mulf %203, %207 : vector<2x32xf32>
    %209 = arith.index_cast %c5_i32 : i32 to index
    %c0_83 = arith.constant 0 : index
    %c0_84 = arith.constant 0 : index
    %210 = vector.load %arg16[%209, %c0_83, %c0_84] : memref<8x2x32xf32, #tpu.memory_space<vmem>>, vector<1x2x32xf32>
    %211 = vector.shape_cast %210 : vector<1x2x32xf32> to vector<2x32xf32>
    %212 = vector.shape_cast %208 : vector<2x32xf32> to vector<1x2x32xf32>
    tpu.vector_store %arg16[%209, %c0_83, %c0_84], %212 {strides = array<i32>} : memref<8x2x32xf32, #tpu.memory_space<vmem>>, vector<1x2x32xf32>,
    %c6_i32 = arith.constant 6 : i32
    %213 = arith.index_cast %c6_i32 : i32 to index
    %c0_85 = arith.constant 0 : index
    %c0_86 = arith.constant 0 : index
    %214 = vector.load %arg15[%213, %c0_85, %c0_86] : memref<8x2x128xf32, #tpu.memory_space<vmem>>, vector<1x2x128xf32>
    %215 = vector.shape_cast %214 : vector<1x2x128xf32> to vector<2x128xf32>
    %cst_87 = arith.constant dense<0.000000e+00> : vector<2x128xf32>
    %216 = tpu.matmul %208, %13, %cst_87 {dimension_numbers = #tpu.dot_dimension_numbers<[1], [0], [0], [1], [0, 0, 1, 1], [], []>} : vector<2x32xf32>, vector<32x128xf32>, vector<2x128xf32> -> vector<2x128xf32>
    %217 = arith.addf %215, %216 : vector<2x128xf32>
    %218 = math.tanh %217 : vector<2x128xf32>
    %219 = vector.extract_strided_slice %218 {offsets = [0, 0], sizes = [2, 32], strides = [1, 1]} : vector<2x128xf32> to vector<2x32xf32>
    %cst_88 = arith.constant 1.000000e+00 : f32
    %220 = vector.broadcast %cst_88 : f32 to vector<2x32xf32>
    %221 = arith.addf %219, %220 : vector<2x32xf32>
    %cst_89 = arith.constant 5.000000e-01 : f32
    %222 = vector.broadcast %cst_89 : f32 to vector<2x32xf32>
    %223 = arith.mulf %221, %222 : vector<2x32xf32>
    %224 = vector.extract_strided_slice %218 {offsets = [0, 32], sizes = [2, 32], strides = [1, 1]} : vector<2x128xf32> to vector<2x32xf32>
    %cst_90 = arith.constant 1.000000e+00 : f32
    %225 = vector.broadcast %cst_90 : f32 to vector<2x32xf32>
    %226 = arith.addf %224, %225 : vector<2x32xf32>
    %cst_91 = arith.constant 5.000000e-01 : f32
    %227 = vector.broadcast %cst_91 : f32 to vector<2x32xf32>
    %228 = arith.mulf %226, %227 : vector<2x32xf32>
    %229 = vector.extract_strided_slice %218 {offsets = [0, 64], sizes = [2, 32], strides = [1, 1]} : vector<2x128xf32> to vector<2x32xf32>
    %230 = vector.extract_strided_slice %218 {offsets = [0, 96], sizes = [2, 32], strides = [1, 1]} : vector<2x128xf32> to vector<2x32xf32>
    %cst_92 = arith.constant 1.000000e+00 : f32
    %231 = vector.broadcast %cst_92 : f32 to vector<2x32xf32>
    %232 = arith.addf %230, %231 : vector<2x32xf32>
    %cst_93 = arith.constant 5.000000e-01 : f32
    %233 = vector.broadcast %cst_93 : f32 to vector<2x32xf32>
    %234 = arith.mulf %232, %233 : vector<2x32xf32>
    %235 = arith.mulf %228, %206 : vector<2x32xf32>
    %236 = arith.mulf %223, %229 : vector<2x32xf32>
    %237 = arith.addf %235, %236 : vector<2x32xf32>
    %238 = math.tanh %237 : vector<2x32xf32>
    %239 = arith.mulf %234, %238 : vector<2x32xf32>
    %240 = arith.index_cast %c6_i32 : i32 to index
    %c0_94 = arith.constant 0 : index
    %c0_95 = arith.constant 0 : index
    %241 = vector.load %arg16[%240, %c0_94, %c0_95] : memref<8x2x32xf32, #tpu.memory_space<vmem>>, vector<1x2x32xf32>
    %242 = vector.shape_cast %241 : vector<1x2x32xf32> to vector<2x32xf32>
    %243 = vector.shape_cast %239 : vector<2x32xf32> to vector<1x2x32xf32>
    tpu.vector_store %arg16[%240, %c0_94, %c0_95], %243 {strides = array<i32>} : memref<8x2x32xf32, #tpu.memory_space<vmem>>, vector<1x2x32xf32>,
    %c7_i32 = arith.constant 7 : i32
    %244 = arith.index_cast %c7_i32 : i32 to index
    %c0_96 = arith.constant 0 : index
    %c0_97 = arith.constant 0 : index
    %245 = vector.load %arg15[%244, %c0_96, %c0_97] : memref<8x2x128xf32, #tpu.memory_space<vmem>>, vector<1x2x128xf32>
    %246 = vector.shape_cast %245 : vector<1x2x128xf32> to vector<2x128xf32>
    %cst_98 = arith.constant dense<0.000000e+00> : vector<2x128xf32>
    %247 = tpu.matmul %239, %13, %cst_98 {dimension_numbers = #tpu.dot_dimension_numbers<[1], [0], [0], [1], [0, 0, 1, 1], [], []>} : vector<2x32xf32>, vector<32x128xf32>, vector<2x128xf32> -> vector<2x128xf32>
    %248 = arith.addf %246, %247 : vector<2x128xf32>
    %249 = math.tanh %248 : vector<2x128xf32>
    %250 = vector.extract_strided_slice %249 {offsets = [0, 0], sizes = [2, 32], strides = [1, 1]} : vector<2x128xf32> to vector<2x32xf32>
    %cst_99 = arith.constant 1.000000e+00 : f32
    %251 = vector.broadcast %cst_99 : f32 to vector<2x32xf32>
    %252 = arith.addf %250, %251 : vector<2x32xf32>
    %cst_100 = arith.constant 5.000000e-01 : f32
    %253 = vector.broadcast %cst_100 : f32 to vector<2x32xf32>
    %254 = arith.mulf %252, %253 : vector<2x32xf32>
    %255 = vector.extract_strided_slice %249 {offsets = [0, 32], sizes = [2, 32], strides = [1, 1]} : vector<2x128xf32> to vector<2x32xf32>
    %cst_101 = arith.constant 1.000000e+00 : f32
    %256 = vector.broadcast %cst_101 : f32 to vector<2x32xf32>
    %257 = arith.addf %255, %256 : vector<2x32xf32>
    %cst_102 = arith.constant 5.000000e-01 : f32
    %258 = vector.broadcast %cst_102 : f32 to vector<2x32xf32>
    %259 = arith.mulf %257, %258 : vector<2x32xf32>
    %260 = vector.extract_strided_slice %249 {offsets = [0, 64], sizes = [2, 32], strides = [1, 1]} : vector<2x128xf32> to vector<2x32xf32>
    %261 = vector.extract_strided_slice %249 {offsets = [0, 96], sizes = [2, 32], strides = [1, 1]} : vector<2x128xf32> to vector<2x32xf32>
    %cst_103 = arith.constant 1.000000e+00 : f32
    %262 = vector.broadcast %cst_103 : f32 to vector<2x32xf32>
    %263 = arith.addf %261, %262 : vector<2x32xf32>
    %cst_104 = arith.constant 5.000000e-01 : f32
    %264 = vector.broadcast %cst_104 : f32 to vector<2x32xf32>
    %265 = arith.mulf %263, %264 : vector<2x32xf32>
    %266 = arith.mulf %259, %237 : vector<2x32xf32>
    %267 = arith.mulf %254, %260 : vector<2x32xf32>
    %268 = arith.addf %266, %267 : vector<2x32xf32>
    %269 = math.tanh %268 : vector<2x32xf32>
    %270 = arith.mulf %265, %269 : vector<2x32xf32>
    %271 = arith.index_cast %c7_i32 : i32 to index
    %c0_105 = arith.constant 0 : index
    %c0_106 = arith.constant 0 : index
    %272 = vector.load %arg16[%271, %c0_105, %c0_106] : memref<8x2x32xf32, #tpu.memory_space<vmem>>, vector<1x2x32xf32>
    %273 = vector.shape_cast %272 : vector<1x2x32xf32> to vector<2x32xf32>
    %274 = vector.shape_cast %270 : vector<2x32xf32> to vector<1x2x32xf32>
    tpu.vector_store %arg16[%271, %c0_105, %c0_106], %274 {strides = array<i32>} : memref<8x2x32xf32, #tpu.memory_space<vmem>>, vector<1x2x32xf32>,
    %c8_i32 = arith.constant 8 : i32
    %c0_107 = arith.constant 0 : index
    %c0_108 = arith.constant 0 : index
    %c0_109 = arith.constant 0 : index
    %275 = vector.load %arg13[%c0_107, %c0_108, %c0_109] : memref<2x2x32xf32, #tpu.memory_space<vmem>>, vector<1x2x32xf32>
    %276 = vector.shape_cast %275 : vector<1x2x32xf32> to vector<2x32xf32>
    %277 = vector.shape_cast %270 : vector<2x32xf32> to vector<1x2x32xf32>
    tpu.vector_store %arg13[%c0_107, %c0_108, %c0_109], %277 {strides = array<i32>} : memref<2x2x32xf32, #tpu.memory_space<vmem>>, vector<1x2x32xf32>,
    %c0_110 = arith.constant 0 : index
    %c0_111 = arith.constant 0 : index
    %c0_112 = arith.constant 0 : index
    %278 = vector.load %arg14[%c0_110, %c0_111, %c0_112] : memref<2x2x32xf32, #tpu.memory_space<vmem>>, vector<1x2x32xf32>
    %279 = vector.shape_cast %278 : vector<1x2x32xf32> to vector<2x32xf32>
    %280 = vector.shape_cast %268 : vector<2x32xf32> to vector<1x2x32xf32>
    tpu.vector_store %arg14[%c0_110, %c0_111, %c0_112], %280 {strides = array<i32>} : memref<2x2x32xf32, #tpu.memory_space<vmem>>, vector<1x2x32xf32>,
    %c0_113 = arith.constant 0 : index
    %c0_114 = arith.constant 0 : index
    %281 = vector.load %arg7[%c0_113, %c0_114] : memref<32x128xf32, #tpu.memory_space<vmem>>, vector<32x128xf32>
    %c0_115 = arith.constant 0 : index
    %c0_116 = arith.constant 0 : index
    %282 = vector.load %arg8[%c0_115, %c0_116] : memref<32x128xf32, #tpu.memory_space<vmem>>, vector<32x128xf32>
    %c0_117 = arith.constant 0 : index
    %c0_118 = arith.constant 0 : index
    %283 = vector.load %arg9[%c0_117, %c0_118] : memref<1x128xf32, #tpu.memory_space<vmem>>, vector<1x128xf32>
    %284 = vector.broadcast %8 : vector<1x128xf32> to vector<32x128xf32>
    %285 = arith.mulf %282, %284 : vector<32x128xf32>
    %c0_119 = arith.constant 0 : index
    %c0_120 = arith.constant 0 : index
    %c0_121 = arith.constant 0 : index
    %286 = vector.load %arg16[%c0_119, %c0_120, %c0_121] : memref<8x2x32xf32, #tpu.memory_space<vmem>>, vector<8x2x32xf32>
    %287 = vector.shape_cast %286 : vector<8x2x32xf32> to vector<16x32xf32>
    %cst_122 = arith.constant dense<0.000000e+00> : vector<16x128xf32>
    %288 = tpu.matmul %287, %281, %cst_122 {dimension_numbers = #tpu.dot_dimension_numbers<[1], [0], [0], [1], [0, 0, 1, 1], [], []>} : vector<16x32xf32>, vector<32x128xf32>, vector<16x128xf32> -> vector<16x128xf32>
    %289 = vector.broadcast %283 : vector<1x128xf32> to vector<16x128xf32>
    %290 = arith.addf %288, %289 : vector<16x128xf32>
    %291 = vector.broadcast %8 : vector<1x128xf32> to vector<16x128xf32>
    %292 = arith.mulf %290, %291 : vector<16x128xf32>
    %293 = vector.shape_cast %292 : vector<16x128xf32> to vector<8x2x128xf32>
    %c0_123 = arith.constant 0 : index
    %c0_124 = arith.constant 0 : index
    %c0_125 = arith.constant 0 : index
    %294 = vector.load %arg15[%c0_123, %c0_124, %c0_125] : memref<8x2x128xf32, #tpu.memory_space<vmem>>, vector<8x2x128xf32>
    tpu.vector_store %arg15[%c0_123, %c0_124, %c0_125], %293 {strides = array<i32>} : memref<8x2x128xf32, #tpu.memory_space<vmem>>, vector<8x2x128xf32>,
    %c1 = arith.constant 1 : index
    %c0_126 = arith.constant 0 : index
    %c0_127 = arith.constant 0 : index
    %295 = vector.load %arg2[%c1, %c0_126, %c0_127] : memref<2x2x32xf32, #tpu.memory_space<vmem>>, vector<1x2x32xf32>
    %296 = vector.shape_cast %295 : vector<1x2x32xf32> to vector<2x32xf32>
    %c1_128 = arith.constant 1 : index
    %c0_129 = arith.constant 0 : index
    %c0_130 = arith.constant 0 : index
    %297 = vector.load %arg3[%c1_128, %c0_129, %c0_130] : memref<2x2x32xf32, #tpu.memory_space<vmem>>, vector<1x2x32xf32>
    %298 = vector.shape_cast %297 : vector<1x2x32xf32> to vector<2x32xf32>
    %c0_i32_131 = arith.constant 0 : i32
    %299 = arith.index_cast %c0_i32_131 : i32 to index
    %c0_132 = arith.constant 0 : index
    %c0_133 = arith.constant 0 : index
    %300 = vector.load %arg15[%299, %c0_132, %c0_133] : memref<8x2x128xf32, #tpu.memory_space<vmem>>, vector<1x2x128xf32>
    %301 = vector.shape_cast %300 : vector<1x2x128xf32> to vector<2x128xf32>
    %cst_134 = arith.constant dense<0.000000e+00> : vector<2x128xf32>
    %302 = tpu.matmul %296, %285, %cst_134 {dimension_numbers = #tpu.dot_dimension_numbers<[1], [0], [0], [1], [0, 0, 1, 1], [], []>} : vector<2x32xf32>, vector<32x128xf32>, vector<2x128xf32> -> vector<2x128xf32>
    %303 = arith.addf %301, %302 : vector<2x128xf32>
    %304 = math.tanh %303 : vector<2x128xf32>
    %305 = vector.extract_strided_slice %304 {offsets = [0, 0], sizes = [2, 32], strides = [1, 1]} : vector<2x128xf32> to vector<2x32xf32>
    %cst_135 = arith.constant 1.000000e+00 : f32
    %306 = vector.broadcast %cst_135 : f32 to vector<2x32xf32>
    %307 = arith.addf %305, %306 : vector<2x32xf32>
    %cst_136 = arith.constant 5.000000e-01 : f32
    %308 = vector.broadcast %cst_136 : f32 to vector<2x32xf32>
    %309 = arith.mulf %307, %308 : vector<2x32xf32>
    %310 = vector.extract_strided_slice %304 {offsets = [0, 32], sizes = [2, 32], strides = [1, 1]} : vector<2x128xf32> to vector<2x32xf32>
    %cst_137 = arith.constant 1.000000e+00 : f32
    %311 = vector.broadcast %cst_137 : f32 to vector<2x32xf32>
    %312 = arith.addf %310, %311 : vector<2x32xf32>
    %cst_138 = arith.constant 5.000000e-01 : f32
    %313 = vector.broadcast %cst_138 : f32 to vector<2x32xf32>
    %314 = arith.mulf %312, %313 : vector<2x32xf32>
    %315 = vector.extract_strided_slice %304 {offsets = [0, 64], sizes = [2, 32], strides = [1, 1]} : vector<2x128xf32> to vector<2x32xf32>
    %316 = vector.extract_strided_slice %304 {offsets = [0, 96], sizes = [2, 32], strides = [1, 1]} : vector<2x128xf32> to vector<2x32xf32>
    %cst_139 = arith.constant 1.000000e+00 : f32
    %317 = vector.broadcast %cst_139 : f32 to vector<2x32xf32>
    %318 = arith.addf %316, %317 : vector<2x32xf32>
    %cst_140 = arith.constant 5.000000e-01 : f32
    %319 = vector.broadcast %cst_140 : f32 to vector<2x32xf32>
    %320 = arith.mulf %318, %319 : vector<2x32xf32>
    %321 = arith.mulf %314, %298 : vector<2x32xf32>
    %322 = arith.mulf %309, %315 : vector<2x32xf32>
    %323 = arith.addf %321, %322 : vector<2x32xf32>
    %324 = math.tanh %323 : vector<2x32xf32>
    %325 = arith.mulf %320, %324 : vector<2x32xf32>
    %326 = arith.index_cast %c0_i32_131 : i32 to index
    %c0_141 = arith.constant 0 : index
    %c0_142 = arith.constant 0 : index
    %327 = vector.load %arg16[%326, %c0_141, %c0_142] : memref<8x2x32xf32, #tpu.memory_space<vmem>>, vector<1x2x32xf32>
    %328 = vector.shape_cast %327 : vector<1x2x32xf32> to vector<2x32xf32>
    %329 = vector.shape_cast %325 : vector<2x32xf32> to vector<1x2x32xf32>
    tpu.vector_store %arg16[%326, %c0_141, %c0_142], %329 {strides = array<i32>} : memref<8x2x32xf32, #tpu.memory_space<vmem>>, vector<1x2x32xf32>,
    %c1_i32_143 = arith.constant 1 : i32
    %330 = arith.index_cast %c1_i32_143 : i32 to index
    %c0_144 = arith.constant 0 : index
    %c0_145 = arith.constant 0 : index
    %331 = vector.load %arg15[%330, %c0_144, %c0_145] : memref<8x2x128xf32, #tpu.memory_space<vmem>>, vector<1x2x128xf32>
    %332 = vector.shape_cast %331 : vector<1x2x128xf32> to vector<2x128xf32>
    %cst_146 = arith.constant dense<0.000000e+00> : vector<2x128xf32>
    %333 = tpu.matmul %325, %285, %cst_146 {dimension_numbers = #tpu.dot_dimension_numbers<[1], [0], [0], [1], [0, 0, 1, 1], [], []>} : vector<2x32xf32>, vector<32x128xf32>, vector<2x128xf32> -> vector<2x128xf32>
    %334 = arith.addf %332, %333 : vector<2x128xf32>
    %335 = math.tanh %334 : vector<2x128xf32>
    %336 = vector.extract_strided_slice %335 {offsets = [0, 0], sizes = [2, 32], strides = [1, 1]} : vector<2x128xf32> to vector<2x32xf32>
    %cst_147 = arith.constant 1.000000e+00 : f32
    %337 = vector.broadcast %cst_147 : f32 to vector<2x32xf32>
    %338 = arith.addf %336, %337 : vector<2x32xf32>
    %cst_148 = arith.constant 5.000000e-01 : f32
    %339 = vector.broadcast %cst_148 : f32 to vector<2x32xf32>
    %340 = arith.mulf %338, %339 : vector<2x32xf32>
    %341 = vector.extract_strided_slice %335 {offsets = [0, 32], sizes = [2, 32], strides = [1, 1]} : vector<2x128xf32> to vector<2x32xf32>
    %cst_149 = arith.constant 1.000000e+00 : f32
    %342 = vector.broadcast %cst_149 : f32 to vector<2x32xf32>
    %343 = arith.addf %341, %342 : vector<2x32xf32>
    %cst_150 = arith.constant 5.000000e-01 : f32
    %344 = vector.broadcast %cst_150 : f32 to vector<2x32xf32>
    %345 = arith.mulf %343, %344 : vector<2x32xf32>
    %346 = vector.extract_strided_slice %335 {offsets = [0, 64], sizes = [2, 32], strides = [1, 1]} : vector<2x128xf32> to vector<2x32xf32>
    %347 = vector.extract_strided_slice %335 {offsets = [0, 96], sizes = [2, 32], strides = [1, 1]} : vector<2x128xf32> to vector<2x32xf32>
    %cst_151 = arith.constant 1.000000e+00 : f32
    %348 = vector.broadcast %cst_151 : f32 to vector<2x32xf32>
    %349 = arith.addf %347, %348 : vector<2x32xf32>
    %cst_152 = arith.constant 5.000000e-01 : f32
    %350 = vector.broadcast %cst_152 : f32 to vector<2x32xf32>
    %351 = arith.mulf %349, %350 : vector<2x32xf32>
    %352 = arith.mulf %345, %323 : vector<2x32xf32>
    %353 = arith.mulf %340, %346 : vector<2x32xf32>
    %354 = arith.addf %352, %353 : vector<2x32xf32>
    %355 = math.tanh %354 : vector<2x32xf32>
    %356 = arith.mulf %351, %355 : vector<2x32xf32>
    %357 = arith.index_cast %c1_i32_143 : i32 to index
    %c0_153 = arith.constant 0 : index
    %c0_154 = arith.constant 0 : index
    %358 = vector.load %arg16[%357, %c0_153, %c0_154] : memref<8x2x32xf32, #tpu.memory_space<vmem>>, vector<1x2x32xf32>
    %359 = vector.shape_cast %358 : vector<1x2x32xf32> to vector<2x32xf32>
    %360 = vector.shape_cast %356 : vector<2x32xf32> to vector<1x2x32xf32>
    tpu.vector_store %arg16[%357, %c0_153, %c0_154], %360 {strides = array<i32>} : memref<8x2x32xf32, #tpu.memory_space<vmem>>, vector<1x2x32xf32>,
    %c2_i32_155 = arith.constant 2 : i32
    %361 = arith.index_cast %c2_i32_155 : i32 to index
    %c0_156 = arith.constant 0 : index
    %c0_157 = arith.constant 0 : index
    %362 = vector.load %arg15[%361, %c0_156, %c0_157] : memref<8x2x128xf32, #tpu.memory_space<vmem>>, vector<1x2x128xf32>
    %363 = vector.shape_cast %362 : vector<1x2x128xf32> to vector<2x128xf32>
    %cst_158 = arith.constant dense<0.000000e+00> : vector<2x128xf32>
    %364 = tpu.matmul %356, %285, %cst_158 {dimension_numbers = #tpu.dot_dimension_numbers<[1], [0], [0], [1], [0, 0, 1, 1], [], []>} : vector<2x32xf32>, vector<32x128xf32>, vector<2x128xf32> -> vector<2x128xf32>
    %365 = arith.addf %363, %364 : vector<2x128xf32>
    %366 = math.tanh %365 : vector<2x128xf32>
    %367 = vector.extract_strided_slice %366 {offsets = [0, 0], sizes = [2, 32], strides = [1, 1]} : vector<2x128xf32> to vector<2x32xf32>
    %cst_159 = arith.constant 1.000000e+00 : f32
    %368 = vector.broadcast %cst_159 : f32 to vector<2x32xf32>
    %369 = arith.addf %367, %368 : vector<2x32xf32>
    %cst_160 = arith.constant 5.000000e-01 : f32
    %370 = vector.broadcast %cst_160 : f32 to vector<2x32xf32>
    %371 = arith.mulf %369, %370 : vector<2x32xf32>
    %372 = vector.extract_strided_slice %366 {offsets = [0, 32], sizes = [2, 32], strides = [1, 1]} : vector<2x128xf32> to vector<2x32xf32>
    %cst_161 = arith.constant 1.000000e+00 : f32
    %373 = vector.broadcast %cst_161 : f32 to vector<2x32xf32>
    %374 = arith.addf %372, %373 : vector<2x32xf32>
    %cst_162 = arith.constant 5.000000e-01 : f32
    %375 = vector.broadcast %cst_162 : f32 to vector<2x32xf32>
    %376 = arith.mulf %374, %375 : vector<2x32xf32>
    %377 = vector.extract_strided_slice %366 {offsets = [0, 64], sizes = [2, 32], strides = [1, 1]} : vector<2x128xf32> to vector<2x32xf32>
    %378 = vector.extract_strided_slice %366 {offsets = [0, 96], sizes = [2, 32], strides = [1, 1]} : vector<2x128xf32> to vector<2x32xf32>
    %cst_163 = arith.constant 1.000000e+00 : f32
    %379 = vector.broadcast %cst_163 : f32 to vector<2x32xf32>
    %380 = arith.addf %378, %379 : vector<2x32xf32>
    %cst_164 = arith.constant 5.000000e-01 : f32
    %381 = vector.broadcast %cst_164 : f32 to vector<2x32xf32>
    %382 = arith.mulf %380, %381 : vector<2x32xf32>
    %383 = arith.mulf %376, %354 : vector<2x32xf32>
    %384 = arith.mulf %371, %377 : vector<2x32xf32>
    %385 = arith.addf %383, %384 : vector<2x32xf32>
    %386 = math.tanh %385 : vector<2x32xf32>
    %387 = arith.mulf %382, %386 : vector<2x32xf32>
    %388 = arith.index_cast %c2_i32_155 : i32 to index
    %c0_165 = arith.constant 0 : index
    %c0_166 = arith.constant 0 : index
    %389 = vector.load %arg16[%388, %c0_165, %c0_166] : memref<8x2x32xf32, #tpu.memory_space<vmem>>, vector<1x2x32xf32>
    %390 = vector.shape_cast %389 : vector<1x2x32xf32> to vector<2x32xf32>
    %391 = vector.shape_cast %387 : vector<2x32xf32> to vector<1x2x32xf32>
    tpu.vector_store %arg16[%388, %c0_165, %c0_166], %391 {strides = array<i32>} : memref<8x2x32xf32, #tpu.memory_space<vmem>>, vector<1x2x32xf32>,
    %c3_i32_167 = arith.constant 3 : i32
    %392 = arith.index_cast %c3_i32_167 : i32 to index
    %c0_168 = arith.constant 0 : index
    %c0_169 = arith.constant 0 : index
    %393 = vector.load %arg15[%392, %c0_168, %c0_169] : memref<8x2x128xf32, #tpu.memory_space<vmem>>, vector<1x2x128xf32>
    %394 = vector.shape_cast %393 : vector<1x2x128xf32> to vector<2x128xf32>
    %cst_170 = arith.constant dense<0.000000e+00> : vector<2x128xf32>
    %395 = tpu.matmul %387, %285, %cst_170 {dimension_numbers = #tpu.dot_dimension_numbers<[1], [0], [0], [1], [0, 0, 1, 1], [], []>} : vector<2x32xf32>, vector<32x128xf32>, vector<2x128xf32> -> vector<2x128xf32>
    %396 = arith.addf %394, %395 : vector<2x128xf32>
    %397 = math.tanh %396 : vector<2x128xf32>
    %398 = vector.extract_strided_slice %397 {offsets = [0, 0], sizes = [2, 32], strides = [1, 1]} : vector<2x128xf32> to vector<2x32xf32>
    %cst_171 = arith.constant 1.000000e+00 : f32
    %399 = vector.broadcast %cst_171 : f32 to vector<2x32xf32>
    %400 = arith.addf %398, %399 : vector<2x32xf32>
    %cst_172 = arith.constant 5.000000e-01 : f32
    %401 = vector.broadcast %cst_172 : f32 to vector<2x32xf32>
    %402 = arith.mulf %400, %401 : vector<2x32xf32>
    %403 = vector.extract_strided_slice %397 {offsets = [0, 32], sizes = [2, 32], strides = [1, 1]} : vector<2x128xf32> to vector<2x32xf32>
    %cst_173 = arith.constant 1.000000e+00 : f32
    %404 = vector.broadcast %cst_173 : f32 to vector<2x32xf32>
    %405 = arith.addf %403, %404 : vector<2x32xf32>
    %cst_174 = arith.constant 5.000000e-01 : f32
    %406 = vector.broadcast %cst_174 : f32 to vector<2x32xf32>
    %407 = arith.mulf %405, %406 : vector<2x32xf32>
    %408 = vector.extract_strided_slice %397 {offsets = [0, 64], sizes = [2, 32], strides = [1, 1]} : vector<2x128xf32> to vector<2x32xf32>
    %409 = vector.extract_strided_slice %397 {offsets = [0, 96], sizes = [2, 32], strides = [1, 1]} : vector<2x128xf32> to vector<2x32xf32>
    %cst_175 = arith.constant 1.000000e+00 : f32
    %410 = vector.broadcast %cst_175 : f32 to vector<2x32xf32>
    %411 = arith.addf %409, %410 : vector<2x32xf32>
    %cst_176 = arith.constant 5.000000e-01 : f32
    %412 = vector.broadcast %cst_176 : f32 to vector<2x32xf32>
    %413 = arith.mulf %411, %412 : vector<2x32xf32>
    %414 = arith.mulf %407, %385 : vector<2x32xf32>
    %415 = arith.mulf %402, %408 : vector<2x32xf32>
    %416 = arith.addf %414, %415 : vector<2x32xf32>
    %417 = math.tanh %416 : vector<2x32xf32>
    %418 = arith.mulf %413, %417 : vector<2x32xf32>
    %419 = arith.index_cast %c3_i32_167 : i32 to index
    %c0_177 = arith.constant 0 : index
    %c0_178 = arith.constant 0 : index
    %420 = vector.load %arg16[%419, %c0_177, %c0_178] : memref<8x2x32xf32, #tpu.memory_space<vmem>>, vector<1x2x32xf32>
    %421 = vector.shape_cast %420 : vector<1x2x32xf32> to vector<2x32xf32>
    %422 = vector.shape_cast %418 : vector<2x32xf32> to vector<1x2x32xf32>
    tpu.vector_store %arg16[%419, %c0_177, %c0_178], %422 {strides = array<i32>} : memref<8x2x32xf32, #tpu.memory_space<vmem>>, vector<1x2x32xf32>,
    %c4_i32_179 = arith.constant 4 : i32
    %423 = arith.index_cast %c4_i32_179 : i32 to index
    %c0_180 = arith.constant 0 : index
    %c0_181 = arith.constant 0 : index
    %424 = vector.load %arg15[%423, %c0_180, %c0_181] : memref<8x2x128xf32, #tpu.memory_space<vmem>>, vector<1x2x128xf32>
    %425 = vector.shape_cast %424 : vector<1x2x128xf32> to vector<2x128xf32>
    %cst_182 = arith.constant dense<0.000000e+00> : vector<2x128xf32>
    %426 = tpu.matmul %418, %285, %cst_182 {dimension_numbers = #tpu.dot_dimension_numbers<[1], [0], [0], [1], [0, 0, 1, 1], [], []>} : vector<2x32xf32>, vector<32x128xf32>, vector<2x128xf32> -> vector<2x128xf32>
    %427 = arith.addf %425, %426 : vector<2x128xf32>
    %428 = math.tanh %427 : vector<2x128xf32>
    %429 = vector.extract_strided_slice %428 {offsets = [0, 0], sizes = [2, 32], strides = [1, 1]} : vector<2x128xf32> to vector<2x32xf32>
    %cst_183 = arith.constant 1.000000e+00 : f32
    %430 = vector.broadcast %cst_183 : f32 to vector<2x32xf32>
    %431 = arith.addf %429, %430 : vector<2x32xf32>
    %cst_184 = arith.constant 5.000000e-01 : f32
    %432 = vector.broadcast %cst_184 : f32 to vector<2x32xf32>
    %433 = arith.mulf %431, %432 : vector<2x32xf32>
    %434 = vector.extract_strided_slice %428 {offsets = [0, 32], sizes = [2, 32], strides = [1, 1]} : vector<2x128xf32> to vector<2x32xf32>
    %cst_185 = arith.constant 1.000000e+00 : f32
    %435 = vector.broadcast %cst_185 : f32 to vector<2x32xf32>
    %436 = arith.addf %434, %435 : vector<2x32xf32>
    %cst_186 = arith.constant 5.000000e-01 : f32
    %437 = vector.broadcast %cst_186 : f32 to vector<2x32xf32>
    %438 = arith.mulf %436, %437 : vector<2x32xf32>
    %439 = vector.extract_strided_slice %428 {offsets = [0, 64], sizes = [2, 32], strides = [1, 1]} : vector<2x128xf32> to vector<2x32xf32>
    %440 = vector.extract_strided_slice %428 {offsets = [0, 96], sizes = [2, 32], strides = [1, 1]} : vector<2x128xf32> to vector<2x32xf32>
    %cst_187 = arith.constant 1.000000e+00 : f32
    %441 = vector.broadcast %cst_187 : f32 to vector<2x32xf32>
    %442 = arith.addf %440, %441 : vector<2x32xf32>
    %cst_188 = arith.constant 5.000000e-01 : f32
    %443 = vector.broadcast %cst_188 : f32 to vector<2x32xf32>
    %444 = arith.mulf %442, %443 : vector<2x32xf32>
    %445 = arith.mulf %438, %416 : vector<2x32xf32>
    %446 = arith.mulf %433, %439 : vector<2x32xf32>
    %447 = arith.addf %445, %446 : vector<2x32xf32>
    %448 = math.tanh %447 : vector<2x32xf32>
    %449 = arith.mulf %444, %448 : vector<2x32xf32>
    %450 = arith.index_cast %c4_i32_179 : i32 to index
    %c0_189 = arith.constant 0 : index
    %c0_190 = arith.constant 0 : index
    %451 = vector.load %arg16[%450, %c0_189, %c0_190] : memref<8x2x32xf32, #tpu.memory_space<vmem>>, vector<1x2x32xf32>
    %452 = vector.shape_cast %451 : vector<1x2x32xf32> to vector<2x32xf32>
    %453 = vector.shape_cast %449 : vector<2x32xf32> to vector<1x2x32xf32>
    tpu.vector_store %arg16[%450, %c0_189, %c0_190], %453 {strides = array<i32>} : memref<8x2x32xf32, #tpu.memory_space<vmem>>, vector<1x2x32xf32>,
    %c5_i32_191 = arith.constant 5 : i32
    %454 = arith.index_cast %c5_i32_191 : i32 to index
    %c0_192 = arith.constant 0 : index
    %c0_193 = arith.constant 0 : index
    %455 = vector.load %arg15[%454, %c0_192, %c0_193] : memref<8x2x128xf32, #tpu.memory_space<vmem>>, vector<1x2x128xf32>
    %456 = vector.shape_cast %455 : vector<1x2x128xf32> to vector<2x128xf32>
    %cst_194 = arith.constant dense<0.000000e+00> : vector<2x128xf32>
    %457 = tpu.matmul %449, %285, %cst_194 {dimension_numbers = #tpu.dot_dimension_numbers<[1], [0], [0], [1], [0, 0, 1, 1], [], []>} : vector<2x32xf32>, vector<32x128xf32>, vector<2x128xf32> -> vector<2x128xf32>
    %458 = arith.addf %456, %457 : vector<2x128xf32>
    %459 = math.tanh %458 : vector<2x128xf32>
    %460 = vector.extract_strided_slice %459 {offsets = [0, 0], sizes = [2, 32], strides = [1, 1]} : vector<2x128xf32> to vector<2x32xf32>
    %cst_195 = arith.constant 1.000000e+00 : f32
    %461 = vector.broadcast %cst_195 : f32 to vector<2x32xf32>
    %462 = arith.addf %460, %461 : vector<2x32xf32>
    %cst_196 = arith.constant 5.000000e-01 : f32
    %463 = vector.broadcast %cst_196 : f32 to vector<2x32xf32>
    %464 = arith.mulf %462, %463 : vector<2x32xf32>
    %465 = vector.extract_strided_slice %459 {offsets = [0, 32], sizes = [2, 32], strides = [1, 1]} : vector<2x128xf32> to vector<2x32xf32>
    %cst_197 = arith.constant 1.000000e+00 : f32
    %466 = vector.broadcast %cst_197 : f32 to vector<2x32xf32>
    %467 = arith.addf %465, %466 : vector<2x32xf32>
    %cst_198 = arith.constant 5.000000e-01 : f32
    %468 = vector.broadcast %cst_198 : f32 to vector<2x32xf32>
    %469 = arith.mulf %467, %468 : vector<2x32xf32>
    %470 = vector.extract_strided_slice %459 {offsets = [0, 64], sizes = [2, 32], strides = [1, 1]} : vector<2x128xf32> to vector<2x32xf32>
    %471 = vector.extract_strided_slice %459 {offsets = [0, 96], sizes = [2, 32], strides = [1, 1]} : vector<2x128xf32> to vector<2x32xf32>
    %cst_199 = arith.constant 1.000000e+00 : f32
    %472 = vector.broadcast %cst_199 : f32 to vector<2x32xf32>
    %473 = arith.addf %471, %472 : vector<2x32xf32>
    %cst_200 = arith.constant 5.000000e-01 : f32
    %474 = vector.broadcast %cst_200 : f32 to vector<2x32xf32>
    %475 = arith.mulf %473, %474 : vector<2x32xf32>
    %476 = arith.mulf %469, %447 : vector<2x32xf32>
    %477 = arith.mulf %464, %470 : vector<2x32xf32>
    %478 = arith.addf %476, %477 : vector<2x32xf32>
    %479 = math.tanh %478 : vector<2x32xf32>
    %480 = arith.mulf %475, %479 : vector<2x32xf32>
    %481 = arith.index_cast %c5_i32_191 : i32 to index
    %c0_201 = arith.constant 0 : index
    %c0_202 = arith.constant 0 : index
    %482 = vector.load %arg16[%481, %c0_201, %c0_202] : memref<8x2x32xf32, #tpu.memory_space<vmem>>, vector<1x2x32xf32>
    %483 = vector.shape_cast %482 : vector<1x2x32xf32> to vector<2x32xf32>
    %484 = vector.shape_cast %480 : vector<2x32xf32> to vector<1x2x32xf32>
    tpu.vector_store %arg16[%481, %c0_201, %c0_202], %484 {strides = array<i32>} : memref<8x2x32xf32, #tpu.memory_space<vmem>>, vector<1x2x32xf32>,
    %c6_i32_203 = arith.constant 6 : i32
    %485 = arith.index_cast %c6_i32_203 : i32 to index
    %c0_204 = arith.constant 0 : index
    %c0_205 = arith.constant 0 : index
    %486 = vector.load %arg15[%485, %c0_204, %c0_205] : memref<8x2x128xf32, #tpu.memory_space<vmem>>, vector<1x2x128xf32>
    %487 = vector.shape_cast %486 : vector<1x2x128xf32> to vector<2x128xf32>
    %cst_206 = arith.constant dense<0.000000e+00> : vector<2x128xf32>
    %488 = tpu.matmul %480, %285, %cst_206 {dimension_numbers = #tpu.dot_dimension_numbers<[1], [0], [0], [1], [0, 0, 1, 1], [], []>} : vector<2x32xf32>, vector<32x128xf32>, vector<2x128xf32> -> vector<2x128xf32>
    %489 = arith.addf %487, %488 : vector<2x128xf32>
    %490 = math.tanh %489 : vector<2x128xf32>
    %491 = vector.extract_strided_slice %490 {offsets = [0, 0], sizes = [2, 32], strides = [1, 1]} : vector<2x128xf32> to vector<2x32xf32>
    %cst_207 = arith.constant 1.000000e+00 : f32
    %492 = vector.broadcast %cst_207 : f32 to vector<2x32xf32>
    %493 = arith.addf %491, %492 : vector<2x32xf32>
    %cst_208 = arith.constant 5.000000e-01 : f32
    %494 = vector.broadcast %cst_208 : f32 to vector<2x32xf32>
    %495 = arith.mulf %493, %494 : vector<2x32xf32>
    %496 = vector.extract_strided_slice %490 {offsets = [0, 32], sizes = [2, 32], strides = [1, 1]} : vector<2x128xf32> to vector<2x32xf32>
    %cst_209 = arith.constant 1.000000e+00 : f32
    %497 = vector.broadcast %cst_209 : f32 to vector<2x32xf32>
    %498 = arith.addf %496, %497 : vector<2x32xf32>
    %cst_210 = arith.constant 5.000000e-01 : f32
    %499 = vector.broadcast %cst_210 : f32 to vector<2x32xf32>
    %500 = arith.mulf %498, %499 : vector<2x32xf32>
    %501 = vector.extract_strided_slice %490 {offsets = [0, 64], sizes = [2, 32], strides = [1, 1]} : vector<2x128xf32> to vector<2x32xf32>
    %502 = vector.extract_strided_slice %490 {offsets = [0, 96], sizes = [2, 32], strides = [1, 1]} : vector<2x128xf32> to vector<2x32xf32>
    %cst_211 = arith.constant 1.000000e+00 : f32
    %503 = vector.broadcast %cst_211 : f32 to vector<2x32xf32>
    %504 = arith.addf %502, %503 : vector<2x32xf32>
    %cst_212 = arith.constant 5.000000e-01 : f32
    %505 = vector.broadcast %cst_212 : f32 to vector<2x32xf32>
    %506 = arith.mulf %504, %505 : vector<2x32xf32>
    %507 = arith.mulf %500, %478 : vector<2x32xf32>
    %508 = arith.mulf %495, %501 : vector<2x32xf32>
    %509 = arith.addf %507, %508 : vector<2x32xf32>
    %510 = math.tanh %509 : vector<2x32xf32>
    %511 = arith.mulf %506, %510 : vector<2x32xf32>
    %512 = arith.index_cast %c6_i32_203 : i32 to index
    %c0_213 = arith.constant 0 : index
    %c0_214 = arith.constant 0 : index
    %513 = vector.load %arg16[%512, %c0_213, %c0_214] : memref<8x2x32xf32, #tpu.memory_space<vmem>>, vector<1x2x32xf32>
    %514 = vector.shape_cast %513 : vector<1x2x32xf32> to vector<2x32xf32>
    %515 = vector.shape_cast %511 : vector<2x32xf32> to vector<1x2x32xf32>
    tpu.vector_store %arg16[%512, %c0_213, %c0_214], %515 {strides = array<i32>} : memref<8x2x32xf32, #tpu.memory_space<vmem>>, vector<1x2x32xf32>,
    %c7_i32_215 = arith.constant 7 : i32
    %516 = arith.index_cast %c7_i32_215 : i32 to index
    %c0_216 = arith.constant 0 : index
    %c0_217 = arith.constant 0 : index
    %517 = vector.load %arg15[%516, %c0_216, %c0_217] : memref<8x2x128xf32, #tpu.memory_space<vmem>>, vector<1x2x128xf32>
    %518 = vector.shape_cast %517 : vector<1x2x128xf32> to vector<2x128xf32>
    %cst_218 = arith.constant dense<0.000000e+00> : vector<2x128xf32>
    %519 = tpu.matmul %511, %285, %cst_218 {dimension_numbers = #tpu.dot_dimension_numbers<[1], [0], [0], [1], [0, 0, 1, 1], [], []>} : vector<2x32xf32>, vector<32x128xf32>, vector<2x128xf32> -> vector<2x128xf32>
    %520 = arith.addf %518, %519 : vector<2x128xf32>
    %521 = math.tanh %520 : vector<2x128xf32>
    %522 = vector.extract_strided_slice %521 {offsets = [0, 0], sizes = [2, 32], strides = [1, 1]} : vector<2x128xf32> to vector<2x32xf32>
    %cst_219 = arith.constant 1.000000e+00 : f32
    %523 = vector.broadcast %cst_219 : f32 to vector<2x32xf32>
    %524 = arith.addf %522, %523 : vector<2x32xf32>
    %cst_220 = arith.constant 5.000000e-01 : f32
    %525 = vector.broadcast %cst_220 : f32 to vector<2x32xf32>
    %526 = arith.mulf %524, %525 : vector<2x32xf32>
    %527 = vector.extract_strided_slice %521 {offsets = [0, 32], sizes = [2, 32], strides = [1, 1]} : vector<2x128xf32> to vector<2x32xf32>
    %cst_221 = arith.constant 1.000000e+00 : f32
    %528 = vector.broadcast %cst_221 : f32 to vector<2x32xf32>
    %529 = arith.addf %527, %528 : vector<2x32xf32>
    %cst_222 = arith.constant 5.000000e-01 : f32
    %530 = vector.broadcast %cst_222 : f32 to vector<2x32xf32>
    %531 = arith.mulf %529, %530 : vector<2x32xf32>
    %532 = vector.extract_strided_slice %521 {offsets = [0, 64], sizes = [2, 32], strides = [1, 1]} : vector<2x128xf32> to vector<2x32xf32>
    %533 = vector.extract_strided_slice %521 {offsets = [0, 96], sizes = [2, 32], strides = [1, 1]} : vector<2x128xf32> to vector<2x32xf32>
    %cst_223 = arith.constant 1.000000e+00 : f32
    %534 = vector.broadcast %cst_223 : f32 to vector<2x32xf32>
    %535 = arith.addf %533, %534 : vector<2x32xf32>
    %cst_224 = arith.constant 5.000000e-01 : f32
    %536 = vector.broadcast %cst_224 : f32 to vector<2x32xf32>
    %537 = arith.mulf %535, %536 : vector<2x32xf32>
    %538 = arith.mulf %531, %509 : vector<2x32xf32>
    %539 = arith.mulf %526, %532 : vector<2x32xf32>
    %540 = arith.addf %538, %539 : vector<2x32xf32>
    %541 = math.tanh %540 : vector<2x32xf32>
    %542 = arith.mulf %537, %541 : vector<2x32xf32>
    %543 = arith.index_cast %c7_i32_215 : i32 to index
    %c0_225 = arith.constant 0 : index
    %c0_226 = arith.constant 0 : index
    %544 = vector.load %arg16[%543, %c0_225, %c0_226] : memref<8x2x32xf32, #tpu.memory_space<vmem>>, vector<1x2x32xf32>
    %545 = vector.shape_cast %544 : vector<1x2x32xf32> to vector<2x32xf32>
    %546 = vector.shape_cast %542 : vector<2x32xf32> to vector<1x2x32xf32>
    tpu.vector_store %arg16[%543, %c0_225, %c0_226], %546 {strides = array<i32>} : memref<8x2x32xf32, #tpu.memory_space<vmem>>, vector<1x2x32xf32>,
    %c8_i32_227 = arith.constant 8 : i32
    %c1_228 = arith.constant 1 : index
    %c0_229 = arith.constant 0 : index
    %c0_230 = arith.constant 0 : index
    %547 = vector.load %arg13[%c1_228, %c0_229, %c0_230] : memref<2x2x32xf32, #tpu.memory_space<vmem>>, vector<1x2x32xf32>
    %548 = vector.shape_cast %547 : vector<1x2x32xf32> to vector<2x32xf32>
    %549 = vector.shape_cast %542 : vector<2x32xf32> to vector<1x2x32xf32>
    tpu.vector_store %arg13[%c1_228, %c0_229, %c0_230], %549 {strides = array<i32>} : memref<2x2x32xf32, #tpu.memory_space<vmem>>, vector<1x2x32xf32>,
    %c1_231 = arith.constant 1 : index
    %c0_232 = arith.constant 0 : index
    %c0_233 = arith.constant 0 : index
    %550 = vector.load %arg14[%c1_231, %c0_232, %c0_233] : memref<2x2x32xf32, #tpu.memory_space<vmem>>, vector<1x2x32xf32>
    %551 = vector.shape_cast %550 : vector<1x2x32xf32> to vector<2x32xf32>
    %552 = vector.shape_cast %540 : vector<2x32xf32> to vector<1x2x32xf32>
    tpu.vector_store %arg14[%c1_231, %c0_232, %c0_233], %552 {strides = array<i32>} : memref<2x2x32xf32, #tpu.memory_space<vmem>>, vector<1x2x32xf32>,
    %c0_234 = arith.constant 0 : index
    %c0_235 = arith.constant 0 : index
    %c0_236 = arith.constant 0 : index
    %553 = vector.load %arg16[%c0_234, %c0_235, %c0_236] : memref<8x2x32xf32, #tpu.memory_space<vmem>>, vector<8x2x32xf32>
    %cst_237 = arith.constant dense<0.000000e+00> : vector<8x2xf32>
    %554 = vector.multi_reduction <add>, %553, %cst_237 [2] : vector<8x2x32xf32> to vector<8x2xf32>
    %555 = vector.shape_cast %554 : vector<8x2xf32> to vector<8x2x1xf32>
    %cst_238 = arith.constant 3.200000e+01 : f32
    %556 = vector.broadcast %cst_238 : f32 to vector<8x2x1xf32>
    %557 = arith.divf %555, %556 : vector<8x2x1xf32>
    %558 = vector.broadcast %557 : vector<8x2x1xf32> to vector<8x2x32xf32>
    %559 = arith.subf %553, %558 : vector<8x2x32xf32>
    %560 = arith.mulf %559, %559 : vector<8x2x32xf32>
    %cst_239 = arith.constant dense<0.000000e+00> : vector<8x2xf32>
    %561 = vector.multi_reduction <add>, %560, %cst_239 [2] : vector<8x2x32xf32> to vector<8x2xf32>
    %562 = vector.shape_cast %561 : vector<8x2xf32> to vector<8x2x1xf32>
    %cst_240 = arith.constant 3.200000e+01 : f32
    %563 = vector.broadcast %cst_240 : f32 to vector<8x2x1xf32>
    %564 = arith.divf %562, %563 : vector<8x2x1xf32>
    %565 = vector.broadcast %557 : vector<8x2x1xf32> to vector<8x2x32xf32>
    %566 = arith.subf %553, %565 : vector<8x2x32xf32>
    %cst_241 = arith.constant 9.99999974E-6 : f32
    %567 = vector.broadcast %cst_241 : f32 to vector<8x2x1xf32>
    %568 = arith.addf %564, %567 : vector<8x2x1xf32>
    %569 = math.rsqrt %568 : vector<8x2x1xf32>
    %570 = vector.broadcast %569 : vector<8x2x1xf32> to vector<8x2x32xf32>
    %571 = arith.mulf %566, %570 : vector<8x2x32xf32>
    %c0_242 = arith.constant 0 : index
    %c0_243 = arith.constant 0 : index
    %572 = vector.load %arg10[%c0_242, %c0_243] : memref<1x32xf32, #tpu.memory_space<vmem>>, vector<1x32xf32>
    %573 = vector.shape_cast %572 : vector<1x32xf32> to vector<1x1x32xf32>
    %574 = vector.broadcast %573 : vector<1x1x32xf32> to vector<8x2x32xf32>
    %575 = arith.mulf %571, %574 : vector<8x2x32xf32>
    %c0_244 = arith.constant 0 : index
    %c0_245 = arith.constant 0 : index
    %576 = vector.load %arg11[%c0_244, %c0_245] : memref<1x32xf32, #tpu.memory_space<vmem>>, vector<1x32xf32>
    %577 = vector.shape_cast %576 : vector<1x32xf32> to vector<1x1x32xf32>
    %578 = vector.broadcast %577 : vector<1x1x32xf32> to vector<8x2x32xf32>
    %579 = arith.addf %575, %578 : vector<8x2x32xf32>
    %c0_246 = arith.constant 0 : index
    %c0_247 = arith.constant 0 : index
    %c0_248 = arith.constant 0 : index
    %580 = vector.load %arg12[%c0_246, %c0_247, %c0_248] : memref<8x2x32xf32, #tpu.memory_space<vmem>>, vector<8x2x32xf32>
    tpu.vector_store %arg12[%c0_246, %c0_247, %c0_248], %579 {strides = array<i32>} : memref<8x2x32xf32, #tpu.memory_space<vmem>>, vector<8x2x32xf32>,
    return
  }
  func.func @transform_0(%arg0: i32) -> (i32, i32, i32) {
    %c0_i32 = arith.constant 0 : i32
    %c0_i32_0 = arith.constant 0 : i32
    %c0_i32_1 = arith.constant 0 : i32
    return %c0_i32, %arg0, %c0_i32_0 : i32, i32, i32
  }
  func.func @transform_1(%arg0: i32) -> (i32, i32, i32) {
    %c0_i32 = arith.constant 0 : i32
    %c0_i32_0 = arith.constant 0 : i32
    %c0_i32_1 = arith.constant 0 : i32
    return %c0_i32, %arg0, %c0_i32_0 : i32, i32, i32
  }
  func.func @transform_2(%arg0: i32) -> (i32, i32, i32) {
    %c0_i32 = arith.constant 0 : i32
    %c0_i32_0 = arith.constant 0 : i32
    %c0_i32_1 = arith.constant 0 : i32
    return %c0_i32, %arg0, %c0_i32_0 : i32, i32, i32
  }
  func.func @transform_3(%arg0: i32) -> (i32, i32) {
    %c0_i32 = arith.constant 0 : i32
    %c0_i32_0 = arith.constant 0 : i32
    %c0_i32_1 = arith.constant 0 : i32
    return %c0_i32, %c0_i32_0 : i32, i32
  }
  func.func @transform_4(%arg0: i32) -> (i32, i32) {
    %c0_i32 = arith.constant 0 : i32
    %c0_i32_0 = arith.constant 0 : i32
    %c0_i32_1 = arith.constant 0 : i32
    return %c0_i32, %c0_i32_0 : i32, i32
  }
  func.func @transform_5(%arg0: i32) -> (i32, i32) {
    %c0_i32 = arith.constant 0 : i32
    %c0_i32_0 = arith.constant 0 : i32
    %c0_i32_1 = arith.constant 0 : i32
    return %c0_i32, %c0_i32_0 : i32, i32
  }
  func.func @transform_6(%arg0: i32) -> (i32, i32) {
    %c0_i32 = arith.constant 0 : i32
    %c0_i32_0 = arith.constant 0 : i32
    %c0_i32_1 = arith.constant 0 : i32
    return %c0_i32, %c0_i32_0 : i32, i32
  }
  func.func @transform_7(%arg0: i32) -> (i32, i32) {
    %c0_i32 = arith.constant 0 : i32
    %c0_i32_0 = arith.constant 0 : i32
    %c0_i32_1 = arith.constant 0 : i32
    return %c0_i32, %c0_i32_0 : i32, i32
  }
  func.func @transform_8(%arg0: i32) -> (i32, i32) {
    %c0_i32 = arith.constant 0 : i32
    %c0_i32_0 = arith.constant 0 : i32
    %c0_i32_1 = arith.constant 0 : i32
    return %c0_i32, %c0_i32_0 : i32, i32
  }
  func.func @transform_9(%arg0: i32) -> (i32, i32) {
    %c0_i32 = arith.constant 0 : i32
    %c0_i32_0 = arith.constant 0 : i32
    %c0_i32_1 = arith.constant 0 : i32
    return %c0_i32, %c0_i32_0 : i32, i32
  }
  func.func @transform_10(%arg0: i32) -> (i32, i32) {
    %c0_i32 = arith.constant 0 : i32
    %c0_i32_0 = arith.constant 0 : i32
    %c0_i32_1 = arith.constant 0 : i32
    return %c0_i32, %c0_i32_0 : i32, i32
  }
  func.func @transform_11(%arg0: i32) -> (i32, i32, i32) {
    %c0_i32 = arith.constant 0 : i32
    %c0_i32_0 = arith.constant 0 : i32
    %c0_i32_1 = arith.constant 0 : i32
    return %c0_i32, %arg0, %c0_i32_0 : i32, i32, i32
  }
  func.func @transform_12(%arg0: i32) -> (i32, i32, i32) {
    %c0_i32 = arith.constant 0 : i32
    %c0_i32_0 = arith.constant 0 : i32
    %c0_i32_1 = arith.constant 0 : i32
    return %c0_i32, %arg0, %c0_i32_0 : i32, i32, i32
  }
  func.func @transform_13(%arg0: i32) -> (i32, i32, i32) {
    %c0_i32 = arith.constant 0 : i32
    %c0_i32_0 = arith.constant 0 : i32
    %c0_i32_1 = arith.constant 0 : i32
    return %c0_i32, %arg0, %c0_i32_0 : i32, i32, i32
  }
}

</mosaic_0001>

<llo_original>
// kernel: tpu_custom_call.1
$region0: #{tpu_custom_call.1}
  #allocation0 [shape = 'u32[]', space=smem, size = 0x4, offset = 0x4, fixed_abs, tag = 'smem constant byte address 0x4 - core index']
  #allocation1 [shape = 'u32[144,128]{1,0:T(1,128)}', space=vmem, size = 0x12000, scoped, tag = 'internal scratch']
  #allocation2 [shape = 'f32[8,2,128]{2,1,0:T(2,128)}', space=vmem, size = 0x2000, scoped, tag = 'scratch operand']
  #allocation3 [shape = 'f32[8,2,32]{2,1,0:T(2,128)}', space=vmem, size = 0x2000, scoped, tag = 'scratch operand']
  %s0 = inlined_call_operand.hbm [shape: f32[8,2,32], index: 0, kind: input, shape index: {}]
  %s1 = inlined_call_operand.hbm [shape: f32[2,2,32], index: 1, kind: input, shape index: {}]
  %s2 = inlined_call_operand.hbm [shape: f32[2,2,32], index: 2, kind: input, shape index: {}]
  %s3 = inlined_call_operand.hbm [shape: f32[32,128], index: 3, kind: input, shape index: {}]
  %s4 = inlined_call_operand.hbm [shape: f32[32,128], index: 4, kind: input, shape index: {}]
  %s5 = inlined_call_operand.vmem [shape: f32[1,128], index: 5, kind: input, shape index: {}]
  %s6 = inlined_call_operand.hbm [shape: f32[32,128], index: 6, kind: input, shape index: {}]
  %s7 = inlined_call_operand.hbm [shape: f32[32,128], index: 7, kind: input, shape index: {}]
  %s8 = inlined_call_operand.vmem [shape: f32[1,128], index: 8, kind: input, shape index: {}]
  %s9 = inlined_call_operand.vmem [shape: f32[1,32], index: 9, kind: input, shape index: {}]
  %s10 = inlined_call_operand.vmem [shape: f32[1,32], index: 10, kind: input, shape index: {}]
  %s11 = inlined_call_operand.hbm [shape: f32[8,2,32], index: 11, kind: output, shape index: {0}]
  %s12 = inlined_call_operand.hbm [shape: f32[2,2,32], index: 12, kind: output, shape index: {1}]
  %s13 = inlined_call_operand.hbm [shape: f32[2,2,32], index: 13, kind: output, shape index: {2}]
  %14 = xla_tuple %s11, %s12, %s13
  %s15 = sld [smem:[#allocation0]]
  $region98: #{tpu_custom_call.1} parent=0
    _
  %s17 = ssub.s32 1, %s15
  %s18 = scalar_select 0, %s17, %s15
  $region1: #{tpu_custom_call.1} parent=0
    #allocation4 [shape = 'u8[8192]{0}', space=vmem, size = 0x2000, scoped, tag = 'input window, operand 0, single buffered']
    #allocation5 [shape = 's32[1]{0}', space=sflag, size = 0x4, scoped, tag = 'scoped memory for tpu_custom_call.1']
    #allocation6 [shape = 's32[1]{0}', space=sflag, size = 0x4, scoped, tag = 'scoped memory for tpu_custom_call.1']
    #allocation7 [shape = 'u8[2048]{0}', space=vmem, size = 0x800, scoped, tag = 'input window, operand 1, single buffered']
    #allocation8 [shape = 's32[1]{0}', space=sflag, size = 0x4, scoped, tag = 'scoped memory for tpu_custom_call.1']
    #allocation9 [shape = 'u8[2048]{0}', space=vmem, size = 0x800, scoped, tag = 'input window, operand 2, single buffered']
    #allocation10 [shape = 'u8[16384]{0}', space=vmem, size = 0x4000, scoped, tag = 'input window, operand 3, single buffered']
    #allocation11 [shape = 's32[1]{0}', space=sflag, size = 0x4, scoped, tag = 'scoped memory for tpu_custom_call.1']
    #allocation12 [shape = 'u8[16384]{0}', space=vmem, size = 0x4000, scoped, tag = 'input window, operand 4, single buffered']
    #allocation13 [shape = 'u8[16384]{0}', space=vmem, size = 0x4000, scoped, tag = 'input window, operand 6, single buffered']
    #allocation14 [shape = 's32[1]{0}', space=sflag, size = 0x4, scoped, tag = 'scoped memory for tpu_custom_call.1']
    #allocation15 [shape = 'u8[16384]{0}', space=vmem, size = 0x4000, scoped, tag = 'input window, operand 7, single buffered']
    #allocation16 [shape = 'u8[8192]{0}', space=vmem, size = 0x2000, scoped, tag = 'output window, operand 0, single buffered']
    #allocation17 [shape = 'u8[2048]{0}', space=vmem, size = 0x800, scoped, tag = 'output window, operand 1, single buffered']
    #allocation18 [shape = 's32[1]{0}', space=sflag, size = 0x4, scoped, tag = 'scoped memory for tpu_custom_call.1']
    #allocation19 [shape = 'u8[2048]{0}', space=vmem, size = 0x800, scoped, tag = 'output window, operand 2, single buffered']
    %19 = vsyncpa [#allocation5], 0
    %20 = vsyncpa [#allocation8], 0
    %21 = vsyncpa [#allocation11], 0
    %22 = vsyncpa [#allocation14], 0
    %23 = vsyncpa [#allocation6], 0
    %24 = vsyncpa [#allocation18], 0
    // Predicated region
    $region2: #{tpu_custom_call.1} parent=1 // pred_check
      _
    $region3: #{tpu_custom_call.1} parent=1 // pred_check_branch
      %26 = sbr.rel (0) target = $region5
    $region4: #{tpu_custom_call.1} parent=1 // pred_region
      %s28 = ssub.s32 256, 256
      %29 = vsyncadd [#allocation5], %s28
      %s30 = sshll.u32 [#allocation4], 4
      %s31 = int_to_ptr.vmem [resolvable:$true] %s30
      %36 = dma.hbm_to_vmem [thread:$0]  %s0, 256, %s31, [#allocation5], 32, 32, 2
    $region5: #{tpu_custom_call.1} parent=1 // pred_fallthru
      _
    // Predicated region
    $region6: #{tpu_custom_call.1} parent=1 // pred_check
      _
    $region7: #{tpu_custom_call.1} parent=1 // pred_check_branch
      %38 = sbr.rel (0) target = $region9
    $region8: #{tpu_custom_call.1} parent=1 // pred_region
      %s40 = ssub.s32 64, 64
      %41 = vsyncadd [#allocation8], %s40
      %s42 = sshll.u32 [#allocation7], 4
      %s43 = int_to_ptr.vmem [resolvable:$true] %s42
      %48 = dma.hbm_to_vmem [thread:$0]  %s1, 64, %s43, [#allocation8], 32, 32, 2
    $region9: #{tpu_custom_call.1} parent=1 // pred_fallthru
      _
    // Predicated region
    $region10: #{tpu_custom_call.1} parent=1 // pred_check
      _
    $region11: #{tpu_custom_call.1} parent=1 // pred_check_branch
      %50 = sbr.rel (0) target = $region13
    $region12: #{tpu_custom_call.1} parent=1 // pred_region
      %s52 = ssub.s32 64, 64
      %53 = vsyncadd [#allocation8], %s52
      %s54 = sshll.u32 [#allocation9], 4
      %s55 = int_to_ptr.vmem [resolvable:$true] %s54
      %60 = dma.hbm_to_vmem [thread:$0]  %s2, 64, %s55, [#allocation8], 32, 32, 2
    $region13: #{tpu_custom_call.1} parent=1 // pred_fallthru
      _
    // Predicated region
    $region14: #{tpu_custom_call.1} parent=1 // pred_check
      _
    $region15: #{tpu_custom_call.1} parent=1 // pred_check_branch
      %62 = sbr.rel (0) target = $region17
    $region16: #{tpu_custom_call.1} parent=1 // pred_region
      %s64 = ssub.s32 512, 512
      %65 = vsyncadd [#allocation11], %s64
      %s66 = sshll.u32 [#allocation10], 4
      %s67 = int_to_ptr.vmem [resolvable:$true] %s66
      %72 = dma.hbm_to_vmem [thread:$0]  %s3, 512, %s67, [#allocation11], 128, 128, 8
    $region17: #{tpu_custom_call.1} parent=1 // pred_fallthru
      _
    // Predicated region
    $region18: #{tpu_custom_call.1} parent=1 // pred_check
      _
    $region19: #{tpu_custom_call.1} parent=1 // pred_check_branch
      %74 = sbr.rel (0) target = $region21
    $region20: #{tpu_custom_call.1} parent=1 // pred_region
      %s76 = ssub.s32 512, 512
      %77 = vsyncadd [#allocation11], %s76
      %s78 = sshll.u32 [#allocation12], 4
      %s79 = int_to_ptr.vmem [resolvable:$true] %s78
      %84 = dma.hbm_to_vmem [thread:$0]  %s4, 512, %s79, [#allocation11], 128, 128, 8
    $region21: #{tpu_custom_call.1} parent=1 // pred_fallthru
      _
    // Predicated region
    $region22: #{tpu_custom_call.1} parent=1 // pred_check
      _
    $region23: #{tpu_custom_call.1} parent=1 // pred_check_branch
      %86 = sbr.rel (0) target = $region25
    $region24: #{tpu_custom_call.1} parent=1 // pred_region
      _
    $region25: #{tpu_custom_call.1} parent=1 // pred_fallthru
      _
    // Predicated region
    $region26: #{tpu_custom_call.1} parent=1 // pred_check
      _
    $region27: #{tpu_custom_call.1} parent=1 // pred_check_branch
      %88 = sbr.rel (0) target = $region29
    $region28: #{tpu_custom_call.1} parent=1 // pred_region
      %s90 = ssub.s32 512, 512
      %91 = vsyncadd [#allocation14], %s90
      %s92 = sshll.u32 [#allocation13], 4
      %s93 = int_to_ptr.vmem [resolvable:$true] %s92
      %98 = dma.hbm_to_vmem [thread:$0]  %s6, 512, %s93, [#allocation14], 128, 128, 8
    $region29: #{tpu_custom_call.1} parent=1 // pred_fallthru
      _
    // Predicated region
    $region30: #{tpu_custom_call.1} parent=1 // pred_check
      _
    $region31: #{tpu_custom_call.1} parent=1 // pred_check_branch
      %100 = sbr.rel (0) target = $region33
    $region32: #{tpu_custom_call.1} parent=1 // pred_region
      %s102 = ssub.s32 512, 512
      %103 = vsyncadd [#allocation14], %s102
      %s104 = sshll.u32 [#allocation15], 4
      %s105 = int_to_ptr.vmem [resolvable:$true] %s104
      %110 = dma.hbm_to_vmem [thread:$0]  %s7, 512, %s105, [#allocation14], 128, 128, 8
    $region33: #{tpu_custom_call.1} parent=1 // pred_fallthru
      _
    // Predicated region
    $region34: #{tpu_custom_call.1} parent=1 // pred_check
      _
    $region35: #{tpu_custom_call.1} parent=1 // pred_check_branch
      %112 = sbr.rel (0) target = $region37
    $region36: #{tpu_custom_call.1} parent=1 // pred_region
      _
    $region37: #{tpu_custom_call.1} parent=1 // pred_fallthru
      _
    // Predicated region
    $region38: #{tpu_custom_call.1} parent=1 // pred_check
      _
    $region39: #{tpu_custom_call.1} parent=1 // pred_check_branch
      %114 = sbr.rel (0) target = $region41
    $region40: #{tpu_custom_call.1} parent=1 // pred_region
      _
    $region41: #{tpu_custom_call.1} parent=1 // pred_fallthru
      _
    // Predicated region
    $region42: #{tpu_custom_call.1} parent=1 // pred_check
      _
    $region43: #{tpu_custom_call.1} parent=1 // pred_check_branch
      %116 = sbr.rel (0) target = $region45
    $region44: #{tpu_custom_call.1} parent=1 // pred_region
      _
    $region45: #{tpu_custom_call.1} parent=1 // pred_fallthru
      _
    // Predicated region
    $region46: #{tpu_custom_call.1} parent=1 // pred_check
      _
    $region47: #{tpu_custom_call.1} parent=1 // pred_check_branch
      %118 = sbr.rel (0) target = $region49
    $region48: #{tpu_custom_call.1} parent=1 // pred_region
      %119 = dma.done [#allocation5], 256
    $region49: #{tpu_custom_call.1} parent=1 // pred_fallthru
      _
    // Predicated region
    $region50: #{tpu_custom_call.1} parent=1 // pred_check
      _
    $region51: #{tpu_custom_call.1} parent=1 // pred_check_branch
      %121 = sbr.rel (0) target = $region53
    $region52: #{tpu_custom_call.1} parent=1 // pred_region
      %122 = dma.done [#allocation8], 64
    $region53: #{tpu_custom_call.1} parent=1 // pred_fallthru
      _
    // Predicated region
    $region54: #{tpu_custom_call.1} parent=1 // pred_check
      _
    $region55: #{tpu_custom_call.1} parent=1 // pred_check_branch
      %124 = sbr.rel (0) target = $region57
    $region56: #{tpu_custom_call.1} parent=1 // pred_region
      %125 = dma.done [#allocation8], 64
    $region57: #{tpu_custom_call.1} parent=1 // pred_fallthru
      _
    // Predicated region
    $region58: #{tpu_custom_call.1} parent=1 // pred_check
      _
    $region59: #{tpu_custom_call.1} parent=1 // pred_check_branch
      %127 = sbr.rel (0) target = $region61
    $region60: #{tpu_custom_call.1} parent=1 // pred_region
      %128 = dma.done [#allocation11], 512
    $region61: #{tpu_custom_call.1} parent=1 // pred_fallthru
      _
    // Predicated region
    $region62: #{tpu_custom_call.1} parent=1 // pred_check
      _
    $region63: #{tpu_custom_call.1} parent=1 // pred_check_branch
      %130 = sbr.rel (0) target = $region65
    $region64: #{tpu_custom_call.1} parent=1 // pred_region
      %131 = dma.done [#allocation11], 512
    $region65: #{tpu_custom_call.1} parent=1 // pred_fallthru
      _
    // Predicated region
    $region66: #{tpu_custom_call.1} parent=1 // pred_check
      _
    $region67: #{tpu_custom_call.1} parent=1 // pred_check_branch
      %133 = sbr.rel (0) target = $region69
    $region68: #{tpu_custom_call.1} parent=1 // pred_region
      %134 = dma.done [#allocation14], 512
    $region69: #{tpu_custom_call.1} parent=1 // pred_fallthru
      _
    // Predicated region
    $region70: #{tpu_custom_call.1} parent=1 // pred_check
      _
    $region71: #{tpu_custom_call.1} parent=1 // pred_check_branch
      %136 = sbr.rel (0) target = $region73
    $region72: #{tpu_custom_call.1} parent=1 // pred_region
      %137 = dma.done [#allocation14], 512
    $region73: #{tpu_custom_call.1} parent=1 // pred_fallthru
      _
    %v138 = vlaneseq
    %v139 = vand.u32 %v138, 127
    %vm140 = vcmp.ge.s32.totalorder %v139, 64
    %vm141 = vcmp.lt.s32.totalorder %v139, 96
    %vm142 = vmand %vm140, %vm141
    %v143 = vsel %vm142, 1.0, 0.5
    %v144 = vld [vmem:[#allocation10] sm:$0xff]
    %v145 = vld [vmem:[#allocation10 + $0x8] sm:$0xff]
    %v146 = vld [vmem:[#allocation10 + $0x10] sm:$0xff]
    %v147 = vld [vmem:[#allocation10 + $0x18] sm:$0xff]
    %v148 = vld [vmem:[#allocation12] sm:$0xff]
    %v149 = vld [vmem:[#allocation12 + $0x8] sm:$0xff]
    %v150 = vld [vmem:[#allocation12 + $0x10] sm:$0xff]
    %v151 = vld [vmem:[#allocation12 + $0x18] sm:$0xff]
    %v152 = vld [vmem:[%s5] sm:$0x1]
    %v153 = vmul.f32 %v148, %v143
    %v154 = vmul.f32 %v149, %v143
    %v155 = vmul.f32 %v150, %v143
    %v156 = vmul.f32 %v151, %v143
    %v157 = vld [vmem:[#allocation4] sm:$0x3]
    %v158 = vld [vmem:[#allocation4 + $0x2] sm:$0x3]
    %v159 = vld [vmem:[#allocation4 + $0x4] sm:$0x3]
    %v160 = vld [vmem:[#allocation4 + $0x6] sm:$0x3]
    %v161 = vld [vmem:[#allocation4 + $0x8] sm:$0x3]
    %v162 = vld [vmem:[#allocation4 + $0xa] sm:$0x3]
    %v163 = vld [vmem:[#allocation4 + $0xc] sm:$0x3]
    %v164 = vld [vmem:[#allocation4 + $0xe] sm:$0x3]
    %v166 = vlaneseq
    %v167 = vshrl.u32 %v166, 7
    %v168 = vsub.s32 0, %v167
    %v169 = vrot.slane %v152, %v168
    %v179 = vcombine.low %v157, %v158
    %v180 = vcombine.low %v159, %v160
    %v182 = vunpack.c.l.s4 1983009808
    %v183 = vunpack.c.0.s8 %v182
    %v184 = vlaneseq
    %v185 = vshrl.u32 %v184, 7
    %v186 = vsub.s32 %v183, %v185
    %v187 = vrot.slane %v179, %v186
    %v189 = vunpack.c.l.s4 1983009808
    %v190 = vunpack.c.0.s8 %v189
    %v191 = vlaneseq
    %v192 = vshrl.u32 %v191, 7
    %v193 = vsub.s32 %v190, %v192
    %v194 = vrot.slane %v180, %v193
    %v195 = vcombine.low %v187, %v194
    %v196 = vcombine.low %v161, %v162
    %v197 = vcombine.low %v163, %v164
    %v199 = vunpack.c.l.s4 1983009808
    %v200 = vunpack.c.0.s8 %v199
    %v201 = vlaneseq
    %v202 = vshrl.u32 %v201, 7
    %v203 = vsub.s32 %v200, %v202
    %v204 = vrot.slane %v196, %v203
    %v206 = vunpack.c.l.s4 1983009808
    %v207 = vunpack.c.0.s8 %v206
    %v208 = vlaneseq
    %v209 = vshrl.u32 %v208, 7
    %v210 = vsub.s32 %v207, %v209
    %v211 = vrot.slane %v197, %v210
    %v212 = vcombine.low %v204, %v211
    %vm213 = vcmask 261120
    %v214 = vsel %vm213, %v195, 0
    %v216 = vsel %vm213, %v212, 0
    %218 = vmatprep.subr.mxu0 0.0
    %219 = vmatpush1.msra.mxu0 0.0
    %220 = vmatprep.subr.mxu0 0.0
    %221 = vmatpush1.msra.mxu0 0.0
    %222 = vmatprep.subr.mxu0 0.0
    %223 = vmatpush1.msra.mxu0 0.0
    %224 = vmatprep.subr.mxu0 0.0
    %225 = vmatpush1.msra.mxu0 0.0
    %226 = vmatprep.subr.mxu0 0.0
    %227 = vmatpush1.msra.mxu0 0.0
    %228 = vmatprep.subr.mxu0 0.0
    %229 = vmatpush1.msra.mxu0 0.0
    %230 = vmatprep.subr.mxu0 0.0
    %231 = vmatpush1.msra.mxu0 0.0
    %232 = vmatprep.subr.mxu0 0.0
    %233 = vmatpush1.msra.mxu0 0.0
    %234 = vmatprep.subr.mxu0 0.0
    %235 = vmatpush1.msra.mxu0 0.0
    %236 = vmatprep.subr.mxu0 0.0
    %237 = vmatpush1.msra.mxu0 0.0
    %238 = vmatprep.subr.mxu0 0.0
    %239 = vmatpush1.msra.mxu0 0.0
    %240 = vmatprep.subr.mxu0 0.0
    %241 = vmatpush1.msra.mxu0 0.0
    %242 = vmatprep.subr.mxu0 0.0
    %243 = vmatpush1.msra.mxu0 %v147
    %244 = vmatprep.subr.mxu0 0.0
    %245 = vmatpush1.msra.mxu0 %v146
    %246 = vmatprep.subr.mxu0 0.0
    %247 = vmatpush1.msra.mxu0 %v145
    %248 = vmatprep.subr.mxu0 0.0
    %249 = vmatpush1.msra.mxu0 %v144
    %250 = vmatprep.subr.mxu0 0.0
    %251 = vmatpush2.msra.mxu0 0.0
    %252 = vmatprep.subr.mxu0 0.0
    %253 = vmatpush2.msra.mxu0 0.0
    %254 = vmatprep.subr.mxu0 0.0
    %255 = vmatpush2.msra.mxu0 0.0
    %256 = vmatprep.subr.mxu0 0.0
    %257 = vmatpush2.msra.mxu0 0.0
    %258 = vmatprep.subr.mxu0 0.0
    %259 = vmatpush2.msra.mxu0 0.0
    %260 = vmatprep.subr.mxu0 0.0
    %261 = vmatpush2.msra.mxu0 0.0
    %262 = vmatprep.subr.mxu0 0.0
    %263 = vmatpush2.msra.mxu0 0.0
    %264 = vmatprep.subr.mxu0 0.0
    %265 = vmatpush2.msra.mxu0 0.0
    %266 = vmatprep.subr.mxu0 0.0
    %267 = vmatpush2.msra.mxu0 0.0
    %268 = vmatprep.subr.mxu0 0.0
    %269 = vmatpush2.msra.mxu0 0.0
    %270 = vmatprep.subr.mxu0 0.0
    %271 = vmatpush2.msra.mxu0 0.0
    %272 = vmatprep.subr.mxu0 0.0
    %273 = vmatpush2.msra.mxu0 0.0
    %274 = vmatprep.subr.mxu0 0.0
    %275 = vmatpush2.msra.mxu0 0.0
    %276 = vmatprep.subr.mxu0 0.0
    %277 = vmatpush2.msra.mxu0 0.0
    %278 = vmatprep.subr.mxu0 0.0
    %279 = vmatpush2.msra.mxu0 0.0
    %280 = vmatprep.subr.mxu0 0.0
    %281 = vmatpush2.msra.mxu0 0.0
    %282 = vmatprep.mubr.f32.mxu0 0.0
    %283 = vmatmul.mubr.f32.gmra.mxu0 %v214
    %v284 = vpop.f32.mrf.mxu0
    %v285 = vadd.f32 %v169, %v284
    %v286 = vpop.f32.mrf.mxu0
    %287 = vmatprep.mubr.f32.mxu0 0.0
    %288 = vmatmul.mubr.f32.gmra.mxu0 %v216
    %v289 = vpop.f32.mrf.mxu0
    %v290 = vadd.f32 %v169, %v289
    %v291 = vpop.f32.mrf.mxu0
    %292 = vdwg.mxu0
    %v293 = vmul.f32 %v285, %v143
    %v294 = vmul.f32 %v290, %v143
    %v297 = vcombine.high %v293, %v293
    %v299 = vunpack.c.l.s4 1983009808
    %v300 = vunpack.c.0.s8 %v299
    %v301 = vlaneseq
    %v302 = vshrl.u32 %v301, 7
    %v303 = vsub.s32 %v300, %v302
    %v304 = vrot.slane %v293, %v303
    %v306 = vunpack.c.l.s4 1983009808
    %v307 = vunpack.c.0.s8 %v306
    %v308 = vlaneseq
    %v309 = vshrl.u32 %v308, 7
    %v310 = vsub.s32 %v307, %v309
    %v311 = vrot.slane %v297, %v310
    %v312 = vcombine.high %v304, %v304
    %v313 = vcombine.high %v311, %v311
    %v314 = vcombine.high %v294, %v294
    %v316 = vunpack.c.l.s4 1983009808
    %v317 = vunpack.c.0.s8 %v316
    %v318 = vlaneseq
    %v319 = vshrl.u32 %v318, 7
    %v320 = vsub.s32 %v317, %v319
    %v321 = vrot.slane %v294, %v320
    %v323 = vunpack.c.l.s4 1983009808
    %v324 = vunpack.c.0.s8 %v323
    %v325 = vlaneseq
    %v326 = vshrl.u32 %v325, 7
    %v327 = vsub.s32 %v324, %v326
    %v328 = vrot.slane %v314, %v327
    %v329 = vcombine.high %v321, %v321
    %v330 = vcombine.high %v328, %v328
    %339 = vst [vmem:[#allocation2] sm:$0x3] %v304
    %340 = vst [vmem:[#allocation2 + $0x2] sm:$0x3] %v312
    %341 = vst [vmem:[#allocation2 + $0x4] sm:$0x3] %v311
    %342 = vst [vmem:[#allocation2 + $0x6] sm:$0x3] %v313
    %343 = vst [vmem:[#allocation2 + $0x8] sm:$0x3] %v321
    %344 = vst [vmem:[#allocation2 + $0xa] sm:$0x3] %v329
    %345 = vst [vmem:[#allocation2 + $0xc] sm:$0x3] %v328
    %346 = vst [vmem:[#allocation2 + $0xe] sm:$0x3] %v330
    %v347 = vld [vmem:[#allocation7] sm:$0x3]
    %v348 = vld [vmem:[#allocation9] sm:$0x3]
    %v349 = vld [vmem:[#allocation2] sm:$0x3]
    %v351 = vsel %vm213, %v347, 0
    %353 = vmatprep.subr.mxu0 0.0
    %354 = vmatpush1.msra.mxu0 0.0
    %355 = vmatprep.subr.mxu0 0.0
    %356 = vmatpush1.msra.mxu0 0.0
    %357 = vmatprep.subr.mxu0 0.0
    %358 = vmatpush1.msra.mxu0 0.0
    %359 = vmatprep.subr.mxu0 0.0
    %360 = vmatpush1.msra.mxu0 0.0
    %361 = vmatprep.subr.mxu0 0.0
    %362 = vmatpush1.msra.mxu0 0.0
    %363 = vmatprep.subr.mxu0 0.0
    %364 = vmatpush1.msra.mxu0 0.0
    %365 = vmatprep.subr.mxu0 0.0
    %366 = vmatpush1.msra.mxu0 0.0
    %367 = vmatprep.subr.mxu0 0.0
    %368 = vmatpush1.msra.mxu0 0.0
    %369 = vmatprep.subr.mxu0 0.0
    %370 = vmatpush1.msra.mxu0 0.0
    %371 = vmatprep.subr.mxu0 0.0
    %372 = vmatpush1.msra.mxu0 0.0
    %373 = vmatprep.subr.mxu0 0.0
    %374 = vmatpush1.msra.mxu0 0.0
    %375 = vmatprep.subr.mxu0 0.0
    %376 = vmatpush1.msra.mxu0 0.0
    %377 = vmatprep.subr.mxu0 0.0
    %378 = vmatpush1.msra.mxu0 %v156
    %379 = vmatprep.subr.mxu0 0.0
    %380 = vmatpush1.msra.mxu0 %v155
    %381 = vmatprep.subr.mxu0 0.0
    %382 = vmatpush1.msra.mxu0 %v154
    %383 = vmatprep.subr.mxu0 0.0
    %384 = vmatpush1.msra.mxu0 %v153
    %385 = vmatprep.subr.mxu0 0.0
    %386 = vmatpush2.msra.mxu0 0.0
    %387 = vmatprep.subr.mxu0 0.0
    %388 = vmatpush2.msra.mxu0 0.0
    %389 = vmatprep.subr.mxu0 0.0
    %390 = vmatpush2.msra.mxu0 0.0
    %391 = vmatprep.subr.mxu0 0.0
    %392 = vmatpush2.msra.mxu0 0.0
    %393 = vmatprep.subr.mxu0 0.0
    %394 = vmatpush2.msra.mxu0 0.0
    %395 = vmatprep.subr.mxu0 0.0
    %396 = vmatpush2.msra.mxu0 0.0
    %397 = vmatprep.subr.mxu0 0.0
    %398 = vmatpush2.msra.mxu0 0.0
    %399 = vmatprep.subr.mxu0 0.0
    %400 = vmatpush2.msra.mxu0 0.0
    %401 = vmatprep.subr.mxu0 0.0
    %402 = vmatpush2.msra.mxu0 0.0
    %403 = vmatprep.subr.mxu0 0.0
    %404 = vmatpush2.msra.mxu0 0.0
    %405 = vmatprep.subr.mxu0 0.0
    %406 = vmatpush2.msra.mxu0 0.0
    %407 = vmatprep.subr.mxu0 0.0
    %408 = vmatpush2.msra.mxu0 0.0
    %409 = vmatprep.subr.mxu0 0.0
    %410 = vmatpush2.msra.mxu0 0.0
    %411 = vmatprep.subr.mxu0 0.0
    %412 = vmatpush2.msra.mxu0 0.0
    %413 = vmatprep.subr.mxu0 0.0
    %414 = vmatpush2.msra.mxu0 0.0
    %415 = vmatprep.subr.mxu0 0.0
    %416 = vmatpush2.msra.mxu0 0.0
    %417 = vmatprep.mubr.f32.mxu0 0.0
    %418 = vmatmul.mubr.f32.gmra.mxu0 %v351
    %v419 = vpop.f32.mrf.mxu0
    %v420 = vadd.f32 0.0, %v419
    %v421 = vpop.f32.mrf.mxu0
    %422 = vdwg.mxu0
    %v423 = vadd.f32 %v349, %v420
    %v424 = vtanh.pop %v423
    %v425 = vadd.f32 %v424, 1.0
    %v426 = vmul.f32 %v425, 0.5
    %428 = vrot.lane.b32.xlu0 %v348, 32
    %v429 = vpop.permute.xlu0 %428
    %v431 = vmul.f32 %v426, %v429
    %433 = vrot.lane.b32.xlu0 %v424, 64
    %v434 = vpop.permute.xlu0 %433
    %v436 = vmul.f32 %v426, %v434
    %438 = vrot.lane.b32.xlu0 %v436, 32
    %v439 = vpop.permute.xlu0 %438
    %v441 = vadd.f32 %v431, %v439
    %v442 = vtanh.pop %v441
    %444 = vrot.lane.b32.xlu0 %v442, 64
    %v445 = vpop.permute.xlu0 %444
    %v447 = vmul.f32 %v426, %v445
    %449 = vrot.lane.b32.xlu0 %v447, 32
    %v450 = vpop.permute.xlu0 %449
    %vm452 = vcmask 254976
    %453 = vst.msk [vmem:[#allocation3] sm:$0x3] %vm452, %v450
    %s454 = scalar_lea.vmem [#allocation2], 2
    %v455 = vld [vmem:[%s454] sm:$0x3]
    %v456 = vsel %vm213, %v450, 0
    %458 = vmatprep.subr.mxu0 0.0
    %459 = vmatpush1.msra.mxu0 0.0
    %460 = vmatprep.subr.mxu0 0.0
    %461 = vmatpush1.msra.mxu0 0.0
    %462 = vmatprep.subr.mxu0 0.0
    %463 = vmatpush1.msra.mxu0 0.0
    %464 = vmatprep.subr.mxu0 0.0
    %465 = vmatpush1.msra.mxu0 0.0
    %466 = vmatprep.subr.mxu0 0.0
    %467 = vmatpush1.msra.mxu0 0.0
    %468 = vmatprep.subr.mxu0 0.0
    %469 = vmatpush1.msra.mxu0 0.0
    %470 = vmatprep.subr.mxu0 0.0
    %471 = vmatpush1.msra.mxu0 0.0
    %472 = vmatprep.subr.mxu0 0.0
    %473 = vmatpush1.msra.mxu0 0.0
    %474 = vmatprep.subr.mxu0 0.0
    %475 = vmatpush1.msra.mxu0 0.0
    %476 = vmatprep.subr.mxu0 0.0
    %477 = vmatpush1.msra.mxu0 0.0
    %478 = vmatprep.subr.mxu0 0.0
    %479 = vmatpush1.msra.mxu0 0.0
    %480 = vmatprep.subr.mxu0 0.0
    %481 = vmatpush1.msra.mxu0 0.0
    %482 = vmatprep.subr.mxu0 0.0
    %483 = vmatpush1.msra.mxu0 %v156
    %484 = vmatprep.subr.mxu0 0.0
    %485 = vmatpush1.msra.mxu0 %v155
    %486 = vmatprep.subr.mxu0 0.0
    %487 = vmatpush1.msra.mxu0 %v154
    %488 = vmatprep.subr.mxu0 0.0
    %489 = vmatpush1.msra.mxu0 %v153
    %490 = vmatprep.subr.mxu0 0.0
    %491 = vmatpush2.msra.mxu0 0.0
    %492 = vmatprep.subr.mxu0 0.0
    %493 = vmatpush2.msra.mxu0 0.0
    %494 = vmatprep.subr.mxu0 0.0
    %495 = vmatpush2.msra.mxu0 0.0
    %496 = vmatprep.subr.mxu0 0.0
    %497 = vmatpush2.msra.mxu0 0.0
    %498 = vmatprep.subr.mxu0 0.0
    %499 = vmatpush2.msra.mxu0 0.0
    %500 = vmatprep.subr.mxu0 0.0
    %501 = vmatpush2.msra.mxu0 0.0
    %502 = vmatprep.subr.mxu0 0.0
    %503 = vmatpush2.msra.mxu0 0.0
    %504 = vmatprep.subr.mxu0 0.0
    %505 = vmatpush2.msra.mxu0 0.0
    %506 = vmatprep.subr.mxu0 0.0
    %507 = vmatpush2.msra.mxu0 0.0
    %508 = vmatprep.subr.mxu0 0.0
    %509 = vmatpush2.msra.mxu0 0.0
    %510 = vmatprep.subr.mxu0 0.0
    %511 = vmatpush2.msra.mxu0 0.0
    %512 = vmatprep.subr.mxu0 0.0
    %513 = vmatpush2.msra.mxu0 0.0
    %514 = vmatprep.subr.mxu0 0.0
    %515 = vmatpush2.msra.mxu0 0.0
    %516 = vmatprep.subr.mxu0 0.0
    %517 = vmatpush2.msra.mxu0 0.0
    %518 = vmatprep.subr.mxu0 0.0
    %519 = vmatpush2.msra.mxu0 0.0
    %520 = vmatprep.subr.mxu0 0.0
    %521 = vmatpush2.msra.mxu0 0.0
    %522 = vmatprep.mubr.f32.mxu0 0.0
    %523 = vmatmul.mubr.f32.gmra.mxu0 %v456
    %v524 = vpop.f32.mrf.mxu0
    %v525 = vadd.f32 0.0, %v524
    %v526 = vpop.f32.mrf.mxu0
    %527 = vdwg.mxu0
    %v528 = vadd.f32 %v455, %v525
    %v529 = vtanh.pop %v528
    %v530 = vadd.f32 %v529, 1.0
    %v531 = vmul.f32 %v530, 0.5
    %v532 = vmul.f32 %v531, %v441
    %534 = vrot.lane.b32.xlu0 %v529, 64
    %v535 = vpop.permute.xlu0 %534
    %v537 = vmul.f32 %v531, %v535
    %539 = vrot.lane.b32.xlu0 %v537, 32
    %v540 = vpop.permute.xlu0 %539
    %v542 = vadd.f32 %v532, %v540
    %v543 = vtanh.pop %v542
    %545 = vrot.lane.b32.xlu0 %v543, 64
    %v546 = vpop.permute.xlu0 %545
    %v548 = vmul.f32 %v531, %v546
    %550 = vrot.lane.b32.xlu0 %v548, 32
    %v551 = vpop.permute.xlu0 %550
    %s553 = scalar_lea.vmem [#allocation3], 2
    %554 = vst.msk [vmem:[%s553] sm:$0x3] %vm452, %v551
    %s555 = scalar_lea.vmem [#allocation2], 4
    %v556 = vld [vmem:[%s555] sm:$0x3]
    %v557 = vsel %vm213, %v551, 0
    %559 = vmatprep.subr.mxu0 0.0
    %560 = vmatpush1.msra.mxu0 0.0
    %561 = vmatprep.subr.mxu0 0.0
    %562 = vmatpush1.msra.mxu0 0.0
    %563 = vmatprep.subr.mxu0 0.0
    %564 = vmatpush1.msra.mxu0 0.0
    %565 = vmatprep.subr.mxu0 0.0
    %566 = vmatpush1.msra.mxu0 0.0
    %567 = vmatprep.subr.mxu0 0.0
    %568 = vmatpush1.msra.mxu0 0.0
    %569 = vmatprep.subr.mxu0 0.0
    %570 = vmatpush1.msra.mxu0 0.0
    %571 = vmatprep.subr.mxu0 0.0
    %572 = vmatpush1.msra.mxu0 0.0
    %573 = vmatprep.subr.mxu0 0.0
    %574 = vmatpush1.msra.mxu0 0.0
    %575 = vmatprep.subr.mxu0 0.0
    %576 = vmatpush1.msra.mxu0 0.0
    %577 = vmatprep.subr.mxu0 0.0
    %578 = vmatpush1.msra.mxu0 0.0
    %579 = vmatprep.subr.mxu0 0.0
    %580 = vmatpush1.msra.mxu0 0.0
    %581 = vmatprep.subr.mxu0 0.0
    %582 = vmatpush1.msra.mxu0 0.0
    %583 = vmatprep.subr.mxu0 0.0
    %584 = vmatpush1.msra.mxu0 %v156
    %585 = vmatprep.subr.mxu0 0.0
    %586 = vmatpush1.msra.mxu0 %v155
    %587 = vmatprep.subr.mxu0 0.0
    %588 = vmatpush1.msra.mxu0 %v154
    %589 = vmatprep.subr.mxu0 0.0
    %590 = vmatpush1.msra.mxu0 %v153
    %591 = vmatprep.subr.mxu0 0.0
    %592 = vmatpush2.msra.mxu0 0.0
    %593 = vmatprep.subr.mxu0 0.0
    %594 = vmatpush2.msra.mxu0 0.0
    %595 = vmatprep.subr.mxu0 0.0
    %596 = vmatpush2.msra.mxu0 0.0
    %597 = vmatprep.subr.mxu0 0.0
    %598 = vmatpush2.msra.mxu0 0.0
    %599 = vmatprep.subr.mxu0 0.0
    %600 = vmatpush2.msra.mxu0 0.0
    %601 = vmatprep.subr.mxu0 0.0
    %602 = vmatpush2.msra.mxu0 0.0
    %603 = vmatprep.subr.mxu0 0.0
    %604 = vmatpush2.msra.mxu0 0.0
    %605 = vmatprep.subr.mxu0 0.0
    %606 = vmatpush2.msra.mxu0 0.0
    %607 = vmatprep.subr.mxu0 0.0
    %608 = vmatpush2.msra.mxu0 0.0
    %609 = vmatprep.subr.mxu0 0.0
    %610 = vmatpush2.msra.mxu0 0.0
    %611 = vmatprep.subr.mxu0 0.0
    %612 = vmatpush2.msra.mxu0 0.0
    %613 = vmatprep.subr.mxu0 0.0
    %614 = vmatpush2.msra.mxu0 0.0
    %615 = vmatprep.subr.mxu0 0.0
    %616 = vmatpush2.msra.mxu0 0.0
    %617 = vmatprep.subr.mxu0 0.0
    %618 = vmatpush2.msra.mxu0 0.0
    %619 = vmatprep.subr.mxu0 0.0
    %620 = vmatpush2.msra.mxu0 0.0
    %621 = vmatprep.subr.mxu0 0.0
    %622 = vmatpush2.msra.mxu0 0.0
    %623 = vmatprep.mubr.f32.mxu0 0.0
    %624 = vmatmul.mubr.f32.gmra.mxu0 %v557
    %v625 = vpop.f32.mrf.mxu0
    %v626 = vadd.f32 0.0, %v625
    %v627 = vpop.f32.mrf.mxu0
    %628 = vdwg.mxu0
    %v629 = vadd.f32 %v556, %v626
    %v630 = vtanh.pop %v629
    %v631 = vadd.f32 %v630, 1.0
    %v632 = vmul.f32 %v631, 0.5
    %v633 = vmul.f32 %v632, %v542
    %635 = vrot.lane.b32.xlu0 %v630, 64
    %v636 = vpop.permute.xlu0 %635
    %v638 = vmul.f32 %v632, %v636
    %640 = vrot.lane.b32.xlu0 %v638, 32
    %v641 = vpop.permute.xlu0 %640
    %v643 = vadd.f32 %v633, %v641
    %v644 = vtanh.pop %v643
    %646 = vrot.lane.b32.xlu0 %v644, 64
    %v647 = vpop.permute.xlu0 %646
    %v649 = vmul.f32 %v632, %v647
    %651 = vrot.lane.b32.xlu0 %v649, 32
    %v652 = vpop.permute.xlu0 %651
    %s654 = scalar_lea.vmem [#allocation3], 4
    %655 = vst.msk [vmem:[%s654] sm:$0x3] %vm452, %v652
    %s656 = scalar_lea.vmem [#allocation2], 6
    %v657 = vld [vmem:[%s656] sm:$0x3]
    %v658 = vsel %vm213, %v652, 0
    %660 = vmatprep.subr.mxu0 0.0
    %661 = vmatpush1.msra.mxu0 0.0
    %662 = vmatprep.subr.mxu0 0.0
    %663 = vmatpush1.msra.mxu0 0.0
    %664 = vmatprep.subr.mxu0 0.0
    %665 = vmatpush1.msra.mxu0 0.0
    %666 = vmatprep.subr.mxu0 0.0
    %667 = vmatpush1.msra.mxu0 0.0
    %668 = vmatprep.subr.mxu0 0.0
    %669 = vmatpush1.msra.mxu0 0.0
    %670 = vmatprep.subr.mxu0 0.0
    %671 = vmatpush1.msra.mxu0 0.0
    %672 = vmatprep.subr.mxu0 0.0
    %673 = vmatpush1.msra.mxu0 0.0
    %674 = vmatprep.subr.mxu0 0.0
    %675 = vmatpush1.msra.mxu0 0.0
    %676 = vmatprep.subr.mxu0 0.0
    %677 = vmatpush1.msra.mxu0 0.0
    %678 = vmatprep.subr.mxu0 0.0
    %679 = vmatpush1.msra.mxu0 0.0
    %680 = vmatprep.subr.mxu0 0.0
    %681 = vmatpush1.msra.mxu0 0.0
    %682 = vmatprep.subr.mxu0 0.0
    %683 = vmatpush1.msra.mxu0 0.0
    %684 = vmatprep.subr.mxu0 0.0
    %685 = vmatpush1.msra.mxu0 %v156
    %686 = vmatprep.subr.mxu0 0.0
    %687 = vmatpush1.msra.mxu0 %v155
    %688 = vmatprep.subr.mxu0 0.0
    %689 = vmatpush1.msra.mxu0 %v154
    %690 = vmatprep.subr.mxu0 0.0
    %691 = vmatpush1.msra.mxu0 %v153
    %692 = vmatprep.subr.mxu0 0.0
    %693 = vmatpush2.msra.mxu0 0.0
    %694 = vmatprep.subr.mxu0 0.0
    %695 = vmatpush2.msra.mxu0 0.0
    %696 = vmatprep.subr.mxu0 0.0
    %697 = vmatpush2.msra.mxu0 0.0
    %698 = vmatprep.subr.mxu0 0.0
    %699 = vmatpush2.msra.mxu0 0.0
    %700 = vmatprep.subr.mxu0 0.0
    %701 = vmatpush2.msra.mxu0 0.0
    %702 = vmatprep.subr.mxu0 0.0
    %703 = vmatpush2.msra.mxu0 0.0
    %704 = vmatprep.subr.mxu0 0.0
    %705 = vmatpush2.msra.mxu0 0.0
    %706 = vmatprep.subr.mxu0 0.0
    %707 = vmatpush2.msra.mxu0 0.0
    %708 = vmatprep.subr.mxu0 0.0
    %709 = vmatpush2.msra.mxu0 0.0
    %710 = vmatprep.subr.mxu0 0.0
    %711 = vmatpush2.msra.mxu0 0.0
    %712 = vmatprep.subr.mxu0 0.0
    %713 = vmatpush2.msra.mxu0 0.0
    %714 = vmatprep.subr.mxu0 0.0
    %715 = vmatpush2.msra.mxu0 0.0
    %716 = vmatprep.subr.mxu0 0.0
    %717 = vmatpush2.msra.mxu0 0.0
    %718 = vmatprep.subr.mxu0 0.0
    %719 = vmatpush2.msra.mxu0 0.0
    %720 = vmatprep.subr.mxu0 0.0
    %721 = vmatpush2.msra.mxu0 0.0
    %722 = vmatprep.subr.mxu0 0.0
    %723 = vmatpush2.msra.mxu0 0.0
    %724 = vmatprep.mubr.f32.mxu0 0.0
    %725 = vmatmul.mubr.f32.gmra.mxu0 %v658
    %v726 = vpop.f32.mrf.mxu0
    %v727 = vadd.f32 0.0, %v726
    %v728 = vpop.f32.mrf.mxu0
    %729 = vdwg.mxu0
    %v730 = vadd.f32 %v657, %v727
    %v731 = vtanh.pop %v730
    %v732 = vadd.f32 %v731, 1.0
    %v733 = vmul.f32 %v732, 0.5
    %v734 = vmul.f32 %v733, %v643
    %736 = vrot.lane.b32.xlu0 %v731, 64
    %v737 = vpop.permute.xlu0 %736
    %v739 = vmul.f32 %v733, %v737
    %741 = vrot.lane.b32.xlu0 %v739, 32
    %v742 = vpop.permute.xlu0 %741
    %v744 = vadd.f32 %v734, %v742
    %v745 = vtanh.pop %v744
    %747 = vrot.lane.b32.xlu0 %v745, 64
    %v748 = vpop.permute.xlu0 %747
    %v750 = vmul.f32 %v733, %v748
    %752 = vrot.lane.b32.xlu0 %v750, 32
    %v753 = vpop.permute.xlu0 %752
    %s755 = scalar_lea.vmem [#allocation3], 6
    %756 = vst.msk [vmem:[%s755] sm:$0x3] %vm452, %v753
    %s757 = scalar_lea.vmem [#allocation2], 8
    %v758 = vld [vmem:[%s757] sm:$0x3]
    %v759 = vsel %vm213, %v753, 0
    %761 = vmatprep.subr.mxu0 0.0
    %762 = vmatpush1.msra.mxu0 0.0
    %763 = vmatprep.subr.mxu0 0.0
    %764 = vmatpush1.msra.mxu0 0.0
    %765 = vmatprep.subr.mxu0 0.0
    %766 = vmatpush1.msra.mxu0 0.0
    %767 = vmatprep.subr.mxu0 0.0
    %768 = vmatpush1.msra.mxu0 0.0
    %769 = vmatprep.subr.mxu0 0.0
    %770 = vmatpush1.msra.mxu0 0.0
    %771 = vmatprep.subr.mxu0 0.0
    %772 = vmatpush1.msra.mxu0 0.0
    %773 = vmatprep.subr.mxu0 0.0
    %774 = vmatpush1.msra.mxu0 0.0
    %775 = vmatprep.subr.mxu0 0.0
    %776 = vmatpush1.msra.mxu0 0.0
    %777 = vmatprep.subr.mxu0 0.0
    %778 = vmatpush1.msra.mxu0 0.0
    %779 = vmatprep.subr.mxu0 0.0
    %780 = vmatpush1.msra.mxu0 0.0
    %781 = vmatprep.subr.mxu0 0.0
    %782 = vmatpush1.msra.mxu0 0.0
    %783 = vmatprep.subr.mxu0 0.0
    %784 = vmatpush1.msra.mxu0 0.0
    %785 = vmatprep.subr.mxu0 0.0
    %786 = vmatpush1.msra.mxu0 %v156
    %787 = vmatprep.subr.mxu0 0.0
    %788 = vmatpush1.msra.mxu0 %v155
    %789 = vmatprep.subr.mxu0 0.0
    %790 = vmatpush1.msra.mxu0 %v154
    %791 = vmatprep.subr.mxu0 0.0
    %792 = vmatpush1.msra.mxu0 %v153
    %793 = vmatprep.subr.mxu0 0.0
    %794 = vmatpush2.msra.mxu0 0.0
    %795 = vmatprep.subr.mxu0 0.0
    %796 = vmatpush2.msra.mxu0 0.0
    %797 = vmatprep.subr.mxu0 0.0
    %798 = vmatpush2.msra.mxu0 0.0
    %799 = vmatprep.subr.mxu0 0.0
    %800 = vmatpush2.msra.mxu0 0.0
    %801 = vmatprep.subr.mxu0 0.0
    %802 = vmatpush2.msra.mxu0 0.0
    %803 = vmatprep.subr.mxu0 0.0
    %804 = vmatpush2.msra.mxu0 0.0
    %805 = vmatprep.subr.mxu0 0.0
    %806 = vmatpush2.msra.mxu0 0.0
    %807 = vmatprep.subr.mxu0 0.0
    %808 = vmatpush2.msra.mxu0 0.0
    %809 = vmatprep.subr.mxu0 0.0
    %810 = vmatpush2.msra.mxu0 0.0
    %811 = vmatprep.subr.mxu0 0.0
    %812 = vmatpush2.msra.mxu0 0.0
    %813 = vmatprep.subr.mxu0 0.0
    %814 = vmatpush2.msra.mxu0 0.0
    %815 = vmatprep.subr.mxu0 0.0
    %816 = vmatpush2.msra.mxu0 0.0
    %817 = vmatprep.subr.mxu0 0.0
    %818 = vmatpush2.msra.mxu0 0.0
    %819 = vmatprep.subr.mxu0 0.0
    %820 = vmatpush2.msra.mxu0 0.0
    %821 = vmatprep.subr.mxu0 0.0
    %822 = vmatpush2.msra.mxu0 0.0
    %823 = vmatprep.subr.mxu0 0.0
    %824 = vmatpush2.msra.mxu0 0.0
    %825 = vmatprep.mubr.f32.mxu0 0.0
    %826 = vmatmul.mubr.f32.gmra.mxu0 %v759
    %v827 = vpop.f32.mrf.mxu0
    %v828 = vadd.f32 0.0, %v827
    %v829 = vpop.f32.mrf.mxu0
    %830 = vdwg.mxu0
    %v831 = vadd.f32 %v758, %v828
    %v832 = vtanh.pop %v831
    %v833 = vadd.f32 %v832, 1.0
    %v834 = vmul.f32 %v833, 0.5
    %v835 = vmul.f32 %v834, %v744
    %837 = vrot.lane.b32.xlu0 %v832, 64
    %v838 = vpop.permute.xlu0 %837
    %v840 = vmul.f32 %v834, %v838
    %842 = vrot.lane.b32.xlu0 %v840, 32
    %v843 = vpop.permute.xlu0 %842
    %v845 = vadd.f32 %v835, %v843
    %v846 = vtanh.pop %v845
    %848 = vrot.lane.b32.xlu0 %v846, 64
    %v849 = vpop.permute.xlu0 %848
    %v851 = vmul.f32 %v834, %v849
    %853 = vrot.lane.b32.xlu0 %v851, 32
    %v854 = vpop.permute.xlu0 %853
    %s856 = scalar_lea.vmem [#allocation3], 8
    %857 = vst.msk [vmem:[%s856] sm:$0x3] %vm452, %v854
    %s858 = scalar_lea.vmem [#allocation2], 10
    %v859 = vld [vmem:[%s858] sm:$0x3]
    %v860 = vsel %vm213, %v854, 0
    %862 = vmatprep.subr.mxu0 0.0
    %863 = vmatpush1.msra.mxu0 0.0
    %864 = vmatprep.subr.mxu0 0.0
    %865 = vmatpush1.msra.mxu0 0.0
    %866 = vmatprep.subr.mxu0 0.0
    %867 = vmatpush1.msra.mxu0 0.0
    %868 = vmatprep.subr.mxu0 0.0
    %869 = vmatpush1.msra.mxu0 0.0
    %870 = vmatprep.subr.mxu0 0.0
    %871 = vmatpush1.msra.mxu0 0.0
    %872 = vmatprep.subr.mxu0 0.0
    %873 = vmatpush1.msra.mxu0 0.0
    %874 = vmatprep.subr.mxu0 0.0
    %875 = vmatpush1.msra.mxu0 0.0
    %876 = vmatprep.subr.mxu0 0.0
    %877 = vmatpush1.msra.mxu0 0.0
    %878 = vmatprep.subr.mxu0 0.0
    %879 = vmatpush1.msra.mxu0 0.0
    %880 = vmatprep.subr.mxu0 0.0
    %881 = vmatpush1.msra.mxu0 0.0
    %882 = vmatprep.subr.mxu0 0.0
    %883 = vmatpush1.msra.mxu0 0.0
    %884 = vmatprep.subr.mxu0 0.0
    %885 = vmatpush1.msra.mxu0 0.0
    %886 = vmatprep.subr.mxu0 0.0
    %887 = vmatpush1.msra.mxu0 %v156
    %888 = vmatprep.subr.mxu0 0.0
    %889 = vmatpush1.msra.mxu0 %v155
    %890 = vmatprep.subr.mxu0 0.0
    %891 = vmatpush1.msra.mxu0 %v154
    %892 = vmatprep.subr.mxu0 0.0
    %893 = vmatpush1.msra.mxu0 %v153
    %894 = vmatprep.subr.mxu0 0.0
    %895 = vmatpush2.msra.mxu0 0.0
    %896 = vmatprep.subr.mxu0 0.0
    %897 = vmatpush2.msra.mxu0 0.0
    %898 = vmatprep.subr.mxu0 0.0
    %899 = vmatpush2.msra.mxu0 0.0
    %900 = vmatprep.subr.mxu0 0.0
    %901 = vmatpush2.msra.mxu0 0.0
    %902 = vmatprep.subr.mxu0 0.0
    %903 = vmatpush2.msra.mxu0 0.0
    %904 = vmatprep.subr.mxu0 0.0
    %905 = vmatpush2.msra.mxu0 0.0
    %906 = vmatprep.subr.mxu0 0.0
    %907 = vmatpush2.msra.mxu0 0.0
    %908 = vmatprep.subr.mxu0 0.0
    %909 = vmatpush2.msra.mxu0 0.0
    %910 = vmatprep.subr.mxu0 0.0
    %911 = vmatpush2.msra.mxu0 0.0
    %912 = vmatprep.subr.mxu0 0.0
    %913 = vmatpush2.msra.mxu0 0.0
    %914 = vmatprep.subr.mxu0 0.0
    %915 = vmatpush2.msra.mxu0 0.0
    %916 = vmatprep.subr.mxu0 0.0
    %917 = vmatpush2.msra.mxu0 0.0
    %918 = vmatprep.subr.mxu0 0.0
    %919 = vmatpush2.msra.mxu0 0.0
    %920 = vmatprep.subr.mxu0 0.0
    %921 = vmatpush2.msra.mxu0 0.0
    %922 = vmatprep.subr.mxu0 0.0
    %923 = vmatpush2.msra.mxu0 0.0
    %924 = vmatprep.subr.mxu0 0.0
    %925 = vmatpush2.msra.mxu0 0.0
    %926 = vmatprep.mubr.f32.mxu0 0.0
    %927 = vmatmul.mubr.f32.gmra.mxu0 %v860
    %v928 = vpop.f32.mrf.mxu0
    %v929 = vadd.f32 0.0, %v928
    %v930 = vpop.f32.mrf.mxu0
    %931 = vdwg.mxu0
    %v932 = vadd.f32 %v859, %v929
    %v933 = vtanh.pop %v932
    %v934 = vadd.f32 %v933, 1.0
    %v935 = vmul.f32 %v934, 0.5
    %v936 = vmul.f32 %v935, %v845
    %938 = vrot.lane.b32.xlu0 %v933, 64
    %v939 = vpop.permute.xlu0 %938
    %v941 = vmul.f32 %v935, %v939
    %943 = vrot.lane.b32.xlu0 %v941, 32
    %v944 = vpop.permute.xlu0 %943
    %v946 = vadd.f32 %v936, %v944
    %v947 = vtanh.pop %v946
    %949 = vrot.lane.b32.xlu0 %v947, 64
    %v950 = vpop.permute.xlu0 %949
    %v952 = vmul.f32 %v935, %v950
    %954 = vrot.lane.b32.xlu0 %v952, 32
    %v955 = vpop.permute.xlu0 %954
    %s957 = scalar_lea.vmem [#allocation3], 10
    %958 = vst.msk [vmem:[%s957] sm:$0x3] %vm452, %v955
    %s959 = scalar_lea.vmem [#allocation2], 12
    %v960 = vld [vmem:[%s959] sm:$0x3]
    %v961 = vsel %vm213, %v955, 0
    %963 = vmatprep.subr.mxu0 0.0
    %964 = vmatpush1.msra.mxu0 0.0
    %965 = vmatprep.subr.mxu0 0.0
    %966 = vmatpush1.msra.mxu0 0.0
    %967 = vmatprep.subr.mxu0 0.0
    %968 = vmatpush1.msra.mxu0 0.0
    %969 = vmatprep.subr.mxu0 0.0
    %970 = vmatpush1.msra.mxu0 0.0
    %971 = vmatprep.subr.mxu0 0.0
    %972 = vmatpush1.msra.mxu0 0.0
    %973 = vmatprep.subr.mxu0 0.0
    %974 = vmatpush1.msra.mxu0 0.0
    %975 = vmatprep.subr.mxu0 0.0
    %976 = vmatpush1.msra.mxu0 0.0
    %977 = vmatprep.subr.mxu0 0.0
    %978 = vmatpush1.msra.mxu0 0.0
    %979 = vmatprep.subr.mxu0 0.0
    %980 = vmatpush1.msra.mxu0 0.0
    %981 = vmatprep.subr.mxu0 0.0
    %982 = vmatpush1.msra.mxu0 0.0
    %983 = vmatprep.subr.mxu0 0.0
    %984 = vmatpush1.msra.mxu0 0.0
    %985 = vmatprep.subr.mxu0 0.0
    %986 = vmatpush1.msra.mxu0 0.0
    %987 = vmatprep.subr.mxu0 0.0
    %988 = vmatpush1.msra.mxu0 %v156
    %989 = vmatprep.subr.mxu0 0.0
    %990 = vmatpush1.msra.mxu0 %v155
    %991 = vmatprep.subr.mxu0 0.0
    %992 = vmatpush1.msra.mxu0 %v154
    %993 = vmatprep.subr.mxu0 0.0
    %994 = vmatpush1.msra.mxu0 %v153
    %995 = vmatprep.subr.mxu0 0.0
    %996 = vmatpush2.msra.mxu0 0.0
    %997 = vmatprep.subr.mxu0 0.0
    %998 = vmatpush2.msra.mxu0 0.0
    %999 = vmatprep.subr.mxu0 0.0
    %1000 = vmatpush2.msra.mxu0 0.0
    %1001 = vmatprep.subr.mxu0 0.0
    %1002 = vmatpush2.msra.mxu0 0.0
    %1003 = vmatprep.subr.mxu0 0.0
    %1004 = vmatpush2.msra.mxu0 0.0
    %1005 = vmatprep.subr.mxu0 0.0
    %1006 = vmatpush2.msra.mxu0 0.0
    %1007 = vmatprep.subr.mxu0 0.0
    %1008 = vmatpush2.msra.mxu0 0.0
    %1009 = vmatprep.subr.mxu0 0.0
    %1010 = vmatpush2.msra.mxu0 0.0
    %1011 = vmatprep.subr.mxu0 0.0
    %1012 = vmatpush2.msra.mxu0 0.0
    %1013 = vmatprep.subr.mxu0 0.0
    %1014 = vmatpush2.msra.mxu0 0.0
    %1015 = vmatprep.subr.mxu0 0.0
    %1016 = vmatpush2.msra.mxu0 0.0
    %1017 = vmatprep.subr.mxu0 0.0
    %1018 = vmatpush2.msra.mxu0 0.0
    %1019 = vmatprep.subr.mxu0 0.0
    %1020 = vmatpush2.msra.mxu0 0.0
    %1021 = vmatprep.subr.mxu0 0.0
    %1022 = vmatpush2.msra.mxu0 0.0
    %1023 = vmatprep.subr.mxu0 0.0
    %1024 = vmatpush2.msra.mxu0 0.0
    %1025 = vmatprep.subr.mxu0 0.0
    %1026 = vmatpush2.msra.mxu0 0.0
    %1027 = vmatprep.mubr.f32.mxu0 0.0
    %1028 = vmatmul.mubr.f32.gmra.mxu0 %v961
    %v1029 = vpop.f32.mrf.mxu0
    %v1030 = vadd.f32 0.0, %v1029
    %v1031 = vpop.f32.mrf.mxu0
    %1032 = vdwg.mxu0
    %v1033 = vadd.f32 %v960, %v1030
    %v1034 = vtanh.pop %v1033
    %v1035 = vadd.f32 %v1034, 1.0
    %v1036 = vmul.f32 %v1035, 0.5
    %v1037 = vmul.f32 %v1036, %v946
    %1039 = vrot.lane.b32.xlu0 %v1034, 64
    %v1040 = vpop.permute.xlu0 %1039
    %v1042 = vmul.f32 %v1036, %v1040
    %1044 = vrot.lane.b32.xlu0 %v1042, 32
    %v1045 = vpop.permute.xlu0 %1044
    %v1047 = vadd.f32 %v1037, %v1045
    %v1048 = vtanh.pop %v1047
    %1050 = vrot.lane.b32.xlu0 %v1048, 64
    %v1051 = vpop.permute.xlu0 %1050
    %v1053 = vmul.f32 %v1036, %v1051
    %1055 = vrot.lane.b32.xlu0 %v1053, 32
    %v1056 = vpop.permute.xlu0 %1055
    %s1058 = scalar_lea.vmem [#allocation3], 12
    %1059 = vst.msk [vmem:[%s1058] sm:$0x3] %vm452, %v1056
    %s1060 = scalar_lea.vmem [#allocation2], 14
    %v1061 = vld [vmem:[%s1060] sm:$0x3]
    %v1062 = vsel %vm213, %v1056, 0
    %1064 = vmatprep.subr.mxu0 0.0
    %1065 = vmatpush1.msra.mxu0 0.0
    %1066 = vmatprep.subr.mxu0 0.0
    %1067 = vmatpush1.msra.mxu0 0.0
    %1068 = vmatprep.subr.mxu0 0.0
    %1069 = vmatpush1.msra.mxu0 0.0
    %1070 = vmatprep.subr.mxu0 0.0
    %1071 = vmatpush1.msra.mxu0 0.0
    %1072 = vmatprep.subr.mxu0 0.0
    %1073 = vmatpush1.msra.mxu0 0.0
    %1074 = vmatprep.subr.mxu0 0.0
    %1075 = vmatpush1.msra.mxu0 0.0
    %1076 = vmatprep.subr.mxu0 0.0
    %1077 = vmatpush1.msra.mxu0 0.0
    %1078 = vmatprep.subr.mxu0 0.0
    %1079 = vmatpush1.msra.mxu0 0.0
    %1080 = vmatprep.subr.mxu0 0.0
    %1081 = vmatpush1.msra.mxu0 0.0
    %1082 = vmatprep.subr.mxu0 0.0
    %1083 = vmatpush1.msra.mxu0 0.0
    %1084 = vmatprep.subr.mxu0 0.0
    %1085 = vmatpush1.msra.mxu0 0.0
    %1086 = vmatprep.subr.mxu0 0.0
    %1087 = vmatpush1.msra.mxu0 0.0
    %1088 = vmatprep.subr.mxu0 0.0
    %1089 = vmatpush1.msra.mxu0 %v156
    %1090 = vmatprep.subr.mxu0 0.0
    %1091 = vmatpush1.msra.mxu0 %v155
    %1092 = vmatprep.subr.mxu0 0.0
    %1093 = vmatpush1.msra.mxu0 %v154
    %1094 = vmatprep.subr.mxu0 0.0
    %1095 = vmatpush1.msra.mxu0 %v153
    %1096 = vmatprep.subr.mxu0 0.0
    %1097 = vmatpush2.msra.mxu0 0.0
    %1098 = vmatprep.subr.mxu0 0.0
    %1099 = vmatpush2.msra.mxu0 0.0
    %1100 = vmatprep.subr.mxu0 0.0
    %1101 = vmatpush2.msra.mxu0 0.0
    %1102 = vmatprep.subr.mxu0 0.0
    %1103 = vmatpush2.msra.mxu0 0.0
    %1104 = vmatprep.subr.mxu0 0.0
    %1105 = vmatpush2.msra.mxu0 0.0
    %1106 = vmatprep.subr.mxu0 0.0
    %1107 = vmatpush2.msra.mxu0 0.0
    %1108 = vmatprep.subr.mxu0 0.0
    %1109 = vmatpush2.msra.mxu0 0.0
    %1110 = vmatprep.subr.mxu0 0.0
    %1111 = vmatpush2.msra.mxu0 0.0
    %1112 = vmatprep.subr.mxu0 0.0
    %1113 = vmatpush2.msra.mxu0 0.0
    %1114 = vmatprep.subr.mxu0 0.0
    %1115 = vmatpush2.msra.mxu0 0.0
    %1116 = vmatprep.subr.mxu0 0.0
    %1117 = vmatpush2.msra.mxu0 0.0
    %1118 = vmatprep.subr.mxu0 0.0
    %1119 = vmatpush2.msra.mxu0 0.0
    %1120 = vmatprep.subr.mxu0 0.0
    %1121 = vmatpush2.msra.mxu0 0.0
    %1122 = vmatprep.subr.mxu0 0.0
    %1123 = vmatpush2.msra.mxu0 0.0
    %1124 = vmatprep.subr.mxu0 0.0
    %1125 = vmatpush2.msra.mxu0 0.0
    %1126 = vmatprep.subr.mxu0 0.0
    %1127 = vmatpush2.msra.mxu0 0.0
    %1128 = vmatprep.mubr.f32.mxu0 0.0
    %1129 = vmatmul.mubr.f32.gmra.mxu0 %v1062
    %v1130 = vpop.f32.mrf.mxu0
    %v1131 = vadd.f32 0.0, %v1130
    %v1132 = vpop.f32.mrf.mxu0
    %1133 = vdwg.mxu0
    %v1134 = vadd.f32 %v1061, %v1131
    %v1135 = vtanh.pop %v1134
    %v1136 = vadd.f32 %v1135, 1.0
    %v1137 = vmul.f32 %v1136, 0.5
    %v1138 = vmul.f32 %v1137, %v1047
    %1140 = vrot.lane.b32.xlu0 %v1135, 64
    %v1141 = vpop.permute.xlu0 %1140
    %v1143 = vmul.f32 %v1137, %v1141
    %1145 = vrot.lane.b32.xlu0 %v1143, 32
    %v1146 = vpop.permute.xlu0 %1145
    %v1148 = vadd.f32 %v1138, %v1146
    %v1149 = vtanh.pop %v1148
    %1151 = vrot.lane.b32.xlu0 %v1149, 64
    %v1152 = vpop.permute.xlu0 %1151
    %v1154 = vmul.f32 %v1137, %v1152
    %1156 = vrot.lane.b32.xlu0 %v1154, 32
    %v1157 = vpop.permute.xlu0 %1156
    %s1159 = scalar_lea.vmem [#allocation3], 14
    %1160 = vst.msk [vmem:[%s1159] sm:$0x3] %vm452, %v1157
    %1161 = vst.msk [vmem:[#allocation17] sm:$0x3] %vm452, %v1157
    %1163 = vrot.lane.b32.xlu0 %v1148, 96
    %v1164 = vpop.permute.xlu0 %1163
    %1166 = vst.msk [vmem:[#allocation19] sm:$0x3] %vm452, %v1164
    %v1167 = vld [vmem:[#allocation13] sm:$0xff]
    %v1168 = vld [vmem:[#allocation13 + $0x8] sm:$0xff]
    %v1169 = vld [vmem:[#allocation13 + $0x10] sm:$0xff]
    %v1170 = vld [vmem:[#allocation13 + $0x18] sm:$0xff]
    %v1171 = vld [vmem:[#allocation15] sm:$0xff]
    %v1172 = vld [vmem:[#allocation15 + $0x8] sm:$0xff]
    %v1173 = vld [vmem:[#allocation15 + $0x10] sm:$0xff]
    %v1174 = vld [vmem:[#allocation15 + $0x18] sm:$0xff]
    %v1175 = vld [vmem:[%s8] sm:$0x1]
    %v1176 = vmul.f32 %v1171, %v143
    %v1177 = vmul.f32 %v1172, %v143
    %v1178 = vmul.f32 %v1173, %v143
    %v1179 = vmul.f32 %v1174, %v143
    %v1180 = vld [vmem:[#allocation3] sm:$0x3]
    %v1181 = vld [vmem:[#allocation3 + $0x2] sm:$0x3]
    %v1182 = vld [vmem:[#allocation3 + $0x4] sm:$0x3]
    %v1183 = vld [vmem:[#allocation3 + $0x6] sm:$0x3]
    %v1184 = vld [vmem:[#allocation3 + $0x8] sm:$0x3]
    %v1185 = vld [vmem:[#allocation3 + $0xa] sm:$0x3]
    %v1186 = vld [vmem:[#allocation3 + $0xc] sm:$0x3]
    %v1187 = vld [vmem:[#allocation3 + $0xe] sm:$0x3]
    %v1189 = vlaneseq
    %v1190 = vshrl.u32 %v1189, 7
    %v1191 = vsub.s32 0, %v1190
    %v1192 = vrot.slane %v1175, %v1191
    %v1202 = vcombine.low %v1180, %v1181
    %v1203 = vcombine.low %v1182, %v1183
    %v1205 = vunpack.c.l.s4 1983009808
    %v1206 = vunpack.c.0.s8 %v1205
    %v1207 = vlaneseq
    %v1208 = vshrl.u32 %v1207, 7
    %v1209 = vsub.s32 %v1206, %v1208
    %v1210 = vrot.slane %v1202, %v1209
    %v1212 = vunpack.c.l.s4 1983009808
    %v1213 = vunpack.c.0.s8 %v1212
    %v1214 = vlaneseq
    %v1215 = vshrl.u32 %v1214, 7
    %v1216 = vsub.s32 %v1213, %v1215
    %v1217 = vrot.slane %v1203, %v1216
    %v1218 = vcombine.low %v1210, %v1217
    %v1219 = vcombine.low %v1184, %v1185
    %v1220 = vcombine.low %v1186, %v1187
    %v1222 = vunpack.c.l.s4 1983009808
    %v1223 = vunpack.c.0.s8 %v1222
    %v1224 = vlaneseq
    %v1225 = vshrl.u32 %v1224, 7
    %v1226 = vsub.s32 %v1223, %v1225
    %v1227 = vrot.slane %v1219, %v1226
    %v1229 = vunpack.c.l.s4 1983009808
    %v1230 = vunpack.c.0.s8 %v1229
    %v1231 = vlaneseq
    %v1232 = vshrl.u32 %v1231, 7
    %v1233 = vsub.s32 %v1230, %v1232
    %v1234 = vrot.slane %v1220, %v1233
    %v1235 = vcombine.low %v1227, %v1234
    %v1236 = vsel %vm213, %v1218, 0
    %v1238 = vsel %vm213, %v1235, 0
    %1240 = vmatprep.subr.mxu0 0.0
    %1241 = vmatpush1.msra.mxu0 0.0
    %1242 = vmatprep.subr.mxu0 0.0
    %1243 = vmatpush1.msra.mxu0 0.0
    %1244 = vmatprep.subr.mxu0 0.0
    %1245 = vmatpush1.msra.mxu0 0.0
    %1246 = vmatprep.subr.mxu0 0.0
    %1247 = vmatpush1.msra.mxu0 0.0
    %1248 = vmatprep.subr.mxu0 0.0
    %1249 = vmatpush1.msra.mxu0 0.0
    %1250 = vmatprep.subr.mxu0 0.0
    %1251 = vmatpush1.msra.mxu0 0.0
    %1252 = vmatprep.subr.mxu0 0.0
    %1253 = vmatpush1.msra.mxu0 0.0
    %1254 = vmatprep.subr.mxu0 0.0
    %1255 = vmatpush1.msra.mxu0 0.0
    %1256 = vmatprep.subr.mxu0 0.0
    %1257 = vmatpush1.msra.mxu0 0.0
    %1258 = vmatprep.subr.mxu0 0.0
    %1259 = vmatpush1.msra.mxu0 0.0
    %1260 = vmatprep.subr.mxu0 0.0
    %1261 = vmatpush1.msra.mxu0 0.0
    %1262 = vmatprep.subr.mxu0 0.0
    %1263 = vmatpush1.msra.mxu0 0.0
    %1264 = vmatprep.subr.mxu0 0.0
    %1265 = vmatpush1.msra.mxu0 %v1170
    %1266 = vmatprep.subr.mxu0 0.0
    %1267 = vmatpush1.msra.mxu0 %v1169
    %1268 = vmatprep.subr.mxu0 0.0
    %1269 = vmatpush1.msra.mxu0 %v1168
    %1270 = vmatprep.subr.mxu0 0.0
    %1271 = vmatpush1.msra.mxu0 %v1167
    %1272 = vmatprep.subr.mxu0 0.0
    %1273 = vmatpush2.msra.mxu0 0.0
    %1274 = vmatprep.subr.mxu0 0.0
    %1275 = vmatpush2.msra.mxu0 0.0
    %1276 = vmatprep.subr.mxu0 0.0
    %1277 = vmatpush2.msra.mxu0 0.0
    %1278 = vmatprep.subr.mxu0 0.0
    %1279 = vmatpush2.msra.mxu0 0.0
    %1280 = vmatprep.subr.mxu0 0.0
    %1281 = vmatpush2.msra.mxu0 0.0
    %1282 = vmatprep.subr.mxu0 0.0
    %1283 = vmatpush2.msra.mxu0 0.0
    %1284 = vmatprep.subr.mxu0 0.0
    %1285 = vmatpush2.msra.mxu0 0.0
    %1286 = vmatprep.subr.mxu0 0.0
    %1287 = vmatpush2.msra.mxu0 0.0
    %1288 = vmatprep.subr.mxu0 0.0
    %1289 = vmatpush2.msra.mxu0 0.0
    %1290 = vmatprep.subr.mxu0 0.0
    %1291 = vmatpush2.msra.mxu0 0.0
    %1292 = vmatprep.subr.mxu0 0.0
    %1293 = vmatpush2.msra.mxu0 0.0
    %1294 = vmatprep.subr.mxu0 0.0
    %1295 = vmatpush2.msra.mxu0 0.0
    %1296 = vmatprep.subr.mxu0 0.0
    %1297 = vmatpush2.msra.mxu0 0.0
    %1298 = vmatprep.subr.mxu0 0.0
    %1299 = vmatpush2.msra.mxu0 0.0
    %1300 = vmatprep.subr.mxu0 0.0
    %1301 = vmatpush2.msra.mxu0 0.0
    %1302 = vmatprep.subr.mxu0 0.0
    %1303 = vmatpush2.msra.mxu0 0.0
    %1304 = vmatprep.mubr.f32.mxu0 0.0
    %1305 = vmatmul.mubr.f32.gmra.mxu0 %v1236
    %v1306 = vpop.f32.mrf.mxu0
    %v1307 = vadd.f32 %v1192, %v1306
    %v1308 = vpop.f32.mrf.mxu0
    %1309 = vmatprep.mubr.f32.mxu0 0.0
    %1310 = vmatmul.mubr.f32.gmra.mxu0 %v1238
    %v1311 = vpop.f32.mrf.mxu0
    %v1312 = vadd.f32 %v1192, %v1311
    %v1313 = vpop.f32.mrf.mxu0
    %1314 = vdwg.mxu0
    %v1315 = vmul.f32 %v1307, %v143
    %v1316 = vmul.f32 %v1312, %v143
    %v1319 = vcombine.high %v1315, %v1315
    %v1321 = vunpack.c.l.s4 1983009808
    %v1322 = vunpack.c.0.s8 %v1321
    %v1323 = vlaneseq
    %v1324 = vshrl.u32 %v1323, 7
    %v1325 = vsub.s32 %v1322, %v1324
    %v1326 = vrot.slane %v1315, %v1325
    %v1328 = vunpack.c.l.s4 1983009808
    %v1329 = vunpack.c.0.s8 %v1328
    %v1330 = vlaneseq
    %v1331 = vshrl.u32 %v1330, 7
    %v1332 = vsub.s32 %v1329, %v1331
    %v1333 = vrot.slane %v1319, %v1332
    %v1334 = vcombine.high %v1326, %v1326
    %v1335 = vcombine.high %v1333, %v1333
    %v1336 = vcombine.high %v1316, %v1316
    %v1338 = vunpack.c.l.s4 1983009808
    %v1339 = vunpack.c.0.s8 %v1338
    %v1340 = vlaneseq
    %v1341 = vshrl.u32 %v1340, 7
    %v1342 = vsub.s32 %v1339, %v1341
    %v1343 = vrot.slane %v1316, %v1342
    %v1345 = vunpack.c.l.s4 1983009808
    %v1346 = vunpack.c.0.s8 %v1345
    %v1347 = vlaneseq
    %v1348 = vshrl.u32 %v1347, 7
    %v1349 = vsub.s32 %v1346, %v1348
    %v1350 = vrot.slane %v1336, %v1349
    %v1351 = vcombine.high %v1343, %v1343
    %v1352 = vcombine.high %v1350, %v1350
    %1361 = vst [vmem:[#allocation2] sm:$0x3] %v1326
    %1362 = vst [vmem:[#allocation2 + $0x2] sm:$0x3] %v1334
    %1363 = vst [vmem:[#allocation2 + $0x4] sm:$0x3] %v1333
    %1364 = vst [vmem:[#allocation2 + $0x6] sm:$0x3] %v1335
    %1365 = vst [vmem:[#allocation2 + $0x8] sm:$0x3] %v1343
    %1366 = vst [vmem:[#allocation2 + $0xa] sm:$0x3] %v1351
    %1367 = vst [vmem:[#allocation2 + $0xc] sm:$0x3] %v1350
    %1368 = vst [vmem:[#allocation2 + $0xe] sm:$0x3] %v1352
    %s1369 = scalar_lea.vmem [#allocation7], 2
    %v1370 = vld [vmem:[%s1369] sm:$0x3]
    %s1371 = scalar_lea.vmem [#allocation9], 2
    %v1372 = vld [vmem:[%s1371] sm:$0x3]
    %v1373 = vld [vmem:[#allocation2] sm:$0x3]
    %v1375 = vsel %vm213, %v1370, 0
    %1377 = vmatprep.subr.mxu0 0.0
    %1378 = vmatpush1.msra.mxu0 0.0
    %1379 = vmatprep.subr.mxu0 0.0
    %1380 = vmatpush1.msra.mxu0 0.0
    %1381 = vmatprep.subr.mxu0 0.0
    %1382 = vmatpush1.msra.mxu0 0.0
    %1383 = vmatprep.subr.mxu0 0.0
    %1384 = vmatpush1.msra.mxu0 0.0
    %1385 = vmatprep.subr.mxu0 0.0
    %1386 = vmatpush1.msra.mxu0 0.0
    %1387 = vmatprep.subr.mxu0 0.0
    %1388 = vmatpush1.msra.mxu0 0.0
    %1389 = vmatprep.subr.mxu0 0.0
    %1390 = vmatpush1.msra.mxu0 0.0
    %1391 = vmatprep.subr.mxu0 0.0
    %1392 = vmatpush1.msra.mxu0 0.0
    %1393 = vmatprep.subr.mxu0 0.0
    %1394 = vmatpush1.msra.mxu0 0.0
    %1395 = vmatprep.subr.mxu0 0.0
    %1396 = vmatpush1.msra.mxu0 0.0
    %1397 = vmatprep.subr.mxu0 0.0
    %1398 = vmatpush1.msra.mxu0 0.0
    %1399 = vmatprep.subr.mxu0 0.0
    %1400 = vmatpush1.msra.mxu0 0.0
    %1401 = vmatprep.subr.mxu0 0.0
    %1402 = vmatpush1.msra.mxu0 %v1179
    %1403 = vmatprep.subr.mxu0 0.0
    %1404 = vmatpush1.msra.mxu0 %v1178
    %1405 = vmatprep.subr.mxu0 0.0
    %1406 = vmatpush1.msra.mxu0 %v1177
    %1407 = vmatprep.subr.mxu0 0.0
    %1408 = vmatpush1.msra.mxu0 %v1176
    %1409 = vmatprep.subr.mxu0 0.0
    %1410 = vmatpush2.msra.mxu0 0.0
    %1411 = vmatprep.subr.mxu0 0.0
    %1412 = vmatpush2.msra.mxu0 0.0
    %1413 = vmatprep.subr.mxu0 0.0
    %1414 = vmatpush2.msra.mxu0 0.0
    %1415 = vmatprep.subr.mxu0 0.0
    %1416 = vmatpush2.msra.mxu0 0.0
    %1417 = vmatprep.subr.mxu0 0.0
    %1418 = vmatpush2.msra.mxu0 0.0
    %1419 = vmatprep.subr.mxu0 0.0
    %1420 = vmatpush2.msra.mxu0 0.0
    %1421 = vmatprep.subr.mxu0 0.0
    %1422 = vmatpush2.msra.mxu0 0.0
    %1423 = vmatprep.subr.mxu0 0.0
    %1424 = vmatpush2.msra.mxu0 0.0
    %1425 = vmatprep.subr.mxu0 0.0
    %1426 = vmatpush2.msra.mxu0 0.0
    %1427 = vmatprep.subr.mxu0 0.0
    %1428 = vmatpush2.msra.mxu0 0.0
    %1429 = vmatprep.subr.mxu0 0.0
    %1430 = vmatpush2.msra.mxu0 0.0
    %1431 = vmatprep.subr.mxu0 0.0
    %1432 = vmatpush2.msra.mxu0 0.0
    %1433 = vmatprep.subr.mxu0 0.0
    %1434 = vmatpush2.msra.mxu0 0.0
    %1435 = vmatprep.subr.mxu0 0.0
    %1436 = vmatpush2.msra.mxu0 0.0
    %1437 = vmatprep.subr.mxu0 0.0
    %1438 = vmatpush2.msra.mxu0 0.0
    %1439 = vmatprep.subr.mxu0 0.0
    %1440 = vmatpush2.msra.mxu0 0.0
    %1441 = vmatprep.mubr.f32.mxu0 0.0
    %1442 = vmatmul.mubr.f32.gmra.mxu0 %v1375
    %v1443 = vpop.f32.mrf.mxu0
    %v1444 = vadd.f32 0.0, %v1443
    %v1445 = vpop.f32.mrf.mxu0
    %1446 = vdwg.mxu0
    %v1447 = vadd.f32 %v1373, %v1444
    %v1448 = vtanh.pop %v1447
    %v1449 = vadd.f32 %v1448, 1.0
    %v1450 = vmul.f32 %v1449, 0.5
    %1452 = vrot.lane.b32.xlu0 %v1372, 32
    %v1453 = vpop.permute.xlu0 %1452
    %v1455 = vmul.f32 %v1450, %v1453
    %1457 = vrot.lane.b32.xlu0 %v1448, 64
    %v1458 = vpop.permute.xlu0 %1457
    %v1460 = vmul.f32 %v1450, %v1458
    %1462 = vrot.lane.b32.xlu0 %v1460, 32
    %v1463 = vpop.permute.xlu0 %1462
    %v1465 = vadd.f32 %v1455, %v1463
    %v1466 = vtanh.pop %v1465
    %1468 = vrot.lane.b32.xlu0 %v1466, 64
    %v1469 = vpop.permute.xlu0 %1468
    %v1471 = vmul.f32 %v1450, %v1469
    %1473 = vrot.lane.b32.xlu0 %v1471, 32
    %v1474 = vpop.permute.xlu0 %1473
    %1476 = vst.msk [vmem:[#allocation3] sm:$0x3] %vm452, %v1474
    %v1477 = vld [vmem:[%s454] sm:$0x3]
    %v1478 = vsel %vm213, %v1474, 0
    %1480 = vmatprep.subr.mxu0 0.0
    %1481 = vmatpush1.msra.mxu0 0.0
    %1482 = vmatprep.subr.mxu0 0.0
    %1483 = vmatpush1.msra.mxu0 0.0
    %1484 = vmatprep.subr.mxu0 0.0
    %1485 = vmatpush1.msra.mxu0 0.0
    %1486 = vmatprep.subr.mxu0 0.0
    %1487 = vmatpush1.msra.mxu0 0.0
    %1488 = vmatprep.subr.mxu0 0.0
    %1489 = vmatpush1.msra.mxu0 0.0
    %1490 = vmatprep.subr.mxu0 0.0
    %1491 = vmatpush1.msra.mxu0 0.0
    %1492 = vmatprep.subr.mxu0 0.0
    %1493 = vmatpush1.msra.mxu0 0.0
    %1494 = vmatprep.subr.mxu0 0.0
    %1495 = vmatpush1.msra.mxu0 0.0
    %1496 = vmatprep.subr.mxu0 0.0
    %1497 = vmatpush1.msra.mxu0 0.0
    %1498 = vmatprep.subr.mxu0 0.0
    %1499 = vmatpush1.msra.mxu0 0.0
    %1500 = vmatprep.subr.mxu0 0.0
    %1501 = vmatpush1.msra.mxu0 0.0
    %1502 = vmatprep.subr.mxu0 0.0
    %1503 = vmatpush1.msra.mxu0 0.0
    %1504 = vmatprep.subr.mxu0 0.0
    %1505 = vmatpush1.msra.mxu0 %v1179
    %1506 = vmatprep.subr.mxu0 0.0
    %1507 = vmatpush1.msra.mxu0 %v1178
    %1508 = vmatprep.subr.mxu0 0.0
    %1509 = vmatpush1.msra.mxu0 %v1177
    %1510 = vmatprep.subr.mxu0 0.0
    %1511 = vmatpush1.msra.mxu0 %v1176
    %1512 = vmatprep.subr.mxu0 0.0
    %1513 = vmatpush2.msra.mxu0 0.0
    %1514 = vmatprep.subr.mxu0 0.0
    %1515 = vmatpush2.msra.mxu0 0.0
    %1516 = vmatprep.subr.mxu0 0.0
    %1517 = vmatpush2.msra.mxu0 0.0
    %1518 = vmatprep.subr.mxu0 0.0
    %1519 = vmatpush2.msra.mxu0 0.0
    %1520 = vmatprep.subr.mxu0 0.0
    %1521 = vmatpush2.msra.mxu0 0.0
    %1522 = vmatprep.subr.mxu0 0.0
    %1523 = vmatpush2.msra.mxu0 0.0
    %1524 = vmatprep.subr.mxu0 0.0
    %1525 = vmatpush2.msra.mxu0 0.0
    %1526 = vmatprep.subr.mxu0 0.0
    %1527 = vmatpush2.msra.mxu0 0.0
    %1528 = vmatprep.subr.mxu0 0.0
    %1529 = vmatpush2.msra.mxu0 0.0
    %1530 = vmatprep.subr.mxu0 0.0
    %1531 = vmatpush2.msra.mxu0 0.0
    %1532 = vmatprep.subr.mxu0 0.0
    %1533 = vmatpush2.msra.mxu0 0.0
    %1534 = vmatprep.subr.mxu0 0.0
    %1535 = vmatpush2.msra.mxu0 0.0
    %1536 = vmatprep.subr.mxu0 0.0
    %1537 = vmatpush2.msra.mxu0 0.0
    %1538 = vmatprep.subr.mxu0 0.0
    %1539 = vmatpush2.msra.mxu0 0.0
    %1540 = vmatprep.subr.mxu0 0.0
    %1541 = vmatpush2.msra.mxu0 0.0
    %1542 = vmatprep.subr.mxu0 0.0
    %1543 = vmatpush2.msra.mxu0 0.0
    %1544 = vmatprep.mubr.f32.mxu0 0.0
    %1545 = vmatmul.mubr.f32.gmra.mxu0 %v1478
    %v1546 = vpop.f32.mrf.mxu0
    %v1547 = vadd.f32 0.0, %v1546
    %v1548 = vpop.f32.mrf.mxu0
    %1549 = vdwg.mxu0
    %v1550 = vadd.f32 %v1477, %v1547
    %v1551 = vtanh.pop %v1550
    %v1552 = vadd.f32 %v1551, 1.0
    %v1553 = vmul.f32 %v1552, 0.5
    %v1554 = vmul.f32 %v1553, %v1465
    %1556 = vrot.lane.b32.xlu0 %v1551, 64
    %v1557 = vpop.permute.xlu0 %1556
    %v1559 = vmul.f32 %v1553, %v1557
    %1561 = vrot.lane.b32.xlu0 %v1559, 32
    %v1562 = vpop.permute.xlu0 %1561
    %v1564 = vadd.f32 %v1554, %v1562
    %v1565 = vtanh.pop %v1564
    %1567 = vrot.lane.b32.xlu0 %v1565, 64
    %v1568 = vpop.permute.xlu0 %1567
    %v1570 = vmul.f32 %v1553, %v1568
    %1572 = vrot.lane.b32.xlu0 %v1570, 32
    %v1573 = vpop.permute.xlu0 %1572
    %1575 = vst.msk [vmem:[%s553] sm:$0x3] %vm452, %v1573
    %v1576 = vld [vmem:[%s555] sm:$0x3]
    %v1577 = vsel %vm213, %v1573, 0
    %1579 = vmatprep.subr.mxu0 0.0
    %1580 = vmatpush1.msra.mxu0 0.0
    %1581 = vmatprep.subr.mxu0 0.0
    %1582 = vmatpush1.msra.mxu0 0.0
    %1583 = vmatprep.subr.mxu0 0.0
    %1584 = vmatpush1.msra.mxu0 0.0
    %1585 = vmatprep.subr.mxu0 0.0
    %1586 = vmatpush1.msra.mxu0 0.0
    %1587 = vmatprep.subr.mxu0 0.0
    %1588 = vmatpush1.msra.mxu0 0.0
    %1589 = vmatprep.subr.mxu0 0.0
    %1590 = vmatpush1.msra.mxu0 0.0
    %1591 = vmatprep.subr.mxu0 0.0
    %1592 = vmatpush1.msra.mxu0 0.0
    %1593 = vmatprep.subr.mxu0 0.0
    %1594 = vmatpush1.msra.mxu0 0.0
    %1595 = vmatprep.subr.mxu0 0.0
    %1596 = vmatpush1.msra.mxu0 0.0
    %1597 = vmatprep.subr.mxu0 0.0
    %1598 = vmatpush1.msra.mxu0 0.0
    %1599 = vmatprep.subr.mxu0 0.0
    %1600 = vmatpush1.msra.mxu0 0.0
    %1601 = vmatprep.subr.mxu0 0.0
    %1602 = vmatpush1.msra.mxu0 0.0
    %1603 = vmatprep.subr.mxu0 0.0
    %1604 = vmatpush1.msra.mxu0 %v1179
    %1605 = vmatprep.subr.mxu0 0.0
    %1606 = vmatpush1.msra.mxu0 %v1178
    %1607 = vmatprep.subr.mxu0 0.0
    %1608 = vmatpush1.msra.mxu0 %v1177
    %1609 = vmatprep.subr.mxu0 0.0
    %1610 = vmatpush1.msra.mxu0 %v1176
    %1611 = vmatprep.subr.mxu0 0.0
    %1612 = vmatpush2.msra.mxu0 0.0
    %1613 = vmatprep.subr.mxu0 0.0
    %1614 = vmatpush2.msra.mxu0 0.0
    %1615 = vmatprep.subr.mxu0 0.0
    %1616 = vmatpush2.msra.mxu0 0.0
    %1617 = vmatprep.subr.mxu0 0.0
    %1618 = vmatpush2.msra.mxu0 0.0
    %1619 = vmatprep.subr.mxu0 0.0
    %1620 = vmatpush2.msra.mxu0 0.0
    %1621 = vmatprep.subr.mxu0 0.0
    %1622 = vmatpush2.msra.mxu0 0.0
    %1623 = vmatprep.subr.mxu0 0.0
    %1624 = vmatpush2.msra.mxu0 0.0
    %1625 = vmatprep.subr.mxu0 0.0
    %1626 = vmatpush2.msra.mxu0 0.0
    %1627 = vmatprep.subr.mxu0 0.0
    %1628 = vmatpush2.msra.mxu0 0.0
    %1629 = vmatprep.subr.mxu0 0.0
    %1630 = vmatpush2.msra.mxu0 0.0
    %1631 = vmatprep.subr.mxu0 0.0
    %1632 = vmatpush2.msra.mxu0 0.0
    %1633 = vmatprep.subr.mxu0 0.0
    %1634 = vmatpush2.msra.mxu0 0.0
    %1635 = vmatprep.subr.mxu0 0.0
    %1636 = vmatpush2.msra.mxu0 0.0
    %1637 = vmatprep.subr.mxu0 0.0
    %1638 = vmatpush2.msra.mxu0 0.0
    %1639 = vmatprep.subr.mxu0 0.0
    %1640 = vmatpush2.msra.mxu0 0.0
    %1641 = vmatprep.subr.mxu0 0.0
    %1642 = vmatpush2.msra.mxu0 0.0
    %1643 = vmatprep.mubr.f32.mxu0 0.0
    %1644 = vmatmul.mubr.f32.gmra.mxu0 %v1577
    %v1645 = vpop.f32.mrf.mxu0
    %v1646 = vadd.f32 0.0, %v1645
    %v1647 = vpop.f32.mrf.mxu0
    %1648 = vdwg.mxu0
    %v1649 = vadd.f32 %v1576, %v1646
    %v1650 = vtanh.pop %v1649
    %v1651 = vadd.f32 %v1650, 1.0
    %v1652 = vmul.f32 %v1651, 0.5
    %v1653 = vmul.f32 %v1652, %v1564
    %1655 = vrot.lane.b32.xlu0 %v1650, 64
    %v1656 = vpop.permute.xlu0 %1655
    %v1658 = vmul.f32 %v1652, %v1656
    %1660 = vrot.lane.b32.xlu0 %v1658, 32
    %v1661 = vpop.permute.xlu0 %1660
    %v1663 = vadd.f32 %v1653, %v1661
    %v1664 = vtanh.pop %v1663
    %1666 = vrot.lane.b32.xlu0 %v1664, 64
    %v1667 = vpop.permute.xlu0 %1666
    %v1669 = vmul.f32 %v1652, %v1667
    %1671 = vrot.lane.b32.xlu0 %v1669, 32
    %v1672 = vpop.permute.xlu0 %1671
    %1674 = vst.msk [vmem:[%s654] sm:$0x3] %vm452, %v1672
    %v1675 = vld [vmem:[%s656] sm:$0x3]
    %v1676 = vsel %vm213, %v1672, 0
    %1678 = vmatprep.subr.mxu0 0.0
    %1679 = vmatpush1.msra.mxu0 0.0
    %1680 = vmatprep.subr.mxu0 0.0
    %1681 = vmatpush1.msra.mxu0 0.0
    %1682 = vmatprep.subr.mxu0 0.0
    %1683 = vmatpush1.msra.mxu0 0.0
    %1684 = vmatprep.subr.mxu0 0.0
    %1685 = vmatpush1.msra.mxu0 0.0
    %1686 = vmatprep.subr.mxu0 0.0
    %1687 = vmatpush1.msra.mxu0 0.0
    %1688 = vmatprep.subr.mxu0 0.0
    %1689 = vmatpush1.msra.mxu0 0.0
    %1690 = vmatprep.subr.mxu0 0.0
    %1691 = vmatpush1.msra.mxu0 0.0
    %1692 = vmatprep.subr.mxu0 0.0
    %1693 = vmatpush1.msra.mxu0 0.0
    %1694 = vmatprep.subr.mxu0 0.0
    %1695 = vmatpush1.msra.mxu0 0.0
    %1696 = vmatprep.subr.mxu0 0.0
    %1697 = vmatpush1.msra.mxu0 0.0
    %1698 = vmatprep.subr.mxu0 0.0
    %1699 = vmatpush1.msra.mxu0 0.0
    %1700 = vmatprep.subr.mxu0 0.0
    %1701 = vmatpush1.msra.mxu0 0.0
    %1702 = vmatprep.subr.mxu0 0.0
    %1703 = vmatpush1.msra.mxu0 %v1179
    %1704 = vmatprep.subr.mxu0 0.0
    %1705 = vmatpush1.msra.mxu0 %v1178
    %1706 = vmatprep.subr.mxu0 0.0
    %1707 = vmatpush1.msra.mxu0 %v1177
    %1708 = vmatprep.subr.mxu0 0.0
    %1709 = vmatpush1.msra.mxu0 %v1176
    %1710 = vmatprep.subr.mxu0 0.0
    %1711 = vmatpush2.msra.mxu0 0.0
    %1712 = vmatprep.subr.mxu0 0.0
    %1713 = vmatpush2.msra.mxu0 0.0
    %1714 = vmatprep.subr.mxu0 0.0
    %1715 = vmatpush2.msra.mxu0 0.0
    %1716 = vmatprep.subr.mxu0 0.0
    %1717 = vmatpush2.msra.mxu0 0.0
    %1718 = vmatprep.subr.mxu0 0.0
    %1719 = vmatpush2.msra.mxu0 0.0
    %1720 = vmatprep.subr.mxu0 0.0
    %1721 = vmatpush2.msra.mxu0 0.0
    %1722 = vmatprep.subr.mxu0 0.0
    %1723 = vmatpush2.msra.mxu0 0.0
    %1724 = vmatprep.subr.mxu0 0.0
    %1725 = vmatpush2.msra.mxu0 0.0
    %1726 = vmatprep.subr.mxu0 0.0
    %1727 = vmatpush2.msra.mxu0 0.0
    %1728 = vmatprep.subr.mxu0 0.0
    %1729 = vmatpush2.msra.mxu0 0.0
    %1730 = vmatprep.subr.mxu0 0.0
    %1731 = vmatpush2.msra.mxu0 0.0
    %1732 = vmatprep.subr.mxu0 0.0
    %1733 = vmatpush2.msra.mxu0 0.0
    %1734 = vmatprep.subr.mxu0 0.0
    %1735 = vmatpush2.msra.mxu0 0.0
    %1736 = vmatprep.subr.mxu0 0.0
    %1737 = vmatpush2.msra.mxu0 0.0
    %1738 = vmatprep.subr.mxu0 0.0
    %1739 = vmatpush2.msra.mxu0 0.0
    %1740 = vmatprep.subr.mxu0 0.0
    %1741 = vmatpush2.msra.mxu0 0.0
    %1742 = vmatprep.mubr.f32.mxu0 0.0
    %1743 = vmatmul.mubr.f32.gmra.mxu0 %v1676
    %v1744 = vpop.f32.mrf.mxu0
    %v1745 = vadd.f32 0.0, %v1744
    %v1746 = vpop.f32.mrf.mxu0
    %1747 = vdwg.mxu0
    %v1748 = vadd.f32 %v1675, %v1745
    %v1749 = vtanh.pop %v1748
    %v1750 = vadd.f32 %v1749, 1.0
    %v1751 = vmul.f32 %v1750, 0.5
    %v1752 = vmul.f32 %v1751, %v1663
    %1754 = vrot.lane.b32.xlu0 %v1749, 64
    %v1755 = vpop.permute.xlu0 %1754
    %v1757 = vmul.f32 %v1751, %v1755
    %1759 = vrot.lane.b32.xlu0 %v1757, 32
    %v1760 = vpop.permute.xlu0 %1759
    %v1762 = vadd.f32 %v1752, %v1760
    %v1763 = vtanh.pop %v1762
    %1765 = vrot.lane.b32.xlu0 %v1763, 64
    %v1766 = vpop.permute.xlu0 %1765
    %v1768 = vmul.f32 %v1751, %v1766
    %1770 = vrot.lane.b32.xlu0 %v1768, 32
    %v1771 = vpop.permute.xlu0 %1770
    %1773 = vst.msk [vmem:[%s755] sm:$0x3] %vm452, %v1771
    %v1774 = vld [vmem:[%s757] sm:$0x3]
    %v1775 = vsel %vm213, %v1771, 0
    %1777 = vmatprep.subr.mxu0 0.0
    %1778 = vmatpush1.msra.mxu0 0.0
    %1779 = vmatprep.subr.mxu0 0.0
    %1780 = vmatpush1.msra.mxu0 0.0
    %1781 = vmatprep.subr.mxu0 0.0
    %1782 = vmatpush1.msra.mxu0 0.0
    %1783 = vmatprep.subr.mxu0 0.0
    %1784 = vmatpush1.msra.mxu0 0.0
    %1785 = vmatprep.subr.mxu0 0.0
    %1786 = vmatpush1.msra.mxu0 0.0
    %1787 = vmatprep.subr.mxu0 0.0
    %1788 = vmatpush1.msra.mxu0 0.0
    %1789 = vmatprep.subr.mxu0 0.0
    %1790 = vmatpush1.msra.mxu0 0.0
    %1791 = vmatprep.subr.mxu0 0.0
    %1792 = vmatpush1.msra.mxu0 0.0
    %1793 = vmatprep.subr.mxu0 0.0
    %1794 = vmatpush1.msra.mxu0 0.0
    %1795 = vmatprep.subr.mxu0 0.0
    %1796 = vmatpush1.msra.mxu0 0.0
    %1797 = vmatprep.subr.mxu0 0.0
    %1798 = vmatpush1.msra.mxu0 0.0
    %1799 = vmatprep.subr.mxu0 0.0
    %1800 = vmatpush1.msra.mxu0 0.0
    %1801 = vmatprep.subr.mxu0 0.0
    %1802 = vmatpush1.msra.mxu0 %v1179
    %1803 = vmatprep.subr.mxu0 0.0
    %1804 = vmatpush1.msra.mxu0 %v1178
    %1805 = vmatprep.subr.mxu0 0.0
    %1806 = vmatpush1.msra.mxu0 %v1177
    %1807 = vmatprep.subr.mxu0 0.0
    %1808 = vmatpush1.msra.mxu0 %v1176
    %1809 = vmatprep.subr.mxu0 0.0
    %1810 = vmatpush2.msra.mxu0 0.0
    %1811 = vmatprep.subr.mxu0 0.0
    %1812 = vmatpush2.msra.mxu0 0.0
    %1813 = vmatprep.subr.mxu0 0.0
    %1814 = vmatpush2.msra.mxu0 0.0
    %1815 = vmatprep.subr.mxu0 0.0
    %1816 = vmatpush2.msra.mxu0 0.0
    %1817 = vmatprep.subr.mxu0 0.0
    %1818 = vmatpush2.msra.mxu0 0.0
    %1819 = vmatprep.subr.mxu0 0.0
    %1820 = vmatpush2.msra.mxu0 0.0
    %1821 = vmatprep.subr.mxu0 0.0
    %1822 = vmatpush2.msra.mxu0 0.0
    %1823 = vmatprep.subr.mxu0 0.0
    %1824 = vmatpush2.msra.mxu0 0.0
    %1825 = vmatprep.subr.mxu0 0.0
    %1826 = vmatpush2.msra.mxu0 0.0
    %1827 = vmatprep.subr.mxu0 0.0
    %1828 = vmatpush2.msra.mxu0 0.0
    %1829 = vmatprep.subr.mxu0 0.0
    %1830 = vmatpush2.msra.mxu0 0.0
    %1831 = vmatprep.subr.mxu0 0.0
    %1832 = vmatpush2.msra.mxu0 0.0
    %1833 = vmatprep.subr.mxu0 0.0
    %1834 = vmatpush2.msra.mxu0 0.0
    %1835 = vmatprep.subr.mxu0 0.0
    %1836 = vmatpush2.msra.mxu0 0.0
    %1837 = vmatprep.subr.mxu0 0.0
    %1838 = vmatpush2.msra.mxu0 0.0
    %1839 = vmatprep.subr.mxu0 0.0
    %1840 = vmatpush2.msra.mxu0 0.0
    %1841 = vmatprep.mubr.f32.mxu0 0.0
    %1842 = vmatmul.mubr.f32.gmra.mxu0 %v1775
    %v1843 = vpop.f32.mrf.mxu0
    %v1844 = vadd.f32 0.0, %v1843
    %v1845 = vpop.f32.mrf.mxu0
    %1846 = vdwg.mxu0
    %v1847 = vadd.f32 %v1774, %v1844
    %v1848 = vtanh.pop %v1847
    %v1849 = vadd.f32 %v1848, 1.0
    %v1850 = vmul.f32 %v1849, 0.5
    %v1851 = vmul.f32 %v1850, %v1762
    %1853 = vrot.lane.b32.xlu0 %v1848, 64
    %v1854 = vpop.permute.xlu0 %1853
    %v1856 = vmul.f32 %v1850, %v1854
    %1858 = vrot.lane.b32.xlu0 %v1856, 32
    %v1859 = vpop.permute.xlu0 %1858
    %v1861 = vadd.f32 %v1851, %v1859
    %v1862 = vtanh.pop %v1861
    %1864 = vrot.lane.b32.xlu0 %v1862, 64
    %v1865 = vpop.permute.xlu0 %1864
    %v1867 = vmul.f32 %v1850, %v1865
    %1869 = vrot.lane.b32.xlu0 %v1867, 32
    %v1870 = vpop.permute.xlu0 %1869
    %1872 = vst.msk [vmem:[%s856] sm:$0x3] %vm452, %v1870
    %v1873 = vld [vmem:[%s858] sm:$0x3]
    %v1874 = vsel %vm213, %v1870, 0
    %1876 = vmatprep.subr.mxu0 0.0
    %1877 = vmatpush1.msra.mxu0 0.0
    %1878 = vmatprep.subr.mxu0 0.0
    %1879 = vmatpush1.msra.mxu0 0.0
    %1880 = vmatprep.subr.mxu0 0.0
    %1881 = vmatpush1.msra.mxu0 0.0
    %1882 = vmatprep.subr.mxu0 0.0
    %1883 = vmatpush1.msra.mxu0 0.0
    %1884 = vmatprep.subr.mxu0 0.0
    %1885 = vmatpush1.msra.mxu0 0.0
    %1886 = vmatprep.subr.mxu0 0.0
    %1887 = vmatpush1.msra.mxu0 0.0
    %1888 = vmatprep.subr.mxu0 0.0
    %1889 = vmatpush1.msra.mxu0 0.0
    %1890 = vmatprep.subr.mxu0 0.0
    %1891 = vmatpush1.msra.mxu0 0.0
    %1892 = vmatprep.subr.mxu0 0.0
    %1893 = vmatpush1.msra.mxu0 0.0
    %1894 = vmatprep.subr.mxu0 0.0
    %1895 = vmatpush1.msra.mxu0 0.0
    %1896 = vmatprep.subr.mxu0 0.0
    %1897 = vmatpush1.msra.mxu0 0.0
    %1898 = vmatprep.subr.mxu0 0.0
    %1899 = vmatpush1.msra.mxu0 0.0
    %1900 = vmatprep.subr.mxu0 0.0
    %1901 = vmatpush1.msra.mxu0 %v1179
    %1902 = vmatprep.subr.mxu0 0.0
    %1903 = vmatpush1.msra.mxu0 %v1178
    %1904 = vmatprep.subr.mxu0 0.0
    %1905 = vmatpush1.msra.mxu0 %v1177
    %1906 = vmatprep.subr.mxu0 0.0
    %1907 = vmatpush1.msra.mxu0 %v1176
    %1908 = vmatprep.subr.mxu0 0.0
    %1909 = vmatpush2.msra.mxu0 0.0
    %1910 = vmatprep.subr.mxu0 0.0
    %1911 = vmatpush2.msra.mxu0 0.0
    %1912 = vmatprep.subr.mxu0 0.0
    %1913 = vmatpush2.msra.mxu0 0.0
    %1914 = vmatprep.subr.mxu0 0.0
    %1915 = vmatpush2.msra.mxu0 0.0
    %1916 = vmatprep.subr.mxu0 0.0
    %1917 = vmatpush2.msra.mxu0 0.0
    %1918 = vmatprep.subr.mxu0 0.0
    %1919 = vmatpush2.msra.mxu0 0.0
    %1920 = vmatprep.subr.mxu0 0.0
    %1921 = vmatpush2.msra.mxu0 0.0
    %1922 = vmatprep.subr.mxu0 0.0
    %1923 = vmatpush2.msra.mxu0 0.0
    %1924 = vmatprep.subr.mxu0 0.0
    %1925 = vmatpush2.msra.mxu0 0.0
    %1926 = vmatprep.subr.mxu0 0.0
    %1927 = vmatpush2.msra.mxu0 0.0
    %1928 = vmatprep.subr.mxu0 0.0
    %1929 = vmatpush2.msra.mxu0 0.0
    %1930 = vmatprep.subr.mxu0 0.0
    %1931 = vmatpush2.msra.mxu0 0.0
    %1932 = vmatprep.subr.mxu0 0.0
    %1933 = vmatpush2.msra.mxu0 0.0
    %1934 = vmatprep.subr.mxu0 0.0
    %1935 = vmatpush2.msra.mxu0 0.0
    %1936 = vmatprep.subr.mxu0 0.0
    %1937 = vmatpush2.msra.mxu0 0.0
    %1938 = vmatprep.subr.mxu0 0.0
    %1939 = vmatpush2.msra.mxu0 0.0
    %1940 = vmatprep.mubr.f32.mxu0 0.0
    %1941 = vmatmul.mubr.f32.gmra.mxu0 %v1874
    %v1942 = vpop.f32.mrf.mxu0
    %v1943 = vadd.f32 0.0, %v1942
    %v1944 = vpop.f32.mrf.mxu0
    %1945 = vdwg.mxu0
    %v1946 = vadd.f32 %v1873, %v1943
    %v1947 = vtanh.pop %v1946
    %v1948 = vadd.f32 %v1947, 1.0
    %v1949 = vmul.f32 %v1948, 0.5
    %v1950 = vmul.f32 %v1949, %v1861
    %1952 = vrot.lane.b32.xlu0 %v1947, 64
    %v1953 = vpop.permute.xlu0 %1952
    %v1955 = vmul.f32 %v1949, %v1953
    %1957 = vrot.lane.b32.xlu0 %v1955, 32
    %v1958 = vpop.permute.xlu0 %1957
    %v1960 = vadd.f32 %v1950, %v1958
    %v1961 = vtanh.pop %v1960
    %1963 = vrot.lane.b32.xlu0 %v1961, 64
    %v1964 = vpop.permute.xlu0 %1963
    %v1966 = vmul.f32 %v1949, %v1964
    %1968 = vrot.lane.b32.xlu0 %v1966, 32
    %v1969 = vpop.permute.xlu0 %1968
    %1971 = vst.msk [vmem:[%s957] sm:$0x3] %vm452, %v1969
    %v1972 = vld [vmem:[%s959] sm:$0x3]
    %v1973 = vsel %vm213, %v1969, 0
    %1975 = vmatprep.subr.mxu0 0.0
    %1976 = vmatpush1.msra.mxu0 0.0
    %1977 = vmatprep.subr.mxu0 0.0
    %1978 = vmatpush1.msra.mxu0 0.0
    %1979 = vmatprep.subr.mxu0 0.0
    %1980 = vmatpush1.msra.mxu0 0.0
    %1981 = vmatprep.subr.mxu0 0.0
    %1982 = vmatpush1.msra.mxu0 0.0
    %1983 = vmatprep.subr.mxu0 0.0
    %1984 = vmatpush1.msra.mxu0 0.0
    %1985 = vmatprep.subr.mxu0 0.0
    %1986 = vmatpush1.msra.mxu0 0.0
    %1987 = vmatprep.subr.mxu0 0.0
    %1988 = vmatpush1.msra.mxu0 0.0
    %1989 = vmatprep.subr.mxu0 0.0
    %1990 = vmatpush1.msra.mxu0 0.0
    %1991 = vmatprep.subr.mxu0 0.0
    %1992 = vmatpush1.msra.mxu0 0.0
    %1993 = vmatprep.subr.mxu0 0.0
    %1994 = vmatpush1.msra.mxu0 0.0
    %1995 = vmatprep.subr.mxu0 0.0
    %1996 = vmatpush1.msra.mxu0 0.0
    %1997 = vmatprep.subr.mxu0 0.0
    %1998 = vmatpush1.msra.mxu0 0.0
    %1999 = vmatprep.subr.mxu0 0.0
    %2000 = vmatpush1.msra.mxu0 %v1179
    %2001 = vmatprep.subr.mxu0 0.0
    %2002 = vmatpush1.msra.mxu0 %v1178
    %2003 = vmatprep.subr.mxu0 0.0
    %2004 = vmatpush1.msra.mxu0 %v1177
    %2005 = vmatprep.subr.mxu0 0.0
    %2006 = vmatpush1.msra.mxu0 %v1176
    %2007 = vmatprep.subr.mxu0 0.0
    %2008 = vmatpush2.msra.mxu0 0.0
    %2009 = vmatprep.subr.mxu0 0.0
    %2010 = vmatpush2.msra.mxu0 0.0
    %2011 = vmatprep.subr.mxu0 0.0
    %2012 = vmatpush2.msra.mxu0 0.0
    %2013 = vmatprep.subr.mxu0 0.0
    %2014 = vmatpush2.msra.mxu0 0.0
    %2015 = vmatprep.subr.mxu0 0.0
    %2016 = vmatpush2.msra.mxu0 0.0
    %2017 = vmatprep.subr.mxu0 0.0
    %2018 = vmatpush2.msra.mxu0 0.0
    %2019 = vmatprep.subr.mxu0 0.0
    %2020 = vmatpush2.msra.mxu0 0.0
    %2021 = vmatprep.subr.mxu0 0.0
    %2022 = vmatpush2.msra.mxu0 0.0
    %2023 = vmatprep.subr.mxu0 0.0
    %2024 = vmatpush2.msra.mxu0 0.0
    %2025 = vmatprep.subr.mxu0 0.0
    %2026 = vmatpush2.msra.mxu0 0.0
    %2027 = vmatprep.subr.mxu0 0.0
    %2028 = vmatpush2.msra.mxu0 0.0
    %2029 = vmatprep.subr.mxu0 0.0
    %2030 = vmatpush2.msra.mxu0 0.0
    %2031 = vmatprep.subr.mxu0 0.0
    %2032 = vmatpush2.msra.mxu0 0.0
    %2033 = vmatprep.subr.mxu0 0.0
    %2034 = vmatpush2.msra.mxu0 0.0
    %2035 = vmatprep.subr.mxu0 0.0
    %2036 = vmatpush2.msra.mxu0 0.0
    %2037 = vmatprep.subr.mxu0 0.0
    %2038 = vmatpush2.msra.mxu0 0.0
    %2039 = vmatprep.mubr.f32.mxu0 0.0
    %2040 = vmatmul.mubr.f32.gmra.mxu0 %v1973
    %v2041 = vpop.f32.mrf.mxu0
    %v2042 = vadd.f32 0.0, %v2041
    %v2043 = vpop.f32.mrf.mxu0
    %2044 = vdwg.mxu0
    %v2045 = vadd.f32 %v1972, %v2042
    %v2046 = vtanh.pop %v2045
    %v2047 = vadd.f32 %v2046, 1.0
    %v2048 = vmul.f32 %v2047, 0.5
    %v2049 = vmul.f32 %v2048, %v1960
    %2051 = vrot.lane.b32.xlu0 %v2046, 64
    %v2052 = vpop.permute.xlu0 %2051
    %v2054 = vmul.f32 %v2048, %v2052
    %2056 = vrot.lane.b32.xlu0 %v2054, 32
    %v2057 = vpop.permute.xlu0 %2056
    %v2059 = vadd.f32 %v2049, %v2057
    %v2060 = vtanh.pop %v2059
    %2062 = vrot.lane.b32.xlu0 %v2060, 64
    %v2063 = vpop.permute.xlu0 %2062
    %v2065 = vmul.f32 %v2048, %v2063
    %2067 = vrot.lane.b32.xlu0 %v2065, 32
    %v2068 = vpop.permute.xlu0 %2067
    %2070 = vst.msk [vmem:[%s1058] sm:$0x3] %vm452, %v2068
    %v2071 = vld [vmem:[%s1060] sm:$0x3]
    %v2072 = vsel %vm213, %v2068, 0
    %2074 = vmatprep.subr.mxu0 0.0
    %2075 = vmatpush1.msra.mxu0 0.0
    %2076 = vmatprep.subr.mxu0 0.0
    %2077 = vmatpush1.msra.mxu0 0.0
    %2078 = vmatprep.subr.mxu0 0.0
    %2079 = vmatpush1.msra.mxu0 0.0
    %2080 = vmatprep.subr.mxu0 0.0
    %2081 = vmatpush1.msra.mxu0 0.0
    %2082 = vmatprep.subr.mxu0 0.0
    %2083 = vmatpush1.msra.mxu0 0.0
    %2084 = vmatprep.subr.mxu0 0.0
    %2085 = vmatpush1.msra.mxu0 0.0
    %2086 = vmatprep.subr.mxu0 0.0
    %2087 = vmatpush1.msra.mxu0 0.0
    %2088 = vmatprep.subr.mxu0 0.0
    %2089 = vmatpush1.msra.mxu0 0.0
    %2090 = vmatprep.subr.mxu0 0.0
    %2091 = vmatpush1.msra.mxu0 0.0
    %2092 = vmatprep.subr.mxu0 0.0
    %2093 = vmatpush1.msra.mxu0 0.0
    %2094 = vmatprep.subr.mxu0 0.0
    %2095 = vmatpush1.msra.mxu0 0.0
    %2096 = vmatprep.subr.mxu0 0.0
    %2097 = vmatpush1.msra.mxu0 0.0
    %2098 = vmatprep.subr.mxu0 0.0
    %2099 = vmatpush1.msra.mxu0 %v1179
    %2100 = vmatprep.subr.mxu0 0.0
    %2101 = vmatpush1.msra.mxu0 %v1178
    %2102 = vmatprep.subr.mxu0 0.0
    %2103 = vmatpush1.msra.mxu0 %v1177
    %2104 = vmatprep.subr.mxu0 0.0
    %2105 = vmatpush1.msra.mxu0 %v1176
    %2106 = vmatprep.subr.mxu0 0.0
    %2107 = vmatpush2.msra.mxu0 0.0
    %2108 = vmatprep.subr.mxu0 0.0
    %2109 = vmatpush2.msra.mxu0 0.0
    %2110 = vmatprep.subr.mxu0 0.0
    %2111 = vmatpush2.msra.mxu0 0.0
    %2112 = vmatprep.subr.mxu0 0.0
    %2113 = vmatpush2.msra.mxu0 0.0
    %2114 = vmatprep.subr.mxu0 0.0
    %2115 = vmatpush2.msra.mxu0 0.0
    %2116 = vmatprep.subr.mxu0 0.0
    %2117 = vmatpush2.msra.mxu0 0.0
    %2118 = vmatprep.subr.mxu0 0.0
    %2119 = vmatpush2.msra.mxu0 0.0
    %2120 = vmatprep.subr.mxu0 0.0
    %2121 = vmatpush2.msra.mxu0 0.0
    %2122 = vmatprep.subr.mxu0 0.0
    %2123 = vmatpush2.msra.mxu0 0.0
    %2124 = vmatprep.subr.mxu0 0.0
    %2125 = vmatpush2.msra.mxu0 0.0
    %2126 = vmatprep.subr.mxu0 0.0
    %2127 = vmatpush2.msra.mxu0 0.0
    %2128 = vmatprep.subr.mxu0 0.0
    %2129 = vmatpush2.msra.mxu0 0.0
    %2130 = vmatprep.subr.mxu0 0.0
    %2131 = vmatpush2.msra.mxu0 0.0
    %2132 = vmatprep.subr.mxu0 0.0
    %2133 = vmatpush2.msra.mxu0 0.0
    %2134 = vmatprep.subr.mxu0 0.0
    %2135 = vmatpush2.msra.mxu0 0.0
    %2136 = vmatprep.subr.mxu0 0.0
    %2137 = vmatpush2.msra.mxu0 0.0
    %2138 = vmatprep.mubr.f32.mxu0 0.0
    %2139 = vmatmul.mubr.f32.gmra.mxu0 %v2072
    %v2140 = vpop.f32.mrf.mxu0
    %v2141 = vadd.f32 0.0, %v2140
    %v2142 = vpop.f32.mrf.mxu0
    %2143 = vdwg.mxu0
    %v2144 = vadd.f32 %v2071, %v2141
    %v2145 = vtanh.pop %v2144
    %v2146 = vadd.f32 %v2145, 1.0
    %v2147 = vmul.f32 %v2146, 0.5
    %v2148 = vmul.f32 %v2147, %v2059
    %2150 = vrot.lane.b32.xlu0 %v2145, 64
    %v2151 = vpop.permute.xlu0 %2150
    %v2153 = vmul.f32 %v2147, %v2151
    %2155 = vrot.lane.b32.xlu0 %v2153, 32
    %v2156 = vpop.permute.xlu0 %2155
    %v2158 = vadd.f32 %v2148, %v2156
    %v2159 = vtanh.pop %v2158
    %2161 = vrot.lane.b32.xlu0 %v2159, 64
    %v2162 = vpop.permute.xlu0 %2161
    %v2164 = vmul.f32 %v2147, %v2162
    %2166 = vrot.lane.b32.xlu0 %v2164, 32
    %v2167 = vpop.permute.xlu0 %2166
    %2169 = vst.msk [vmem:[%s1159] sm:$0x3] %vm452, %v2167
    %s2170 = scalar_lea.vmem [#allocation17], 2
    %2171 = vst.msk [vmem:[%s2170] sm:$0x3] %vm452, %v2167
    %2173 = vrot.lane.b32.xlu0 %v2158, 96
    %v2174 = vpop.permute.xlu0 %2173
    %s2176 = scalar_lea.vmem [#allocation19], 2
    %2177 = vst.msk [vmem:[%s2176] sm:$0x3] %vm452, %v2174
    %v2178 = vld [vmem:[#allocation3] sm:$0x3]
    %v2179 = vld [vmem:[#allocation3 + $0x2] sm:$0x3]
    %v2180 = vld [vmem:[#allocation3 + $0x4] sm:$0x3]
    %v2181 = vld [vmem:[#allocation3 + $0x6] sm:$0x3]
    %v2182 = vld [vmem:[#allocation3 + $0x8] sm:$0x3]
    %v2183 = vld [vmem:[#allocation3 + $0xa] sm:$0x3]
    %v2184 = vld [vmem:[#allocation3 + $0xc] sm:$0x3]
    %v2185 = vld [vmem:[#allocation3 + $0xe] sm:$0x3]
    %v2186 = vsel %vm452, %v2178, 0.0
    %2187 = vadd.xlane.f32.xlu0 %v2186
    %v2188 = vpop.xlane.xlu0 %2187
    %v2189 = vsel %vm452, %v2179, 0.0
    %2190 = vadd.xlane.f32.xlu0 %v2189
    %v2191 = vpop.xlane.xlu0 %2190
    %v2192 = vsel %vm452, %v2180, 0.0
    %2193 = vadd.xlane.f32.xlu0 %v2192
    %v2194 = vpop.xlane.xlu0 %2193
    %v2195 = vsel %vm452, %v2181, 0.0
    %2196 = vadd.xlane.f32.xlu0 %v2195
    %v2197 = vpop.xlane.xlu0 %2196
    %v2198 = vsel %vm452, %v2182, 0.0
    %2199 = vadd.xlane.f32.xlu0 %v2198
    %v2200 = vpop.xlane.xlu0 %2199
    %v2201 = vsel %vm452, %v2183, 0.0
    %2202 = vadd.xlane.f32.xlu0 %v2201
    %v2203 = vpop.xlane.xlu0 %2202
    %v2204 = vsel %vm452, %v2184, 0.0
    %2205 = vadd.xlane.f32.xlu0 %v2204
    %v2206 = vpop.xlane.xlu0 %2205
    %v2207 = vsel %vm452, %v2185, 0.0
    %2208 = vadd.xlane.f32.xlu0 %v2207
    %v2209 = vpop.xlane.xlu0 %2208
    %v2210 = vrcp.pop 32.0
    %v2211 = vmul.f32 %v2188, %v2210
    %v2212 = vmul.f32 %v2191, %v2210
    %v2213 = vmul.f32 %v2194, %v2210
    %v2214 = vmul.f32 %v2197, %v2210
    %v2215 = vmul.f32 %v2200, %v2210
    %v2216 = vmul.f32 %v2203, %v2210
    %v2217 = vmul.f32 %v2206, %v2210
    %v2218 = vmul.f32 %v2209, %v2210
    %v2219 = vsub.f32 %v2178, %v2211
    %v2220 = vsub.f32 %v2179, %v2212
    %v2221 = vsub.f32 %v2180, %v2213
    %v2222 = vsub.f32 %v2181, %v2214
    %v2223 = vsub.f32 %v2182, %v2215
    %v2224 = vsub.f32 %v2183, %v2216
    %v2225 = vsub.f32 %v2184, %v2217
    %v2226 = vsub.f32 %v2185, %v2218
    %v2227 = vmul.f32 %v2219, %v2219
    %v2228 = vmul.f32 %v2220, %v2220
    %v2229 = vmul.f32 %v2221, %v2221
    %v2230 = vmul.f32 %v2222, %v2222
    %v2231 = vmul.f32 %v2223, %v2223
    %v2232 = vmul.f32 %v2224, %v2224
    %v2233 = vmul.f32 %v2225, %v2225
    %v2234 = vmul.f32 %v2226, %v2226
    %v2235 = vsel %vm452, %v2227, 0.0
    %2236 = vadd.xlane.f32.xlu0 %v2235
    %v2237 = vpop.xlane.xlu0 %2236
    %v2238 = vsel %vm452, %v2228, 0.0
    %2239 = vadd.xlane.f32.xlu0 %v2238
    %v2240 = vpop.xlane.xlu0 %2239
    %v2241 = vsel %vm452, %v2229, 0.0
    %2242 = vadd.xlane.f32.xlu0 %v2241
    %v2243 = vpop.xlane.xlu0 %2242
    %v2244 = vsel %vm452, %v2230, 0.0
    %2245 = vadd.xlane.f32.xlu0 %v2244
    %v2246 = vpop.xlane.xlu0 %2245
    %v2247 = vsel %vm452, %v2231, 0.0
    %2248 = vadd.xlane.f32.xlu0 %v2247
    %v2249 = vpop.xlane.xlu0 %2248
    %v2250 = vsel %vm452, %v2232, 0.0
    %2251 = vadd.xlane.f32.xlu0 %v2250
    %v2252 = vpop.xlane.xlu0 %2251
    %v2253 = vsel %vm452, %v2233, 0.0
    %2254 = vadd.xlane.f32.xlu0 %v2253
    %v2255 = vpop.xlane.xlu0 %2254
    %v2256 = vsel %vm452, %v2234, 0.0
    %2257 = vadd.xlane.f32.xlu0 %v2256
    %v2258 = vpop.xlane.xlu0 %2257
    %v2259 = vmul.f32 %v2237, %v2210
    %v2260 = vmul.f32 %v2240, %v2210
    %v2261 = vmul.f32 %v2243, %v2210
    %v2262 = vmul.f32 %v2246, %v2210
    %v2263 = vmul.f32 %v2249, %v2210
    %v2264 = vmul.f32 %v2252, %v2210
    %v2265 = vmul.f32 %v2255, %v2210
    %v2266 = vmul.f32 %v2258, %v2210
    %v2267 = vadd.f32 %v2259, 1e-05
    %v2268 = vadd.f32 %v2260, 1e-05
    %v2269 = vadd.f32 %v2261, 1e-05
    %v2270 = vadd.f32 %v2262, 1e-05
    %v2271 = vadd.f32 %v2263, 1e-05
    %v2272 = vadd.f32 %v2264, 1e-05
    %v2273 = vadd.f32 %v2265, 1e-05
    %v2274 = vadd.f32 %v2266, 1e-05
    %v2275 = vrsqrt.pop %v2267
    %v2276 = vrsqrt.pop %v2268
    %v2277 = vrsqrt.pop %v2269
    %v2278 = vrsqrt.pop %v2270
    %v2279 = vrsqrt.pop %v2271
    %v2280 = vrsqrt.pop %v2272
    %v2281 = vrsqrt.pop %v2273
    %v2282 = vrsqrt.pop %v2274
    %v2283 = vmul.f32 %v2219, %v2275
    %v2284 = vmul.f32 %v2220, %v2276
    %v2285 = vmul.f32 %v2221, %v2277
    %v2286 = vmul.f32 %v2222, %v2278
    %v2287 = vmul.f32 %v2223, %v2279
    %v2288 = vmul.f32 %v2224, %v2280
    %v2289 = vmul.f32 %v2225, %v2281
    %v2290 = vmul.f32 %v2226, %v2282
    %v2291 = vld [vmem:[%s9] sm:$0x1]
    %v2293 = vlaneseq
    %v2294 = vshrl.u32 %v2293, 7
    %v2295 = vsub.s32 0, %v2294
    %v2296 = vrot.slane %v2291, %v2295
    %v2298 = vmul.f32 %v2283, %v2296
    %v2299 = vmul.f32 %v2284, %v2296
    %v2300 = vmul.f32 %v2285, %v2296
    %v2301 = vmul.f32 %v2286, %v2296
    %v2302 = vmul.f32 %v2287, %v2296
    %v2303 = vmul.f32 %v2288, %v2296
    %v2304 = vmul.f32 %v2289, %v2296
    %v2305 = vmul.f32 %v2290, %v2296
    %v2306 = vld [vmem:[%s10] sm:$0x1]
    %v2308 = vlaneseq
    %v2309 = vshrl.u32 %v2308, 7
    %v2310 = vsub.s32 0, %v2309
    %v2311 = vrot.slane %v2306, %v2310
    %v2313 = vadd.f32 %v2298, %v2311
    %v2314 = vadd.f32 %v2299, %v2311
    %v2315 = vadd.f32 %v2300, %v2311
    %v2316 = vadd.f32 %v2301, %v2311
    %v2317 = vadd.f32 %v2302, %v2311
    %v2318 = vadd.f32 %v2303, %v2311
    %v2319 = vadd.f32 %v2304, %v2311
    %v2320 = vadd.f32 %v2305, %v2311
    %2321 = vst.msk [vmem:[#allocation16] sm:$0x3] %vm452, %v2313
    %2322 = vst.msk [vmem:[#allocation16 + $0x2] sm:$0x3] %vm452, %v2314
    %2323 = vst.msk [vmem:[#allocation16 + $0x4] sm:$0x3] %vm452, %v2315
    %2324 = vst.msk [vmem:[#allocation16 + $0x6] sm:$0x3] %vm452, %v2316
    %2325 = vst.msk [vmem:[#allocation16 + $0x8] sm:$0x3] %vm452, %v2317
    %2326 = vst.msk [vmem:[#allocation16 + $0xa] sm:$0x3] %vm452, %v2318
    %2327 = vst.msk [vmem:[#allocation16 + $0xc] sm:$0x3] %vm452, %v2319
    %2328 = vst.msk [vmem:[#allocation16 + $0xe] sm:$0x3] %vm452, %v2320
    // Predicated region
    $region74: #{tpu_custom_call.1} parent=1 // pred_check
      _
    $region75: #{tpu_custom_call.1} parent=1 // pred_check_branch
      %2330 = sbr.rel (0) target = $region77
    $region76: #{tpu_custom_call.1} parent=1 // pred_region
      %s2332 = ssub.s32 256, 256
      %2333 = vsyncadd [#allocation6], %s2332
      %s2334 = sshll.u32 [#allocation16], 4
      %s2335 = int_to_ptr.vmem [resolvable:$true] %s2334
      %2340 = dma.vmem_to_hbm [thread:$0]  %s2335, 256, %s11, [#allocation6], 32, 32, 2
    $region77: #{tpu_custom_call.1} parent=1 // pred_fallthru
      _
    // Predicated region
    $region78: #{tpu_custom_call.1} parent=1 // pred_check
      _
    $region79: #{tpu_custom_call.1} parent=1 // pred_check_branch
      %2342 = sbr.rel (0) target = $region81
    $region80: #{tpu_custom_call.1} parent=1 // pred_region
      %s2344 = ssub.s32 64, 64
      %2345 = vsyncadd [#allocation18], %s2344
      %s2346 = sshll.u32 [#allocation17], 4
      %s2347 = int_to_ptr.vmem [resolvable:$true] %s2346
      %2352 = dma.vmem_to_hbm [thread:$0]  %s2347, 64, %s12, [#allocation18], 32, 32, 2
    $region81: #{tpu_custom_call.1} parent=1 // pred_fallthru
      _
    // Predicated region
    $region82: #{tpu_custom_call.1} parent=1 // pred_check
      _
    $region83: #{tpu_custom_call.1} parent=1 // pred_check_branch
      %2354 = sbr.rel (0) target = $region85
    $region84: #{tpu_custom_call.1} parent=1 // pred_region
      %s2356 = ssub.s32 64, 64
      %2357 = vsyncadd [#allocation18], %s2356
      %s2358 = sshll.u32 [#allocation19], 4
      %s2359 = int_to_ptr.vmem [resolvable:$true] %s2358
      %2364 = dma.vmem_to_hbm [thread:$0]  %s2359, 64, %s13, [#allocation18], 32, 32, 2
    $region85: #{tpu_custom_call.1} parent=1 // pred_fallthru
      _
    // Predicated region
    $region86: #{tpu_custom_call.1} parent=1 // pred_check
      _
    $region87: #{tpu_custom_call.1} parent=1 // pred_check_branch
      %2366 = sbr.rel (0) target = $region89
    $region88: #{tpu_custom_call.1} parent=1 // pred_region
      %2367 = dma.done [#allocation6], 256
    $region89: #{tpu_custom_call.1} parent=1 // pred_fallthru
      _
    // Predicated region
    $region90: #{tpu_custom_call.1} parent=1 // pred_check
      _
    $region91: #{tpu_custom_call.1} parent=1 // pred_check_branch
      %2369 = sbr.rel (0) target = $region93
    $region92: #{tpu_custom_call.1} parent=1 // pred_region
      %2370 = dma.done [#allocation18], 64
    $region93: #{tpu_custom_call.1} parent=1 // pred_fallthru
      _
    // Predicated region
    $region94: #{tpu_custom_call.1} parent=1 // pred_check
      _
    $region95: #{tpu_custom_call.1} parent=1 // pred_check_branch
      %2372 = sbr.rel (0) target = $region97
    $region96: #{tpu_custom_call.1} parent=1 // pred_region
      %2373 = dma.done [#allocation18], 64
    $region97: #{tpu_custom_call.1} parent=1 // pred_fallthru
      _
    %2374 = vsyncpa [#allocation5], 1
    %2375 = vsyncpa [#allocation8], 1
    %2376 = vsyncpa [#allocation11], 1
    %2377 = vsyncpa [#allocation14], 1
    %2378 = vsyncpa [#allocation6], 1
    %2379 = vsyncpa [#allocation18], 1

</llo_original>
